<compile_context>
chip_gen: v7x
topology: tpu7x:2x2x1
jax: 0.10.0
libtpu: 0.0.40
codegen_flags: <defaults>
</compile_context>

<pallas_src>
import numpy as np
import jax
import jax.numpy as jnp
from jax.experimental import pallas as pl
from jax.experimental.pallas import tpu as pltpu

# ----------------------------- model config ---------------------------------
Y_IN = 64
Y1, Y2, Y3, Y4 = 16, 12, 8, 4
FEAT_DIM = 3
NUM_NODES = max(8, Y_IN // 8)          # = 8

PAD = 128                              # uniform lane width / slab slot size
N_LAYERS = 13
TILE_B_MAX = 2048                      # rows per grid step (cap)
TILE_B_MIN = 256

# layer slot indices in the fused weight/bias slabs (13 matmuls total)
(L_FT, L_INGCN, L_POOLB1, L_EGCN1, L_POOLB2, L_EGCN2,
 L_LATDU1, L_DG1, L_DU2, L_DG2, L_DF, L_OGCN, L_OPROJ) = range(N_LAYERS)


# ------------------------------ Pallas kernel --------------------------------
def gnn_autoencoder_kernel(x_ref, w_ref, b_ref, out_ref):
    f32 = jnp.float32
    bf16 = jnp.bfloat16

    def relu(v):
        return jnp.maximum(v, 0.0)

    def layer(h, i):
        # one fused dense layer: (TILE_B,128)bf16 @ (128,128)bf16 -> f32 acc
        return jnp.dot(h.astype(bf16), w_ref[i],
                       preferred_element_type=f32) + b_ref[i]

    x = x_ref[...].astype(f32)                         # (TILE_B, Y_IN=64)

    # feature_transform: K = 64, slice the slab slot's K axis (64 is a clean
    # sublane multiple; avoids any host-side 128-lane padding of the input).
    nf = relu(jnp.dot(x.astype(bf16), w_ref[L_FT, :Y_IN, :],
                      preferred_element_type=f32) + b_ref[L_FT])   # width 24
    # input_gcn (width 128) -- also skip1
    x_in = relu(layer(nf, L_INGCN))
    # gPool 1: fused score+broadcast, then gate (sigmoid commutes w/ replication)
    s1 = jax.nn.sigmoid(layer(x_in, L_POOLB1))
    e1 = relu(layer(x_in * s1, L_EGCN1))               # width 96, skip2
    # gPool 2
    s2 = jax.nn.sigmoid(layer(e1, L_POOLB2))
    e2 = relu(layer(e1 * s2, L_EGCN2))                 # width 64, skip3
    # latent_gcn (no activation) pre-folded into decoder_unpool1
    d1u = relu(layer(e2, L_LATDU1))                    # width 64
    d1 = relu(layer(d1u + e2, L_DG1))                  # width 64
    d2u = relu(layer(d1, L_DU2))                       # width 96
    d2 = relu(layer(d2u + e1, L_DG2))                  # width 96
    dfin = relu(layer(d2, L_DF))                       # width 128
    ofe = relu(layer(dfin + x_in, L_OGCN))             # width 128
    # output_projection (real width 64; padded lanes stay exactly zero)
    out_ref[...] = relu(layer(ofe, L_OPROJ))


# ------------------------------ wrapper --------------------------------------
def pick_tile_b(batch, max_tile=TILE_B_MAX, min_tile=TILE_B_MIN):
    """Largest tile (multiple of 256, <= max_tile) that still gives >=2 grid
    steps when the batch allows it (keeps both v7x TCs busy + pipeline overlap)."""
    b_pad = pl.cdiv(batch, min_tile) * min_tile
    tile = min(max_tile, max(min_tile, (b_pad // 2 // min_tile) * min_tile))
    return max(tile, min_tile)


def gnn_autoencoder_forward(x, w_slab, b_slab, tile_b=None):
    squeeze = x.ndim == 1
    if squeeze:
        x = x[None, :]
    B, y_in = x.shape
    if B == 0:
        out = jnp.zeros((0, y_in), jnp.float32)
        return out[0] if squeeze else out

    if tile_b is None:
        tile_b = pick_tile_b(B)
    b_pad = pl.cdiv(B, tile_b) * tile_b

    x_in = x.astype(jnp.float32)
    if b_pad != B:                      # pad only the batch axis (remainder tile)
        x_in = jnp.pad(x_in, ((0, b_pad - B), (0, 0)))

    n_layers = int(w_slab.shape[0])
    flops = 2 * b_pad * PAD * PAD * n_layers
    transcendentals = 2 * b_pad * PAD                      # two sigmoid layers
    bytes_accessed = (int(x_in.size) * 4 + b_pad * PAD * 4
                      + int(w_slab.size) * w_slab.dtype.itemsize
                      + int(b_slab.size) * 4)

    out = pl.pallas_call(
        gnn_autoencoder_kernel,
        out_shape=jax.ShapeDtypeStruct((b_pad, PAD), jnp.float32),
        grid_spec=pltpu.PrefetchScalarGridSpec(
            num_scalar_prefetch=0,
            grid=(b_pad // tile_b,),
            in_specs=[
                pl.BlockSpec((tile_b, y_in), lambda i: (i, 0)),       # x tile
                pl.BlockSpec(w_slab.shape, lambda i: (0, 0, 0)),      # weights
                pl.BlockSpec(b_slab.shape, lambda i: (0, 0, 0)),      # biases
            ],
            out_specs=pl.BlockSpec((tile_b, PAD), lambda i: (i, 0)),
        ),
        compiler_params=pltpu.CompilerParams(
            dimension_semantics=("parallel",),
            vmem_limit_bytes=48 * 1024 * 1024),
        cost_estimate=pl.CostEstimate(
            flops=flops, transcendentals=transcendentals,
            bytes_accessed=bytes_accessed),
    )(x_in, w_slab, b_slab)

    out = out[:B, :y_in]
    return out[0] if squeeze else out


# --------------------------- parameter setup ---------------------------------
def init_linear(key, fan_in, fan_out):
    kw, kb = jax.random.split(key)
    bound = 1.0 / np.sqrt(fan_in)
    w = jax.random.uniform(kw, (fan_in, fan_out), jnp.float32, -bound, bound)
    b = jax.random.uniform(kb, (fan_out,), jnp.float32, -bound, bound)
    return w, b


def make_params(key):
    dims = [
        ("ft", Y_IN, NUM_NODES * FEAT_DIM),
        ("in", FEAT_DIM, Y1),
        ("eg1", Y1, Y2), ("ep1", Y1, 1),
        ("eg2", Y2, Y3), ("ep2", Y2, 1),
        ("lat", Y3, Y4),
        ("du1", Y4, Y3), ("dg1", Y3, Y3),
        ("du2", Y3, Y2), ("dg2", Y2, Y2),
        ("df", Y2, Y1), ("og", Y1, Y1),
        ("op", NUM_NODES * Y1, Y_IN),
    ]
    keys = jax.random.split(key, len(dims))
    P = {}
    for k, (name, fi, fo) in zip(keys, dims):
        w, b = init_linear(k, fi, fo)
        P[name + "_w"], P[name + "_b"] = w, b
    return P


def make_bipartite_adj(num_nodes):
    adj = np.zeros((num_nodes, num_nodes), np.float32)
    c = num_nodes // 2
    for i in range(c):
        for j in range(c, num_nodes):
            adj[i, j] = 1.0
            adj[j, i] = 1.0
    for i in range(num_nodes):
        adj[i, i] = 1.0
    deg = adj.sum(axis=1, keepdims=True)
    deg[deg == 0] = 1.0
    return jnp.asarray(adj / deg)


def build_fused_slabs(P, adj):
    """Fuse adjacency / per-node structure into dense padded weight slabs."""
    adjT = np.asarray(adj, np.float32).T
    eye = np.eye(NUM_NODES, dtype=np.float32)

    def w(n):
        return np.asarray(P[n + "_w"], np.float32)

    def b(n):
        return np.asarray(P[n + "_b"], np.float32)

    def gcn_fuse(n):        # (adj @ h) @ W + b  on node-major flattened rows
        return np.kron(adjT, w(n)), np.tile(b(n), NUM_NODES)

    def node_fuse(n):       # per-node Linear applied to every node
        return np.kron(eye, w(n)), np.tile(b(n), NUM_NODES)

    def pool_fuse(n, width):
        # fused gPool score + broadcast: every lane of a node's width-wide
        # block receives that node's pre-sigmoid score.  Exact because sigmoid
        # commutes with pure replication (score dim must be 1).
        assert w(n).shape[1] == 1
        w_rep = w(n) @ np.ones((1, width), np.float32)
        return np.kron(eye, w_rep), np.full(NUM_NODES * width, float(b(n)[0]),
                                            np.float32)

    layers = [None] * N_LAYERS
    layers[L_FT] = (w("ft"), b("ft"))
    layers[L_INGCN] = gcn_fuse("in")
    layers[L_POOLB1] = pool_fuse("ep1", Y1)
    layers[L_EGCN1] = gcn_fuse("eg1")
    layers[L_POOLB2] = pool_fuse("ep2", Y2)
    layers[L_EGCN2] = gcn_fuse("eg2")
    # latent_gcn has no activation -> fold it into decoder_unpool1 (exact, f32)
    w_lat, b_lat = gcn_fuse("lat")
    w_du1, b_du1 = node_fuse("du1")
    layers[L_LATDU1] = (w_lat @ w_du1, b_lat @ w_du1 + b_du1)
    layers[L_DG1] = gcn_fuse("dg1")
    layers[L_DU2] = node_fuse("du2")
    layers[L_DG2] = gcn_fuse("dg2")
    layers[L_DF] = node_fuse("df")
    layers[L_OGCN] = gcn_fuse("og")
    layers[L_OPROJ] = (w("op"), b("op"))

    w_slab = np.zeros((N_LAYERS, PAD, PAD), np.float32)
    b_slab = np.zeros((N_LAYERS, 1, PAD), np.float32)
    for i, (wi, bi) in enumerate(layers):
        w_slab[i, :wi.shape[0], :wi.shape[1]] = wi
        b_slab[i, 0, :bi.shape[0]] = bi
    # bf16 weights for the MXU (f32 accumulation in-kernel); biases stay f32.
    return jnp.asarray(w_slab, jnp.bfloat16), jnp.asarray(b_slab, jnp.float32)


# --------------------------- pure-JAX references ------------------------------
def reference_forward(x, P, adj):
    """Original-model forward in f32 (validates the host-side fusions)."""
    relu = lambda v: jnp.maximum(v, 0.0)
    B = x.shape[0]
    t = relu(x @ P["ft_w"] + P["ft_b"])
    nf = t.reshape(B, NUM_NODES, FEAT_DIM)

    def gcn(h, w, b):
        return jnp.einsum("nm,bmf->bnf", adj, h) @ w + b

    x_in = relu(gcn(nf, P["in_w"], P["in_b"]))
    skip1 = x_in
    s1 = jax.nn.sigmoid(x_in @ P["ep1_w"] + P["ep1_b"])
    e1 = relu(gcn(x_in * s1, P["eg1_w"], P["eg1_b"]))
    skip2 = e1
    s2 = jax.nn.sigmoid(e1 @ P["ep2_w"] + P["ep2_b"])
    e2 = relu(gcn(e1 * s2, P["eg2_w"], P["eg2_b"]))
    skip3 = e2
    latent = gcn(e2, P["lat_w"], P["lat_b"])
    d1u = relu(latent @ P["du1_w"] + P["du1_b"])
    d1 = relu(gcn(d1u + skip3, P["dg1_w"], P["dg1_b"]))
    d2u = relu(d1 @ P["du2_w"] + P["du2_b"])
    d2 = relu(gcn(d2u + skip2, P["dg2_w"], P["dg2_b"]))
    d_final = relu(d2 @ P["df_w"] + P["df_b"])
    out_feats = relu(gcn(d_final + skip1, P["og_w"], P["og_b"]))
    flat = out_feats.reshape(B, -1)
    return relu(flat @ P["op_w"] + P["op_b"])


def slab_reference_forward(x, w_slab, b_slab):
    """Pure-JAX replay of the exact fused bf16/f32 math the kernel performs."""
    f32, bf16 = jnp.float32, jnp.bfloat16
    relu = lambda v: jnp.maximum(v, 0.0)

    def layer(h, i):
        return jnp.dot(h.astype(bf16), w_slab[i],
                       preferred_element_type=f32) + b_slab[i]

    x = x.astype(f32)
    nf = relu(jnp.dot(x.astype(bf16), w_slab[L_FT, :Y_IN, :],
                      preferred_element_type=f32) + b_slab[L_FT])
    x_in = relu(layer(nf, L_INGCN))
    s1 = jax.nn.sigmoid(layer(x_in, L_POOLB1))
    e1 = relu(layer(x_in * s1, L_EGCN1))
    s2 = jax.nn.sigmoid(layer(e1, L_POOLB2))
    e2 = relu(layer(e1 * s2, L_EGCN2))
    d1u = relu(layer(e2, L_LATDU1))
    d1 = relu(layer(d1u + e2, L_DG1))
    d2u = relu(layer(d1, L_DU2))
    d2 = relu(layer(d2u + e1, L_DG2))
    dfin = relu(layer(d2, L_DF))
    ofe = relu(layer(dfin + x_in, L_OGCN))
    out = relu(layer(ofe, L_OPROJ))
    return out[:, :Y_IN]


# ------------------------------- main -----------------------------------------
if __name__ == "__main__":
    key = jax.random.PRNGKey(0)
    kp, kx = jax.random.split(key)
    P = make_params(kp)
    adj = make_bipartite_adj(NUM_NODES)
    w_slab, b_slab = build_fused_slabs(P, adj)

    # B = 512 -> two 256-row tiles (grid length 2: both v7x TCs get a step).
    B = 512
    x = jax.random.normal(kx, (B, Y_IN), jnp.float32)

    out = jax.block_until_ready(gnn_autoencoder_forward(x, w_slab, b_slab))

    # (a) tight check vs a pure-JAX replay of the same fused bf16 math
    slab_ref = slab_reference_forward(x, w_slab, b_slab)
    err_kernel = float(jnp.max(jnp.abs(out - slab_ref)))
    # (b) loose check vs the original f32 model (validates fusions; residual
    #     difference is only bf16 weight rounding across 13 chained matmuls)
    ref = reference_forward(x, P, adj)
    ok_model = bool(np.allclose(np.asarray(out), np.asarray(ref),
                                rtol=5e-2, atol=5e-2))

    if not np.isfinite(err_kernel) or err_kernel > 1e-3 or not ok_model:
        raise AssertionError(
            f"mismatch: kernel-vs-slab max err {err_kernel}, "
            f"model allclose {ok_model}")
    print("KERNEL_OK")
</pallas_src>

<mosaic_0001>
module attributes {stable_mosaic.version = 11 : i64} {
  func.func @gnn_autoencoder_kernel(%arg0: i32, %arg1: memref<256x64xf32, #tpu.memory_space<vmem>>, %arg2: memref<13x128x128xbf16, #tpu.memory_space<vmem>>, %arg3: memref<13x1x128xf32, #tpu.memory_space<vmem>>, %arg4: memref<256x128xf32, #tpu.memory_space<vmem>>) attributes {dimension_semantics = [#tpu.dimension_semantics<parallel>], iteration_bounds = array<i64: 2>, scalar_prefetch = 0 : i64, scratch_operands = 0 : i64, tpu.core_type = #tpu.core_type<tc>, window_params = [{transform_indices = @transform_0, window_bounds = array<i64: 256, 64>}, {pipeline_mode = #tpu.pipeline_mode<synchronous>, transform_indices = @transform_1, window_bounds = array<i64: 13, 128, 128>}, {pipeline_mode = #tpu.pipeline_mode<synchronous>, transform_indices = @transform_2, window_bounds = array<i64: 13, 1, 128>}, {transform_indices = @transform_3, window_bounds = array<i64: 256, 128>}]} {
    %c0 = arith.constant 0 : index
    %c0_0 = arith.constant 0 : index
    %0 = vector.load %arg1[%c0, %c0_0] : memref<256x64xf32, #tpu.memory_space<vmem>>, vector<256x64xf32>
    %1 = arith.truncf %0 : vector<256x64xf32> to vector<256x64xbf16>
    %c0_1 = arith.constant 0 : index
    %c0_2 = arith.constant 0 : index
    %c0_3 = arith.constant 0 : index
    %2 = vector.load %arg2[%c0_1, %c0_2, %c0_3] : memref<13x128x128xbf16, #tpu.memory_space<vmem>>, vector<1x64x128xbf16>
    %3 = vector.shape_cast %2 : vector<1x64x128xbf16> to vector<64x128xbf16>
    %cst = arith.constant dense<0.000000e+00> : vector<256x128xf32>
    %4 = tpu.matmul %1, %3, %cst {dimension_numbers = #tpu.dot_dimension_numbers<[1], [0], [0], [1], [0, 0, 1, 1], [], []>} : vector<256x64xbf16>, vector<64x128xbf16>, vector<256x128xf32> -> vector<256x128xf32>
    %c0_4 = arith.constant 0 : index
    %c0_5 = arith.constant 0 : index
    %c0_6 = arith.constant 0 : index
    %5 = vector.load %arg3[%c0_4, %c0_5, %c0_6] : memref<13x1x128xf32, #tpu.memory_space<vmem>>, vector<1x1x128xf32>
    %6 = vector.shape_cast %5 : vector<1x1x128xf32> to vector<1x128xf32>
    %7 = vector.broadcast %6 : vector<1x128xf32> to vector<256x128xf32>
    %8 = arith.addf %4, %7 : vector<256x128xf32>
    %cst_7 = arith.constant 0.000000e+00 : f32
    %9 = vector.broadcast %cst_7 : f32 to vector<256x128xf32>
    %10 = arith.maximumf %8, %9 : vector<256x128xf32>
    %11 = arith.truncf %10 : vector<256x128xf32> to vector<256x128xbf16>
    %c1 = arith.constant 1 : index
    %c0_8 = arith.constant 0 : index
    %c0_9 = arith.constant 0 : index
    %12 = vector.load %arg2[%c1, %c0_8, %c0_9] : memref<13x128x128xbf16, #tpu.memory_space<vmem>>, vector<1x128x128xbf16>
    %13 = vector.shape_cast %12 : vector<1x128x128xbf16> to vector<128x128xbf16>
    %cst_10 = arith.constant dense<0.000000e+00> : vector<256x128xf32>
    %14 = tpu.matmul %11, %13, %cst_10 {dimension_numbers = #tpu.dot_dimension_numbers<[1], [0], [0], [1], [0, 0, 1, 1], [], []>} : vector<256x128xbf16>, vector<128x128xbf16>, vector<256x128xf32> -> vector<256x128xf32>
    %c1_11 = arith.constant 1 : index
    %c0_12 = arith.constant 0 : index
    %c0_13 = arith.constant 0 : index
    %15 = vector.load %arg3[%c1_11, %c0_12, %c0_13] : memref<13x1x128xf32, #tpu.memory_space<vmem>>, vector<1x1x128xf32>
    %16 = vector.shape_cast %15 : vector<1x1x128xf32> to vector<1x128xf32>
    %17 = vector.broadcast %16 : vector<1x128xf32> to vector<256x128xf32>
    %18 = arith.addf %14, %17 : vector<256x128xf32>
    %cst_14 = arith.constant 0.000000e+00 : f32
    %19 = vector.broadcast %cst_14 : f32 to vector<256x128xf32>
    %20 = arith.maximumf %18, %19 : vector<256x128xf32>
    %21 = arith.truncf %20 : vector<256x128xf32> to vector<256x128xbf16>
    %c2 = arith.constant 2 : index
    %c0_15 = arith.constant 0 : index
    %c0_16 = arith.constant 0 : index
    %22 = vector.load %arg2[%c2, %c0_15, %c0_16] : memref<13x128x128xbf16, #tpu.memory_space<vmem>>, vector<1x128x128xbf16>
    %23 = vector.shape_cast %22 : vector<1x128x128xbf16> to vector<128x128xbf16>
    %cst_17 = arith.constant dense<0.000000e+00> : vector<256x128xf32>
    %24 = tpu.matmul %21, %23, %cst_17 {dimension_numbers = #tpu.dot_dimension_numbers<[1], [0], [0], [1], [0, 0, 1, 1], [], []>} : vector<256x128xbf16>, vector<128x128xbf16>, vector<256x128xf32> -> vector<256x128xf32>
    %c2_18 = arith.constant 2 : index
    %c0_19 = arith.constant 0 : index
    %c0_20 = arith.constant 0 : index
    %25 = vector.load %arg3[%c2_18, %c0_19, %c0_20] : memref<13x1x128xf32, #tpu.memory_space<vmem>>, vector<1x1x128xf32>
    %26 = vector.shape_cast %25 : vector<1x1x128xf32> to vector<1x128xf32>
    %27 = vector.broadcast %26 : vector<1x128xf32> to vector<256x128xf32>
    %28 = arith.addf %24, %27 : vector<256x128xf32>
    %29 = arith.negf %28 : vector<256x128xf32>
    %30 = math.exp %29 : vector<256x128xf32>
    %cst_21 = arith.constant 1.000000e+00 : f32
    %31 = vector.broadcast %cst_21 : f32 to vector<256x128xf32>
    %32 = arith.addf %31, %30 : vector<256x128xf32>
    %33 = arith.divf %31, %32 : vector<256x128xf32>
    %34 = arith.mulf %20, %33 : vector<256x128xf32>
    %35 = arith.truncf %34 : vector<256x128xf32> to vector<256x128xbf16>
    %c3 = arith.constant 3 : index
    %c0_22 = arith.constant 0 : index
    %c0_23 = arith.constant 0 : index
    %36 = vector.load %arg2[%c3, %c0_22, %c0_23] : memref<13x128x128xbf16, #tpu.memory_space<vmem>>, vector<1x128x128xbf16>
    %37 = vector.shape_cast %36 : vector<1x128x128xbf16> to vector<128x128xbf16>
    %cst_24 = arith.constant dense<0.000000e+00> : vector<256x128xf32>
    %38 = tpu.matmul %35, %37, %cst_24 {dimension_numbers = #tpu.dot_dimension_numbers<[1], [0], [0], [1], [0, 0, 1, 1], [], []>} : vector<256x128xbf16>, vector<128x128xbf16>, vector<256x128xf32> -> vector<256x128xf32>
    %c3_25 = arith.constant 3 : index
    %c0_26 = arith.constant 0 : index
    %c0_27 = arith.constant 0 : index
    %39 = vector.load %arg3[%c3_25, %c0_26, %c0_27] : memref<13x1x128xf32, #tpu.memory_space<vmem>>, vector<1x1x128xf32>
    %40 = vector.shape_cast %39 : vector<1x1x128xf32> to vector<1x128xf32>
    %41 = vector.broadcast %40 : vector<1x128xf32> to vector<256x128xf32>
    %42 = arith.addf %38, %41 : vector<256x128xf32>
    %cst_28 = arith.constant 0.000000e+00 : f32
    %43 = vector.broadcast %cst_28 : f32 to vector<256x128xf32>
    %44 = arith.maximumf %42, %43 : vector<256x128xf32>
    %45 = arith.truncf %44 : vector<256x128xf32> to vector<256x128xbf16>
    %c4 = arith.constant 4 : index
    %c0_29 = arith.constant 0 : index
    %c0_30 = arith.constant 0 : index
    %46 = vector.load %arg2[%c4, %c0_29, %c0_30] : memref<13x128x128xbf16, #tpu.memory_space<vmem>>, vector<1x128x128xbf16>
    %47 = vector.shape_cast %46 : vector<1x128x128xbf16> to vector<128x128xbf16>
    %cst_31 = arith.constant dense<0.000000e+00> : vector<256x128xf32>
    %48 = tpu.matmul %45, %47, %cst_31 {dimension_numbers = #tpu.dot_dimension_numbers<[1], [0], [0], [1], [0, 0, 1, 1], [], []>} : vector<256x128xbf16>, vector<128x128xbf16>, vector<256x128xf32> -> vector<256x128xf32>
    %c4_32 = arith.constant 4 : index
    %c0_33 = arith.constant 0 : index
    %c0_34 = arith.constant 0 : index
    %49 = vector.load %arg3[%c4_32, %c0_33, %c0_34] : memref<13x1x128xf32, #tpu.memory_space<vmem>>, vector<1x1x128xf32>
    %50 = vector.shape_cast %49 : vector<1x1x128xf32> to vector<1x128xf32>
    %51 = vector.broadcast %50 : vector<1x128xf32> to vector<256x128xf32>
    %52 = arith.addf %48, %51 : vector<256x128xf32>
    %53 = arith.negf %52 : vector<256x128xf32>
    %54 = math.exp %53 : vector<256x128xf32>
    %cst_35 = arith.constant 1.000000e+00 : f32
    %55 = vector.broadcast %cst_35 : f32 to vector<256x128xf32>
    %56 = arith.addf %55, %54 : vector<256x128xf32>
    %57 = arith.divf %55, %56 : vector<256x128xf32>
    %58 = arith.mulf %44, %57 : vector<256x128xf32>
    %59 = arith.truncf %58 : vector<256x128xf32> to vector<256x128xbf16>
    %c5 = arith.constant 5 : index
    %c0_36 = arith.constant 0 : index
    %c0_37 = arith.constant 0 : index
    %60 = vector.load %arg2[%c5, %c0_36, %c0_37] : memref<13x128x128xbf16, #tpu.memory_space<vmem>>, vector<1x128x128xbf16>
    %61 = vector.shape_cast %60 : vector<1x128x128xbf16> to vector<128x128xbf16>
    %cst_38 = arith.constant dense<0.000000e+00> : vector<256x128xf32>
    %62 = tpu.matmul %59, %61, %cst_38 {dimension_numbers = #tpu.dot_dimension_numbers<[1], [0], [0], [1], [0, 0, 1, 1], [], []>} : vector<256x128xbf16>, vector<128x128xbf16>, vector<256x128xf32> -> vector<256x128xf32>
    %c5_39 = arith.constant 5 : index
    %c0_40 = arith.constant 0 : index
    %c0_41 = arith.constant 0 : index
    %63 = vector.load %arg3[%c5_39, %c0_40, %c0_41] : memref<13x1x128xf32, #tpu.memory_space<vmem>>, vector<1x1x128xf32>
    %64 = vector.shape_cast %63 : vector<1x1x128xf32> to vector<1x128xf32>
    %65 = vector.broadcast %64 : vector<1x128xf32> to vector<256x128xf32>
    %66 = arith.addf %62, %65 : vector<256x128xf32>
    %cst_42 = arith.constant 0.000000e+00 : f32
    %67 = vector.broadcast %cst_42 : f32 to vector<256x128xf32>
    %68 = arith.maximumf %66, %67 : vector<256x128xf32>
    %69 = arith.truncf %68 : vector<256x128xf32> to vector<256x128xbf16>
    %c6 = arith.constant 6 : index
    %c0_43 = arith.constant 0 : index
    %c0_44 = arith.constant 0 : index
    %70 = vector.load %arg2[%c6, %c0_43, %c0_44] : memref<13x128x128xbf16, #tpu.memory_space<vmem>>, vector<1x128x128xbf16>
    %71 = vector.shape_cast %70 : vector<1x128x128xbf16> to vector<128x128xbf16>
    %cst_45 = arith.constant dense<0.000000e+00> : vector<256x128xf32>
    %72 = tpu.matmul %69, %71, %cst_45 {dimension_numbers = #tpu.dot_dimension_numbers<[1], [0], [0], [1], [0, 0, 1, 1], [], []>} : vector<256x128xbf16>, vector<128x128xbf16>, vector<256x128xf32> -> vector<256x128xf32>
    %c6_46 = arith.constant 6 : index
    %c0_47 = arith.constant 0 : index
    %c0_48 = arith.constant 0 : index
    %73 = vector.load %arg3[%c6_46, %c0_47, %c0_48] : memref<13x1x128xf32, #tpu.memory_space<vmem>>, vector<1x1x128xf32>
    %74 = vector.shape_cast %73 : vector<1x1x128xf32> to vector<1x128xf32>
    %75 = vector.broadcast %74 : vector<1x128xf32> to vector<256x128xf32>
    %76 = arith.addf %72, %75 : vector<256x128xf32>
    %cst_49 = arith.constant 0.000000e+00 : f32
    %77 = vector.broadcast %cst_49 : f32 to vector<256x128xf32>
    %78 = arith.maximumf %76, %77 : vector<256x128xf32>
    %79 = arith.addf %78, %68 : vector<256x128xf32>
    %80 = arith.truncf %79 : vector<256x128xf32> to vector<256x128xbf16>
    %c7 = arith.constant 7 : index
    %c0_50 = arith.constant 0 : index
    %c0_51 = arith.constant 0 : index
    %81 = vector.load %arg2[%c7, %c0_50, %c0_51] : memref<13x128x128xbf16, #tpu.memory_space<vmem>>, vector<1x128x128xbf16>
    %82 = vector.shape_cast %81 : vector<1x128x128xbf16> to vector<128x128xbf16>
    %cst_52 = arith.constant dense<0.000000e+00> : vector<256x128xf32>
    %83 = tpu.matmul %80, %82, %cst_52 {dimension_numbers = #tpu.dot_dimension_numbers<[1], [0], [0], [1], [0, 0, 1, 1], [], []>} : vector<256x128xbf16>, vector<128x128xbf16>, vector<256x128xf32> -> vector<256x128xf32>
    %c7_53 = arith.constant 7 : index
    %c0_54 = arith.constant 0 : index
    %c0_55 = arith.constant 0 : index
    %84 = vector.load %arg3[%c7_53, %c0_54, %c0_55] : memref<13x1x128xf32, #tpu.memory_space<vmem>>, vector<1x1x128xf32>
    %85 = vector.shape_cast %84 : vector<1x1x128xf32> to vector<1x128xf32>
    %86 = vector.broadcast %85 : vector<1x128xf32> to vector<256x128xf32>
    %87 = arith.addf %83, %86 : vector<256x128xf32>
    %cst_56 = arith.constant 0.000000e+00 : f32
    %88 = vector.broadcast %cst_56 : f32 to vector<256x128xf32>
    %89 = arith.maximumf %87, %88 : vector<256x128xf32>
    %90 = arith.truncf %89 : vector<256x128xf32> to vector<256x128xbf16>
    %c8 = arith.constant 8 : index
    %c0_57 = arith.constant 0 : index
    %c0_58 = arith.constant 0 : index
    %91 = vector.load %arg2[%c8, %c0_57, %c0_58] : memref<13x128x128xbf16, #tpu.memory_space<vmem>>, vector<1x128x128xbf16>
    %92 = vector.shape_cast %91 : vector<1x128x128xbf16> to vector<128x128xbf16>
    %cst_59 = arith.constant dense<0.000000e+00> : vector<256x128xf32>
    %93 = tpu.matmul %90, %92, %cst_59 {dimension_numbers = #tpu.dot_dimension_numbers<[1], [0], [0], [1], [0, 0, 1, 1], [], []>} : vector<256x128xbf16>, vector<128x128xbf16>, vector<256x128xf32> -> vector<256x128xf32>
    %c8_60 = arith.constant 8 : index
    %c0_61 = arith.constant 0 : index
    %c0_62 = arith.constant 0 : index
    %94 = vector.load %arg3[%c8_60, %c0_61, %c0_62] : memref<13x1x128xf32, #tpu.memory_space<vmem>>, vector<1x1x128xf32>
    %95 = vector.shape_cast %94 : vector<1x1x128xf32> to vector<1x128xf32>
    %96 = vector.broadcast %95 : vector<1x128xf32> to vector<256x128xf32>
    %97 = arith.addf %93, %96 : vector<256x128xf32>
    %cst_63 = arith.constant 0.000000e+00 : f32
    %98 = vector.broadcast %cst_63 : f32 to vector<256x128xf32>
    %99 = arith.maximumf %97, %98 : vector<256x128xf32>
    %100 = arith.addf %99, %44 : vector<256x128xf32>
    %101 = arith.truncf %100 : vector<256x128xf32> to vector<256x128xbf16>
    %c9 = arith.constant 9 : index
    %c0_64 = arith.constant 0 : index
    %c0_65 = arith.constant 0 : index
    %102 = vector.load %arg2[%c9, %c0_64, %c0_65] : memref<13x128x128xbf16, #tpu.memory_space<vmem>>, vector<1x128x128xbf16>
    %103 = vector.shape_cast %102 : vector<1x128x128xbf16> to vector<128x128xbf16>
    %cst_66 = arith.constant dense<0.000000e+00> : vector<256x128xf32>
    %104 = tpu.matmul %101, %103, %cst_66 {dimension_numbers = #tpu.dot_dimension_numbers<[1], [0], [0], [1], [0, 0, 1, 1], [], []>} : vector<256x128xbf16>, vector<128x128xbf16>, vector<256x128xf32> -> vector<256x128xf32>
    %c9_67 = arith.constant 9 : index
    %c0_68 = arith.constant 0 : index
    %c0_69 = arith.constant 0 : index
    %105 = vector.load %arg3[%c9_67, %c0_68, %c0_69] : memref<13x1x128xf32, #tpu.memory_space<vmem>>, vector<1x1x128xf32>
    %106 = vector.shape_cast %105 : vector<1x1x128xf32> to vector<1x128xf32>
    %107 = vector.broadcast %106 : vector<1x128xf32> to vector<256x128xf32>
    %108 = arith.addf %104, %107 : vector<256x128xf32>
    %cst_70 = arith.constant 0.000000e+00 : f32
    %109 = vector.broadcast %cst_70 : f32 to vector<256x128xf32>
    %110 = arith.maximumf %108, %109 : vector<256x128xf32>
    %111 = arith.truncf %110 : vector<256x128xf32> to vector<256x128xbf16>
    %c10 = arith.constant 10 : index
    %c0_71 = arith.constant 0 : index
    %c0_72 = arith.constant 0 : index
    %112 = vector.load %arg2[%c10, %c0_71, %c0_72] : memref<13x128x128xbf16, #tpu.memory_space<vmem>>, vector<1x128x128xbf16>
    %113 = vector.shape_cast %112 : vector<1x128x128xbf16> to vector<128x128xbf16>
    %cst_73 = arith.constant dense<0.000000e+00> : vector<256x128xf32>
    %114 = tpu.matmul %111, %113, %cst_73 {dimension_numbers = #tpu.dot_dimension_numbers<[1], [0], [0], [1], [0, 0, 1, 1], [], []>} : vector<256x128xbf16>, vector<128x128xbf16>, vector<256x128xf32> -> vector<256x128xf32>
    %c10_74 = arith.constant 10 : index
    %c0_75 = arith.constant 0 : index
    %c0_76 = arith.constant 0 : index
    %115 = vector.load %arg3[%c10_74, %c0_75, %c0_76] : memref<13x1x128xf32, #tpu.memory_space<vmem>>, vector<1x1x128xf32>
    %116 = vector.shape_cast %115 : vector<1x1x128xf32> to vector<1x128xf32>
    %117 = vector.broadcast %116 : vector<1x128xf32> to vector<256x128xf32>
    %118 = arith.addf %114, %117 : vector<256x128xf32>
    %cst_77 = arith.constant 0.000000e+00 : f32
    %119 = vector.broadcast %cst_77 : f32 to vector<256x128xf32>
    %120 = arith.maximumf %118, %119 : vector<256x128xf32>
    %121 = arith.addf %120, %20 : vector<256x128xf32>
    %122 = arith.truncf %121 : vector<256x128xf32> to vector<256x128xbf16>
    %c11 = arith.constant 11 : index
    %c0_78 = arith.constant 0 : index
    %c0_79 = arith.constant 0 : index
    %123 = vector.load %arg2[%c11, %c0_78, %c0_79] : memref<13x128x128xbf16, #tpu.memory_space<vmem>>, vector<1x128x128xbf16>
    %124 = vector.shape_cast %123 : vector<1x128x128xbf16> to vector<128x128xbf16>
    %cst_80 = arith.constant dense<0.000000e+00> : vector<256x128xf32>
    %125 = tpu.matmul %122, %124, %cst_80 {dimension_numbers = #tpu.dot_dimension_numbers<[1], [0], [0], [1], [0, 0, 1, 1], [], []>} : vector<256x128xbf16>, vector<128x128xbf16>, vector<256x128xf32> -> vector<256x128xf32>
    %c11_81 = arith.constant 11 : index
    %c0_82 = arith.constant 0 : index
    %c0_83 = arith.constant 0 : index
    %126 = vector.load %arg3[%c11_81, %c0_82, %c0_83] : memref<13x1x128xf32, #tpu.memory_space<vmem>>, vector<1x1x128xf32>
    %127 = vector.shape_cast %126 : vector<1x1x128xf32> to vector<1x128xf32>
    %128 = vector.broadcast %127 : vector<1x128xf32> to vector<256x128xf32>
    %129 = arith.addf %125, %128 : vector<256x128xf32>
    %cst_84 = arith.constant 0.000000e+00 : f32
    %130 = vector.broadcast %cst_84 : f32 to vector<256x128xf32>
    %131 = arith.maximumf %129, %130 : vector<256x128xf32>
    %132 = arith.truncf %131 : vector<256x128xf32> to vector<256x128xbf16>
    %c12 = arith.constant 12 : index
    %c0_85 = arith.constant 0 : index
    %c0_86 = arith.constant 0 : index
    %133 = vector.load %arg2[%c12, %c0_85, %c0_86] : memref<13x128x128xbf16, #tpu.memory_space<vmem>>, vector<1x128x128xbf16>
    %134 = vector.shape_cast %133 : vector<1x128x128xbf16> to vector<128x128xbf16>
    %cst_87 = arith.constant dense<0.000000e+00> : vector<256x128xf32>
    %135 = tpu.matmul %132, %134, %cst_87 {dimension_numbers = #tpu.dot_dimension_numbers<[1], [0], [0], [1], [0, 0, 1, 1], [], []>} : vector<256x128xbf16>, vector<128x128xbf16>, vector<256x128xf32> -> vector<256x128xf32>
    %c12_88 = arith.constant 12 : index
    %c0_89 = arith.constant 0 : index
    %c0_90 = arith.constant 0 : index
    %136 = vector.load %arg3[%c12_88, %c0_89, %c0_90] : memref<13x1x128xf32, #tpu.memory_space<vmem>>, vector<1x1x128xf32>
    %137 = vector.shape_cast %136 : vector<1x1x128xf32> to vector<1x128xf32>
    %138 = vector.broadcast %137 : vector<1x128xf32> to vector<256x128xf32>
    %139 = arith.addf %135, %138 : vector<256x128xf32>
    %cst_91 = arith.constant 0.000000e+00 : f32
    %140 = vector.broadcast %cst_91 : f32 to vector<256x128xf32>
    %141 = arith.maximumf %139, %140 : vector<256x128xf32>
    %c0_92 = arith.constant 0 : index
    %c0_93 = arith.constant 0 : index
    %142 = vector.load %arg4[%c0_92, %c0_93] : memref<256x128xf32, #tpu.memory_space<vmem>>, vector<256x128xf32>
    tpu.vector_store %arg4[%c0_92, %c0_93], %141 {strides = array<i32>} : memref<256x128xf32, #tpu.memory_space<vmem>>, vector<256x128xf32>,
    return
  }
  func.func @transform_0(%arg0: i32) -> (i32, i32) {
    %c0_i32 = arith.constant 0 : i32
    %c0_i32_0 = arith.constant 0 : i32
    return %arg0, %c0_i32 : i32, i32
  }
  func.func @transform_1(%arg0: i32) -> (i32, i32, i32) {
    %c0_i32 = arith.constant 0 : i32
    %c0_i32_0 = arith.constant 0 : i32
    %c0_i32_1 = arith.constant 0 : i32
    %c0_i32_2 = arith.constant 0 : i32
    return %c0_i32, %c0_i32_0, %c0_i32_1 : i32, i32, i32
  }
  func.func @transform_2(%arg0: i32) -> (i32, i32, i32) {
    %c0_i32 = arith.constant 0 : i32
    %c0_i32_0 = arith.constant 0 : i32
    %c0_i32_1 = arith.constant 0 : i32
    %c0_i32_2 = arith.constant 0 : i32
    return %c0_i32, %c0_i32_0, %c0_i32_1 : i32, i32, i32
  }
  func.func @transform_3(%arg0: i32) -> (i32, i32) {
    %c0_i32 = arith.constant 0 : i32
    %c0_i32_0 = arith.constant 0 : i32
    return %arg0, %c0_i32 : i32, i32
  }
}

</mosaic_0001>

<llo_original>
// kernel: tpu_custom_call.1
$region0: #{tpu_custom_call.1}
  #allocation0 [shape = 'u32[]', space=smem, size = 0x4, offset = 0x4, fixed_abs, tag = 'smem constant byte address 0x4 - core index']
  #allocation1 [shape = 'u32[144,128]{1,0:T(1,128)}', space=vmem, size = 0x12000, scoped, tag = 'internal scratch']
  %s0 = inlined_call_operand.vmem [shape: f32[512,64], index: 0, kind: input, shape index: {}]
  %s1 = inlined_call_operand.hbm [shape: bf16[13,128,128], index: 1, kind: input, shape index: {}]
  %s2 = inlined_call_operand.vmem [shape: f32[13,1,128], index: 2, kind: input, shape index: {}]
  %s3 = inlined_call_operand.hbm [shape: f32[512,128], index: 3, kind: output, shape index: {}]
  %s4 = sld [smem:[#allocation0]]
  $region49: #{tpu_custom_call.1} parent=0
    _
  %s6 = ssub.s32 1, %s4
  %s7 = scalar_select 0, %s6, %s4
  $region1: #{tpu_custom_call.1} parent=0
    #allocation2 [shape = 'u8[425984]{0}', space=vmem, size = 0x68000, scoped, tag = 'input window, operand 1, single buffered']
    #allocation3 [shape = 's32[2]{0}', space=sflag, size = 0x8, scoped, tag = 'scoped memory for tpu_custom_call.1']
    #allocation4 [shape = 's32[2]{0}', space=sflag, size = 0x8, scoped, tag = 'scoped memory for tpu_custom_call.1']
    #allocation5 [shape = 'u8[262144]{0}', space=vmem, size = 0x40000, scoped, tag = 'output window, operand 0']
    %8 = vsyncpa [#allocation3], 0
    %9 = vsyncpa [#allocation4], 0
    %s10 = scalar_lea.sflag [#allocation4], 1
    %11 = vsyncpa %s10, 0
    loop: start=0, step=1, limit=4
    $region2: #{tpu_custom_call.1} parent=1 // loop_pre_header
      _
    $region3: #{tpu_custom_call.1} parent=1 // loop_header
      %s13 = sphi 0, %s17
      %p14 = scmp.ge.s32.totalorder %s13, 4
      %s23 = sphi 0, %s25
      %s26 = sphi 0, %s23
      %s27 = sphi 0, %s26
      %s43 = sphi 0, %s27
      %s47 = sphi 0, %s47
      %s49 = sphi 0, %s47
      %s50 = sphi 0, %s49
      %s64 = sphi 0, %s50
      %s68 = sphi 0, %s68
      %s70 = sphi 0, %s68
      %s71 = sphi 0, %s70
      %s85 = sphi 0, %s71
      %s91 = sphi 0, %s93
      %s94 = sphi 0, %s91
      %s95 = sphi 0, %s94
      %s111 = sphi 0, %s95
    $region4: #{tpu_custom_call.1} parent=1 // loop_header_branch
      %16 = sbr.rel (%p14) target = $region8
    $region5: #{tpu_custom_call.1} parent=1 // loop_body
      %s18 = ssub.s32 %s13, 1
      %s19 = ssub.s32 %s13, 2
      %s20 = sadd.s32 %s13, 1
      %s21 = ssub.s32 %s13, %s20
      %p22 = scmp.eq.s32.totalorder %s21, 0
      %s24 = sadd.s32 %s23, 1
      %s25 = scalar_select %p22, %s23, %s24
      %p28 = pneg %p22
      %p29 = scmp.eq.s32.totalorder %s13, 1
      %p30 = por %p28, %p29
      %p31 = scmp.ne.s32.totalorder %s23, %s26
      %p32 = scmp.eq.s32.totalorder %s13, 0
      %p33 = por %p31, %p32
      %p34 = scmp.ne.s32.totalorder %s23, %s26
      %p35 = scmp.eq.s32.totalorder %s18, 1
      %p36 = por %p34, %p35
      %p37 = scmp.ne.s32.totalorder %s26, %s27
      %p38 = scmp.eq.s32.totalorder %s18, 0
      %p39 = por %p37, %p38
      %p40 = scmp.ne.s32.totalorder %s26, %s27
      %p41 = scmp.eq.s32.totalorder %s19, 1
      %p42 = por %p40, %p41
      %p44 = scmp.ne.s32.totalorder %s27, %s43
      %p45 = scmp.eq.s32.totalorder %s19, 0
      %p46 = por %p44, %p45
      %s48 = sadd.s32 %s47, 1
      %p51 = scmp.eq.s32.totalorder %s13, 1
      %p52 = scmp.ne.s32.totalorder %s47, %s49
      %p53 = scmp.eq.s32.totalorder %s13, 0
      %p54 = por %p52, %p53
      %p55 = scmp.ne.s32.totalorder %s47, %s49
      %p56 = scmp.eq.s32.totalorder %s18, 1
      %p57 = por %p55, %p56
      %p58 = scmp.ne.s32.totalorder %s49, %s50
      %p59 = scmp.eq.s32.totalorder %s18, 0
      %p60 = por %p58, %p59
      %p61 = scmp.ne.s32.totalorder %s49, %s50
      %p62 = scmp.eq.s32.totalorder %s19, 1
      %p63 = por %p61, %p62
      %p65 = scmp.ne.s32.totalorder %s50, %s64
      %p66 = scmp.eq.s32.totalorder %s19, 0
      %p67 = por %p65, %p66
      %s69 = sadd.s32 %s68, 1
      %p72 = scmp.eq.s32.totalorder %s13, 1
      %p73 = scmp.ne.s32.totalorder %s68, %s70
      %p74 = scmp.eq.s32.totalorder %s13, 0
      %p75 = por %p73, %p74
      %p76 = scmp.ne.s32.totalorder %s68, %s70
      %p77 = scmp.eq.s32.totalorder %s18, 1
      %p78 = por %p76, %p77
      %p79 = scmp.ne.s32.totalorder %s70, %s71
      %p80 = scmp.eq.s32.totalorder %s18, 0
      %p81 = por %p79, %p80
      %p82 = scmp.ne.s32.totalorder %s70, %s71
      %p83 = scmp.eq.s32.totalorder %s19, 1
      %p84 = por %p82, %p83
      %p86 = scmp.ne.s32.totalorder %s71, %s85
      %p87 = scmp.eq.s32.totalorder %s19, 0
      %p88 = por %p86, %p87
      %s89 = ssub.s32 %s13, %s20
      %p90 = scmp.eq.s32.totalorder %s89, 0
      %s92 = sadd.s32 %s91, 1
      %s93 = scalar_select %p90, %s91, %s92
      %p96 = pneg %p90
      %p97 = scmp.eq.s32.totalorder %s13, 1
      %p98 = por %p96, %p97
      %p99 = scmp.ne.s32.totalorder %s91, %s94
      %p100 = scmp.eq.s32.totalorder %s13, 0
      %p101 = por %p99, %p100
      %p102 = scmp.ne.s32.totalorder %s91, %s94
      %p103 = scmp.eq.s32.totalorder %s18, 1
      %p104 = por %p102, %p103
      %p105 = scmp.ne.s32.totalorder %s94, %s95
      %p106 = scmp.eq.s32.totalorder %s18, 0
      %p107 = por %p105, %p106
      %p108 = scmp.ne.s32.totalorder %s94, %s95
      %p109 = scmp.eq.s32.totalorder %s19, 1
      %p110 = por %p108, %p109
      %p112 = scmp.ne.s32.totalorder %s95, %s111
      %p113 = scmp.eq.s32.totalorder %s19, 0
      %p114 = por %p112, %p113
      %p115 = scmp.le.s32.totalorder 1, %s13
      %p116 = scmp.lt.s32.totalorder %s13, 3
      %p117 = pnand %p115, %p116
      %p118 = pneg %p117
      // Predicated region
      $region9: #{tpu_custom_call.1} parent=5 // pred_check
        _
      $region10: #{tpu_custom_call.1} parent=5 // pred_check_branch
        %120 = sbr.rel (%p117) target = $region12
      $region11: #{tpu_custom_call.1} parent=5 // pred_region
        %s121 = ssub.s32 %s13, 1
        // Predicated region
        $region13: #{tpu_custom_call.1} parent=11 // pred_check
          %p122 = pneg %p60
        $region14: #{tpu_custom_call.1} parent=11 // pred_check_branch
          %124 = sbr.rel (%p122) target = $region16
        $region15: #{tpu_custom_call.1} parent=11 // pred_region
          %s126 = ssub.s32 13312, 13312
          %127 = vsyncadd [#allocation3], %s126
          %s128 = sshll.u32 [#allocation2], 4
          %s129 = int_to_ptr.vmem [resolvable:$true] %s128
          %134 = dma.hbm_to_vmem [thread:$0]  %s1, 13312, %s129, [#allocation3], 64, 64, 4
        $region16: #{tpu_custom_call.1} parent=11 // pred_fallthru
          _
        // Predicated region
        $region17: #{tpu_custom_call.1} parent=11 // pred_check
          %p135 = pneg %p81
        $region18: #{tpu_custom_call.1} parent=11 // pred_check_branch
          %137 = sbr.rel (%p135) target = $region20
        $region19: #{tpu_custom_call.1} parent=11 // pred_region
          _
        $region20: #{tpu_custom_call.1} parent=11 // pred_fallthru
          _
      $region12: #{tpu_custom_call.1} parent=5 // pred_fallthru
        _
      %p138 = scmp.lt.s32.totalorder %s13, 2
      // Predicated region
      $region21: #{tpu_custom_call.1} parent=5 // pred_check
        %p139 = pneg %p138
      $region22: #{tpu_custom_call.1} parent=5 // pred_check_branch
        %141 = sbr.rel (%p139) target = $region24
      $region23: #{tpu_custom_call.1} parent=5 // pred_region
        // Predicated region
        $region25: #{tpu_custom_call.1} parent=23 // pred_check
          %p142 = pneg %p33
        $region26: #{tpu_custom_call.1} parent=23 // pred_check_branch
          %144 = sbr.rel (%p142) target = $region28
        $region27: #{tpu_custom_call.1} parent=23 // pred_region
          %s145 = smul.u32 32, %s13
          %p146 = scmp.lt.s32.totalorder %s145, 63
          %s147 = scalar_select %p146, %s145, 63
          %s148 = smul.addr %s147, 8
          %s149 = scalar_lea.vmem %s0, %s148
          %s150 = smul.u32 32, %s13
        $region28: #{tpu_custom_call.1} parent=23 // pred_fallthru
          _
      $region24: #{tpu_custom_call.1} parent=5 // pred_fallthru
        _
      %p151 = scmp.le.s32.totalorder 1, %s13
      %p152 = scmp.lt.s32.totalorder %s13, 3
      %p153 = pnand %p151, %p152
      %p154 = pneg %p153
      // Predicated region
      $region29: #{tpu_custom_call.1} parent=5 // pred_check
        _
      $region30: #{tpu_custom_call.1} parent=5 // pred_check_branch
        %156 = sbr.rel (%p153) target = $region32
      $region31: #{tpu_custom_call.1} parent=5 // pred_region
        %s157 = ssub.s32 %s13, 1
        // Predicated region
        $region33: #{tpu_custom_call.1} parent=31 // pred_check
          %p158 = pneg %p60
        $region34: #{tpu_custom_call.1} parent=31 // pred_check_branch
          %160 = sbr.rel (%p158) target = $region36
        $region35: #{tpu_custom_call.1} parent=31 // pred_region
          %161 = dma.done [#allocation3], 13312
        $region36: #{tpu_custom_call.1} parent=31 // pred_fallthru
          _
        %s162 = smul.u32 32, %s18
        %p163 = scmp.lt.s32.totalorder %s162, 63
        %s164 = scalar_select %p163, %s162, 63
        %s165 = smul.addr %s164, 8
        %s166 = scalar_lea.vmem %s0, %s165
        %p167 = pneg %p39
        %p168 = pneg %p36
        %p169 = pneg %p60
        %p170 = pneg %p57
        %p171 = pneg %p81
        %p172 = pneg %p78
        %p173 = pneg %p107
        %p174 = pneg %p104
        %s175 = sand.u32 %s94, 1
        %s176 = scalar_lea.sflag [#allocation4], %s175
        %s177 = sand.u32 %s94, 1
        %s178 = smul.addr %s177, 256
        %s179 = scalar_lea.vmem [#allocation5], %s178
        %s180 = smul.u32 32, %s18
        %p181 = scmp.lt.s32.totalorder %s180, 63
        %s182 = scalar_select %p181, %s180, 63
        %s183 = smul.addr %s182, 8
        %s184 = scalar_lea.vmem %s0, %s183
        %s185 = smul.u32 32, %s18
        %s186 = smul.u32 32, %s18
        %v188 = vld [vmem:[%s184] sm:$0xff]
        %v189 = vld [vmem:[%s184 + $0x8] sm:$0xff]
        %v190 = vld [vmem:[%s184 + $0x10] sm:$0xff]
        %v191 = vld [vmem:[%s184 + $0x18] sm:$0xff]
        %v192 = vld [vmem:[%s184 + $0x20] sm:$0xff]
        %v193 = vld [vmem:[%s184 + $0x28] sm:$0xff]
        %v194 = vld [vmem:[%s184 + $0x30] sm:$0xff]
        %v195 = vld [vmem:[%s184 + $0x38] sm:$0xff]
        %v196 = vld [vmem:[%s184 + $0x40] sm:$0xff]
        %v197 = vld [vmem:[%s184 + $0x48] sm:$0xff]
        %v198 = vld [vmem:[%s184 + $0x50] sm:$0xff]
        %v199 = vld [vmem:[%s184 + $0x58] sm:$0xff]
        %v200 = vld [vmem:[%s184 + $0x60] sm:$0xff]
        %v201 = vld [vmem:[%s184 + $0x68] sm:$0xff]
        %v202 = vld [vmem:[%s184 + $0x70] sm:$0xff]
        %v203 = vld [vmem:[%s184 + $0x78] sm:$0xff]
        %v204 = vld [vmem:[%s184 + $0x80] sm:$0xff]
        %v205 = vld [vmem:[%s184 + $0x88] sm:$0xff]
        %v206 = vld [vmem:[%s184 + $0x90] sm:$0xff]
        %v207 = vld [vmem:[%s184 + $0x98] sm:$0xff]
        %v208 = vld [vmem:[%s184 + $0xa0] sm:$0xff]
        %v209 = vld [vmem:[%s184 + $0xa8] sm:$0xff]
        %v210 = vld [vmem:[%s184 + $0xb0] sm:$0xff]
        %v211 = vld [vmem:[%s184 + $0xb8] sm:$0xff]
        %v212 = vld [vmem:[%s184 + $0xc0] sm:$0xff]
        %v213 = vld [vmem:[%s184 + $0xc8] sm:$0xff]
        %v214 = vld [vmem:[%s184 + $0xd0] sm:$0xff]
        %v215 = vld [vmem:[%s184 + $0xd8] sm:$0xff]
        %v216 = vld [vmem:[%s184 + $0xe0] sm:$0xff]
        %v217 = vld [vmem:[%s184 + $0xe8] sm:$0xff]
        %v218 = vld [vmem:[%s184 + $0xf0] sm:$0xff]
        %v219 = vld [vmem:[%s184 + $0xf8] sm:$0xff]
        %v220 = vpack.c.bf16 %v189, %v188
        %v221 = vpack.c.bf16 %v191, %v190
        %v222 = vpack.c.bf16 %v193, %v192
        %v223 = vpack.c.bf16 %v195, %v194
        %v224 = vpack.c.bf16 %v197, %v196
        %v225 = vpack.c.bf16 %v199, %v198
        %v226 = vpack.c.bf16 %v201, %v200
        %v227 = vpack.c.bf16 %v203, %v202
        %v228 = vpack.c.bf16 %v205, %v204
        %v229 = vpack.c.bf16 %v207, %v206
        %v230 = vpack.c.bf16 %v209, %v208
        %v231 = vpack.c.bf16 %v211, %v210
        %v232 = vpack.c.bf16 %v213, %v212
        %v233 = vpack.c.bf16 %v215, %v214
        %v234 = vpack.c.bf16 %v217, %v216
        %v235 = vpack.c.bf16 %v219, %v218
        %v236 = vld [vmem:[#allocation2] sm:$0xf]
        %v237 = vld [vmem:[#allocation2 + $0x4] sm:$0xf]
        %v238 = vld [vmem:[#allocation2 + $0x8] sm:$0xf]
        %v239 = vld [vmem:[#allocation2 + $0xc] sm:$0xf]
        %v240 = vld [vmem:[#allocation2 + $0x10] sm:$0xf]
        %v241 = vld [vmem:[#allocation2 + $0x14] sm:$0xf]
        %v242 = vld [vmem:[#allocation2 + $0x18] sm:$0xf]
        %v243 = vld [vmem:[#allocation2 + $0x1c] sm:$0xf]
        %v244 = vld [vmem:[%s2] sm:$0x1]
        %v246 = vlaneseq
        %v247 = vshrl.u32 %v246, 7
        %v248 = vsub.s32 0, %v247
        %v249 = vrot.slane %v244, %v248
        %v259 = vunpack.c.l.b16 %v236
        %v260 = vunpack.c.l.b16 %v237
        %v261 = vunpack.c.l.b16 %v238
        %v262 = vunpack.c.l.b16 %v239
        %v263 = vunpack.c.l.b16 %v240
        %v264 = vunpack.c.l.b16 %v241
        %v265 = vunpack.c.l.b16 %v242
        %v266 = vunpack.c.l.b16 %v243
        %v267 = vpack.c.b16 %v260, %v259
        %v268 = vpack.c.b16 %v262, %v261
        %v269 = vpack.c.b16 %v264, %v263
        %v270 = vpack.c.b16 %v266, %v265
        %vm275 = vcmask 523264
        %v277 = vsel %vm275, %v220, 0
        %v280 = vsel %vm275, %v221, 0
        %v283 = vsel %vm275, %v222, 0
        %v286 = vsel %vm275, %v223, 0
        %v289 = vsel %vm275, %v224, 0
        %v292 = vsel %vm275, %v225, 0
        %v295 = vsel %vm275, %v226, 0
        %v298 = vsel %vm275, %v227, 0
        %v301 = vsel %vm275, %v228, 0
        %v304 = vsel %vm275, %v229, 0
        %v307 = vsel %vm275, %v230, 0
        %v310 = vsel %vm275, %v231, 0
        %v313 = vsel %vm275, %v232, 0
        %v316 = vsel %vm275, %v233, 0
        %v319 = vsel %vm275, %v234, 0
        %v322 = vsel %vm275, %v235, 0
        %324 = vmatprep.subr.bf16.mxu0 0
        %325 = vmatpush1.bf16.msra.mxu0 %v267
        %326 = vmatprep.subr.bf16.mxu0 0
        %327 = vmatpush1.bf16.msra.mxu0 %v268
        %328 = vmatprep.subr.bf16.mxu0 0
        %329 = vmatpush1.bf16.msra.mxu0 %v269
        %330 = vmatprep.subr.bf16.mxu0 0
        %331 = vmatpush1.bf16.msra.mxu0 %v270
        %332 = vmatprep.subr.bf16.mxu0 0
        %333 = vmatpush1.bf16.msra.mxu0 0
        %334 = vmatprep.subr.bf16.mxu0 0
        %335 = vmatpush1.bf16.msra.mxu0 0
        %336 = vmatprep.subr.bf16.mxu0 0
        %337 = vmatpush1.bf16.msra.mxu0 0
        %338 = vmatprep.subr.bf16.mxu0 0
        %339 = vmatpush1.bf16.msra.mxu0 0
        %340 = vmatprep.subr.bf16.mxu0 0
        %341 = vmatpush1.bf16.msra.mxu0 0
        %342 = vmatprep.subr.bf16.mxu0 0
        %343 = vmatpush1.bf16.msra.mxu0 0
        %344 = vmatprep.subr.bf16.mxu0 0
        %345 = vmatpush1.bf16.msra.mxu0 0
        %346 = vmatprep.subr.bf16.mxu0 0
        %347 = vmatpush1.bf16.msra.mxu0 0
        %348 = vmatprep.subr.bf16.mxu0 0
        %349 = vmatpush1.bf16.msra.mxu0 0
        %350 = vmatprep.subr.bf16.mxu0 0
        %351 = vmatpush1.bf16.msra.mxu0 0
        %352 = vmatprep.subr.bf16.mxu0 0
        %353 = vmatpush1.bf16.msra.mxu0 0
        %354 = vmatprep.subr.bf16.mxu0 0
        %355 = vmatpush1.bf16.msra.mxu0 0
        %356 = vmatprep.mubr.bf16.mxu0 0
        %357 = vmatmul.mubr.bf16.gmra.mrb[0].mxu0 %v277
        %v358 = vpop.f32.mrb[0].mxu0
        %v359 = vadd.f32 %v249, %v358
        %v360 = vpop.f32.mrb[0].mxu0
        %v361 = vpop.f32.mrb[0].mxu0
        %v362 = vadd.f32 %v249, %v361
        %v363 = vpop.f32.mrb[0].mxu0
        %364 = vmatprep.mubr.bf16.mxu0 0
        %365 = vmatmul.mubr.bf16.gmra.mrb[0].mxu0 %v280
        %v366 = vpop.f32.mrb[0].mxu0
        %v367 = vadd.f32 %v249, %v366
        %v368 = vpop.f32.mrb[0].mxu0
        %v369 = vpop.f32.mrb[0].mxu0
        %v370 = vadd.f32 %v249, %v369
        %v371 = vpop.f32.mrb[0].mxu0
        %372 = vmatprep.mubr.bf16.mxu0 0
        %373 = vmatmul.mubr.bf16.gmra.mrb[0].mxu0 %v283
        %v374 = vpop.f32.mrb[0].mxu0
        %v375 = vadd.f32 %v249, %v374
        %v376 = vpop.f32.mrb[0].mxu0
        %v377 = vpop.f32.mrb[0].mxu0
        %v378 = vadd.f32 %v249, %v377
        %v379 = vpop.f32.mrb[0].mxu0
        %380 = vmatprep.mubr.bf16.mxu0 0
        %381 = vmatmul.mubr.bf16.gmra.mrb[0].mxu0 %v286
        %v382 = vpop.f32.mrb[0].mxu0
        %v383 = vadd.f32 %v249, %v382
        %v384 = vpop.f32.mrb[0].mxu0
        %v385 = vpop.f32.mrb[0].mxu0
        %v386 = vadd.f32 %v249, %v385
        %v387 = vpop.f32.mrb[0].mxu0
        %388 = vmatprep.mubr.bf16.mxu0 0
        %389 = vmatmul.mubr.bf16.gmra.mrb[0].mxu0 %v289
        %v390 = vpop.f32.mrb[0].mxu0
        %v391 = vadd.f32 %v249, %v390
        %v392 = vpop.f32.mrb[0].mxu0
        %v393 = vpop.f32.mrb[0].mxu0
        %v394 = vadd.f32 %v249, %v393
        %v395 = vpop.f32.mrb[0].mxu0
        %396 = vmatprep.mubr.bf16.mxu0 0
        %397 = vmatmul.mubr.bf16.gmra.mrb[0].mxu0 %v292
        %v398 = vpop.f32.mrb[0].mxu0
        %v399 = vadd.f32 %v249, %v398
        %v400 = vpop.f32.mrb[0].mxu0
        %v401 = vpop.f32.mrb[0].mxu0
        %v402 = vadd.f32 %v249, %v401
        %v403 = vpop.f32.mrb[0].mxu0
        %404 = vmatprep.mubr.bf16.mxu0 0
        %405 = vmatmul.mubr.bf16.gmra.mrb[0].mxu0 %v295
        %v406 = vpop.f32.mrb[0].mxu0
        %v407 = vadd.f32 %v249, %v406
        %v408 = vpop.f32.mrb[0].mxu0
        %v409 = vpop.f32.mrb[0].mxu0
        %v410 = vadd.f32 %v249, %v409
        %v411 = vpop.f32.mrb[0].mxu0
        %412 = vmatprep.mubr.bf16.mxu0 0
        %413 = vmatmul.mubr.bf16.gmra.mrb[0].mxu0 %v298
        %v414 = vpop.f32.mrb[0].mxu0
        %v415 = vadd.f32 %v249, %v414
        %v416 = vpop.f32.mrb[0].mxu0
        %v417 = vpop.f32.mrb[0].mxu0
        %v418 = vadd.f32 %v249, %v417
        %v419 = vpop.f32.mrb[0].mxu0
        %420 = vmatprep.mubr.bf16.mxu0 0
        %421 = vmatmul.mubr.bf16.gmra.mrb[0].mxu0 %v301
        %v422 = vpop.f32.mrb[0].mxu0
        %v423 = vadd.f32 %v249, %v422
        %v424 = vpop.f32.mrb[0].mxu0
        %v425 = vpop.f32.mrb[0].mxu0
        %v426 = vadd.f32 %v249, %v425
        %v427 = vpop.f32.mrb[0].mxu0
        %428 = vmatprep.mubr.bf16.mxu0 0
        %429 = vmatmul.mubr.bf16.gmra.mrb[0].mxu0 %v304
        %v430 = vpop.f32.mrb[0].mxu0
        %v431 = vadd.f32 %v249, %v430
        %v432 = vpop.f32.mrb[0].mxu0
        %v433 = vpop.f32.mrb[0].mxu0
        %v434 = vadd.f32 %v249, %v433
        %v435 = vpop.f32.mrb[0].mxu0
        %436 = vmatprep.mubr.bf16.mxu0 0
        %437 = vmatmul.mubr.bf16.gmra.mrb[0].mxu0 %v307
        %v438 = vpop.f32.mrb[0].mxu0
        %v439 = vadd.f32 %v249, %v438
        %v440 = vpop.f32.mrb[0].mxu0
        %v441 = vpop.f32.mrb[0].mxu0
        %v442 = vadd.f32 %v249, %v441
        %v443 = vpop.f32.mrb[0].mxu0
        %444 = vmatprep.mubr.bf16.mxu0 0
        %445 = vmatmul.mubr.bf16.gmra.mrb[0].mxu0 %v310
        %v446 = vpop.f32.mrb[0].mxu0
        %v447 = vadd.f32 %v249, %v446
        %v448 = vpop.f32.mrb[0].mxu0
        %v449 = vpop.f32.mrb[0].mxu0
        %v450 = vadd.f32 %v249, %v449
        %v451 = vpop.f32.mrb[0].mxu0
        %452 = vmatprep.mubr.bf16.mxu0 0
        %453 = vmatmul.mubr.bf16.gmra.mrb[0].mxu0 %v313
        %v454 = vpop.f32.mrb[0].mxu0
        %v455 = vadd.f32 %v249, %v454
        %v456 = vpop.f32.mrb[0].mxu0
        %v457 = vpop.f32.mrb[0].mxu0
        %v458 = vadd.f32 %v249, %v457
        %v459 = vpop.f32.mrb[0].mxu0
        %460 = vmatprep.mubr.bf16.mxu0 0
        %461 = vmatmul.mubr.bf16.gmra.mrb[0].mxu0 %v316
        %v462 = vpop.f32.mrb[0].mxu0
        %v463 = vadd.f32 %v249, %v462
        %v464 = vpop.f32.mrb[0].mxu0
        %v465 = vpop.f32.mrb[0].mxu0
        %v466 = vadd.f32 %v249, %v465
        %v467 = vpop.f32.mrb[0].mxu0
        %468 = vmatprep.mubr.bf16.mxu0 0
        %469 = vmatmul.mubr.bf16.gmra.mrb[0].mxu0 %v319
        %v470 = vpop.f32.mrb[0].mxu0
        %v471 = vadd.f32 %v249, %v470
        %v472 = vpop.f32.mrb[0].mxu0
        %v473 = vpop.f32.mrb[0].mxu0
        %v474 = vadd.f32 %v249, %v473
        %v475 = vpop.f32.mrb[0].mxu0
        %476 = vmatprep.mubr.bf16.mxu0 0
        %477 = vmatmul.mubr.bf16.gmra.mrb[0].mxu0 %v322
        %v478 = vpop.f32.mrb[0].mxu0
        %v479 = vadd.f32 %v249, %v478
        %v480 = vpop.f32.mrb[0].mxu0
        %v481 = vpop.f32.mrb[0].mxu0
        %v482 = vadd.f32 %v249, %v481
        %v483 = vpop.f32.mrb[0].mxu0
        %484 = vdwg.mxu0
        %v485 = vmax.f32 %v359, 0.0
        %v486 = vmax.f32 %v362, 0.0
        %v487 = vmax.f32 %v367, 0.0
        %v488 = vmax.f32 %v370, 0.0
        %v489 = vmax.f32 %v375, 0.0
        %v490 = vmax.f32 %v378, 0.0
        %v491 = vmax.f32 %v383, 0.0
        %v492 = vmax.f32 %v386, 0.0
        %v493 = vmax.f32 %v391, 0.0
        %v494 = vmax.f32 %v394, 0.0
        %v495 = vmax.f32 %v399, 0.0
        %v496 = vmax.f32 %v402, 0.0
        %v497 = vmax.f32 %v407, 0.0
        %v498 = vmax.f32 %v410, 0.0
        %v499 = vmax.f32 %v415, 0.0
        %v500 = vmax.f32 %v418, 0.0
        %v501 = vmax.f32 %v423, 0.0
        %v502 = vmax.f32 %v426, 0.0
        %v503 = vmax.f32 %v431, 0.0
        %v504 = vmax.f32 %v434, 0.0
        %v505 = vmax.f32 %v439, 0.0
        %v506 = vmax.f32 %v442, 0.0
        %v507 = vmax.f32 %v447, 0.0
        %v508 = vmax.f32 %v450, 0.0
        %v509 = vmax.f32 %v455, 0.0
        %v510 = vmax.f32 %v458, 0.0
        %v511 = vmax.f32 %v463, 0.0
        %v512 = vmax.f32 %v466, 0.0
        %v513 = vmax.f32 %v471, 0.0
        %v514 = vmax.f32 %v474, 0.0
        %v515 = vmax.f32 %v479, 0.0
        %v516 = vmax.f32 %v482, 0.0
        %v517 = vpack.c.bf16 %v486, %v485
        %v518 = vpack.c.bf16 %v488, %v487
        %v519 = vpack.c.bf16 %v490, %v489
        %v520 = vpack.c.bf16 %v492, %v491
        %v521 = vpack.c.bf16 %v494, %v493
        %v522 = vpack.c.bf16 %v496, %v495
        %v523 = vpack.c.bf16 %v498, %v497
        %v524 = vpack.c.bf16 %v500, %v499
        %v525 = vpack.c.bf16 %v502, %v501
        %v526 = vpack.c.bf16 %v504, %v503
        %v527 = vpack.c.bf16 %v506, %v505
        %v528 = vpack.c.bf16 %v508, %v507
        %v529 = vpack.c.bf16 %v510, %v509
        %v530 = vpack.c.bf16 %v512, %v511
        %v531 = vpack.c.bf16 %v514, %v513
        %v532 = vpack.c.bf16 %v516, %v515
        %s533 = scalar_lea.vmem [#allocation2], 64
        %v534 = vld [vmem:[%s533] sm:$0xf]
        %v535 = vld [vmem:[%s533 + $0x4] sm:$0xf]
        %v536 = vld [vmem:[%s533 + $0x8] sm:$0xf]
        %v537 = vld [vmem:[%s533 + $0xc] sm:$0xf]
        %v538 = vld [vmem:[%s533 + $0x10] sm:$0xf]
        %v539 = vld [vmem:[%s533 + $0x14] sm:$0xf]
        %v540 = vld [vmem:[%s533 + $0x18] sm:$0xf]
        %v541 = vld [vmem:[%s533 + $0x1c] sm:$0xf]
        %v542 = vld [vmem:[%s533 + $0x20] sm:$0xf]
        %v543 = vld [vmem:[%s533 + $0x24] sm:$0xf]
        %v544 = vld [vmem:[%s533 + $0x28] sm:$0xf]
        %v545 = vld [vmem:[%s533 + $0x2c] sm:$0xf]
        %v546 = vld [vmem:[%s533 + $0x30] sm:$0xf]
        %v547 = vld [vmem:[%s533 + $0x34] sm:$0xf]
        %v548 = vld [vmem:[%s533 + $0x38] sm:$0xf]
        %v549 = vld [vmem:[%s533 + $0x3c] sm:$0xf]
        %s550 = scalar_lea.vmem %s2, 1
        %v551 = vld [vmem:[%s550] sm:$0x1]
        %v553 = vlaneseq
        %v554 = vshrl.u32 %v553, 7
        %v555 = vsub.s32 0, %v554
        %v556 = vrot.slane %v551, %v555
        %v574 = vunpack.c.l.b16 %v534
        %v575 = vunpack.c.l.b16 %v535
        %v576 = vunpack.c.l.b16 %v536
        %v577 = vunpack.c.l.b16 %v537
        %v578 = vunpack.c.l.b16 %v538
        %v579 = vunpack.c.l.b16 %v539
        %v580 = vunpack.c.l.b16 %v540
        %v581 = vunpack.c.l.b16 %v541
        %v582 = vunpack.c.l.b16 %v542
        %v583 = vunpack.c.l.b16 %v543
        %v584 = vunpack.c.l.b16 %v544
        %v585 = vunpack.c.l.b16 %v545
        %v586 = vunpack.c.l.b16 %v546
        %v587 = vunpack.c.l.b16 %v547
        %v588 = vunpack.c.l.b16 %v548
        %v589 = vunpack.c.l.b16 %v549
        %v590 = vpack.c.b16 %v575, %v574
        %v591 = vpack.c.b16 %v577, %v576
        %v592 = vpack.c.b16 %v579, %v578
        %v593 = vpack.c.b16 %v581, %v580
        %v594 = vpack.c.b16 %v583, %v582
        %v595 = vpack.c.b16 %v585, %v584
        %v596 = vpack.c.b16 %v587, %v586
        %v597 = vpack.c.b16 %v589, %v588
        %606 = vmatprep.subr.bf16.mxu0 0
        %607 = vmatpush1.bf16.msra.mxu0 %v590
        %608 = vmatprep.subr.bf16.mxu0 0
        %609 = vmatpush1.bf16.msra.mxu0 %v591
        %610 = vmatprep.subr.bf16.mxu0 0
        %611 = vmatpush1.bf16.msra.mxu0 %v592
        %612 = vmatprep.subr.bf16.mxu0 0
        %613 = vmatpush1.bf16.msra.mxu0 %v593
        %614 = vmatprep.subr.bf16.mxu0 0
        %615 = vmatpush1.bf16.msra.mxu0 %v594
        %616 = vmatprep.subr.bf16.mxu0 0
        %617 = vmatpush1.bf16.msra.mxu0 %v595
        %618 = vmatprep.subr.bf16.mxu0 0
        %619 = vmatpush1.bf16.msra.mxu0 %v596
        %620 = vmatprep.subr.bf16.mxu0 0
        %621 = vmatpush1.bf16.msra.mxu0 %v597
        %622 = vmatprep.subr.bf16.mxu0 0
        %623 = vmatpush1.bf16.msra.mxu0 0
        %624 = vmatprep.subr.bf16.mxu0 0
        %625 = vmatpush1.bf16.msra.mxu0 0
        %626 = vmatprep.subr.bf16.mxu0 0
        %627 = vmatpush1.bf16.msra.mxu0 0
        %628 = vmatprep.subr.bf16.mxu0 0
        %629 = vmatpush1.bf16.msra.mxu0 0
        %630 = vmatprep.subr.bf16.mxu0 0
        %631 = vmatpush1.bf16.msra.mxu0 0
        %632 = vmatprep.subr.bf16.mxu0 0
        %633 = vmatpush1.bf16.msra.mxu0 0
        %634 = vmatprep.subr.bf16.mxu0 0
        %635 = vmatpush1.bf16.msra.mxu0 0
        %636 = vmatprep.subr.bf16.mxu0 0
        %637 = vmatpush1.bf16.msra.mxu0 0
        %638 = vmatprep.mubr.bf16.mxu0 0
        %639 = vmatmul.mubr.bf16.gmra.mrb[0].mxu0 %v517
        %v640 = vpop.f32.mrb[0].mxu0
        %v641 = vadd.f32 %v556, %v640
        %v642 = vpop.f32.mrb[0].mxu0
        %v643 = vpop.f32.mrb[0].mxu0
        %v644 = vadd.f32 %v556, %v643
        %v645 = vpop.f32.mrb[0].mxu0
        %646 = vmatprep.mubr.bf16.mxu0 0
        %647 = vmatmul.mubr.bf16.gmra.mrb[0].mxu0 %v518
        %v648 = vpop.f32.mrb[0].mxu0
        %v649 = vadd.f32 %v556, %v648
        %v650 = vpop.f32.mrb[0].mxu0
        %v651 = vpop.f32.mrb[0].mxu0
        %v652 = vadd.f32 %v556, %v651
        %v653 = vpop.f32.mrb[0].mxu0
        %654 = vmatprep.mubr.bf16.mxu0 0
        %655 = vmatmul.mubr.bf16.gmra.mrb[0].mxu0 %v519
        %v656 = vpop.f32.mrb[0].mxu0
        %v657 = vadd.f32 %v556, %v656
        %v658 = vpop.f32.mrb[0].mxu0
        %v659 = vpop.f32.mrb[0].mxu0
        %v660 = vadd.f32 %v556, %v659
        %v661 = vpop.f32.mrb[0].mxu0
        %662 = vmatprep.mubr.bf16.mxu0 0
        %663 = vmatmul.mubr.bf16.gmra.mrb[0].mxu0 %v520
        %v664 = vpop.f32.mrb[0].mxu0
        %v665 = vadd.f32 %v556, %v664
        %v666 = vpop.f32.mrb[0].mxu0
        %v667 = vpop.f32.mrb[0].mxu0
        %v668 = vadd.f32 %v556, %v667
        %v669 = vpop.f32.mrb[0].mxu0
        %670 = vmatprep.mubr.bf16.mxu0 0
        %671 = vmatmul.mubr.bf16.gmra.mrb[0].mxu0 %v521
        %v672 = vpop.f32.mrb[0].mxu0
        %v673 = vadd.f32 %v556, %v672
        %v674 = vpop.f32.mrb[0].mxu0
        %v675 = vpop.f32.mrb[0].mxu0
        %v676 = vadd.f32 %v556, %v675
        %v677 = vpop.f32.mrb[0].mxu0
        %678 = vmatprep.mubr.bf16.mxu0 0
        %679 = vmatmul.mubr.bf16.gmra.mrb[0].mxu0 %v522
        %v680 = vpop.f32.mrb[0].mxu0
        %v681 = vadd.f32 %v556, %v680
        %v682 = vpop.f32.mrb[0].mxu0
        %v683 = vpop.f32.mrb[0].mxu0
        %v684 = vadd.f32 %v556, %v683
        %v685 = vpop.f32.mrb[0].mxu0
        %686 = vmatprep.mubr.bf16.mxu0 0
        %687 = vmatmul.mubr.bf16.gmra.mrb[0].mxu0 %v523
        %v688 = vpop.f32.mrb[0].mxu0
        %v689 = vadd.f32 %v556, %v688
        %v690 = vpop.f32.mrb[0].mxu0
        %v691 = vpop.f32.mrb[0].mxu0
        %v692 = vadd.f32 %v556, %v691
        %v693 = vpop.f32.mrb[0].mxu0
        %694 = vmatprep.mubr.bf16.mxu0 0
        %695 = vmatmul.mubr.bf16.gmra.mrb[0].mxu0 %v524
        %v696 = vpop.f32.mrb[0].mxu0
        %v697 = vadd.f32 %v556, %v696
        %v698 = vpop.f32.mrb[0].mxu0
        %v699 = vpop.f32.mrb[0].mxu0
        %v700 = vadd.f32 %v556, %v699
        %v701 = vpop.f32.mrb[0].mxu0
        %702 = vmatprep.mubr.bf16.mxu0 0
        %703 = vmatmul.mubr.bf16.gmra.mrb[0].mxu0 %v525
        %v704 = vpop.f32.mrb[0].mxu0
        %v705 = vadd.f32 %v556, %v704
        %v706 = vpop.f32.mrb[0].mxu0
        %v707 = vpop.f32.mrb[0].mxu0
        %v708 = vadd.f32 %v556, %v707
        %v709 = vpop.f32.mrb[0].mxu0
        %710 = vmatprep.mubr.bf16.mxu0 0
        %711 = vmatmul.mubr.bf16.gmra.mrb[0].mxu0 %v526
        %v712 = vpop.f32.mrb[0].mxu0
        %v713 = vadd.f32 %v556, %v712
        %v714 = vpop.f32.mrb[0].mxu0
        %v715 = vpop.f32.mrb[0].mxu0
        %v716 = vadd.f32 %v556, %v715
        %v717 = vpop.f32.mrb[0].mxu0
        %718 = vmatprep.mubr.bf16.mxu0 0
        %719 = vmatmul.mubr.bf16.gmra.mrb[0].mxu0 %v527
        %v720 = vpop.f32.mrb[0].mxu0
        %v721 = vadd.f32 %v556, %v720
        %v722 = vpop.f32.mrb[0].mxu0
        %v723 = vpop.f32.mrb[0].mxu0
        %v724 = vadd.f32 %v556, %v723
        %v725 = vpop.f32.mrb[0].mxu0
        %726 = vmatprep.mubr.bf16.mxu0 0
        %727 = vmatmul.mubr.bf16.gmra.mrb[0].mxu0 %v528
        %v728 = vpop.f32.mrb[0].mxu0
        %v729 = vadd.f32 %v556, %v728
        %v730 = vpop.f32.mrb[0].mxu0
        %v731 = vpop.f32.mrb[0].mxu0
        %v732 = vadd.f32 %v556, %v731
        %v733 = vpop.f32.mrb[0].mxu0
        %734 = vmatprep.mubr.bf16.mxu0 0
        %735 = vmatmul.mubr.bf16.gmra.mrb[0].mxu0 %v529
        %v736 = vpop.f32.mrb[0].mxu0
        %v737 = vadd.f32 %v556, %v736
        %v738 = vpop.f32.mrb[0].mxu0
        %v739 = vpop.f32.mrb[0].mxu0
        %v740 = vadd.f32 %v556, %v739
        %v741 = vpop.f32.mrb[0].mxu0
        %742 = vmatprep.mubr.bf16.mxu0 0
        %743 = vmatmul.mubr.bf16.gmra.mrb[0].mxu0 %v530
        %v744 = vpop.f32.mrb[0].mxu0
        %v745 = vadd.f32 %v556, %v744
        %v746 = vpop.f32.mrb[0].mxu0
        %v747 = vpop.f32.mrb[0].mxu0
        %v748 = vadd.f32 %v556, %v747
        %v749 = vpop.f32.mrb[0].mxu0
        %750 = vmatprep.mubr.bf16.mxu0 0
        %751 = vmatmul.mubr.bf16.gmra.mrb[0].mxu0 %v531
        %v752 = vpop.f32.mrb[0].mxu0
        %v753 = vadd.f32 %v556, %v752
        %v754 = vpop.f32.mrb[0].mxu0
        %v755 = vpop.f32.mrb[0].mxu0
        %v756 = vadd.f32 %v556, %v755
        %v757 = vpop.f32.mrb[0].mxu0
        %758 = vmatprep.mubr.bf16.mxu0 0
        %759 = vmatmul.mubr.bf16.gmra.mrb[0].mxu0 %v532
        %v760 = vpop.f32.mrb[0].mxu0
        %v761 = vadd.f32 %v556, %v760
        %v762 = vpop.f32.mrb[0].mxu0
        %v763 = vpop.f32.mrb[0].mxu0
        %v764 = vadd.f32 %v556, %v763
        %v765 = vpop.f32.mrb[0].mxu0
        %766 = vdwg.mxu0
        %v767 = vmax.f32 %v641, 0.0
        %v768 = vmax.f32 %v644, 0.0
        %v769 = vmax.f32 %v649, 0.0
        %v770 = vmax.f32 %v652, 0.0
        %v771 = vmax.f32 %v657, 0.0
        %v772 = vmax.f32 %v660, 0.0
        %v773 = vmax.f32 %v665, 0.0
        %v774 = vmax.f32 %v668, 0.0
        %v775 = vmax.f32 %v673, 0.0
        %v776 = vmax.f32 %v676, 0.0
        %v777 = vmax.f32 %v681, 0.0
        %v778 = vmax.f32 %v684, 0.0
        %v779 = vmax.f32 %v689, 0.0
        %v780 = vmax.f32 %v692, 0.0
        %v781 = vmax.f32 %v697, 0.0
        %v782 = vmax.f32 %v700, 0.0
        %v783 = vmax.f32 %v705, 0.0
        %v784 = vmax.f32 %v708, 0.0
        %v785 = vmax.f32 %v713, 0.0
        %v786 = vmax.f32 %v716, 0.0
        %v787 = vmax.f32 %v721, 0.0
        %v788 = vmax.f32 %v724, 0.0
        %v789 = vmax.f32 %v729, 0.0
        %v790 = vmax.f32 %v732, 0.0
        %v791 = vmax.f32 %v737, 0.0
        %v792 = vmax.f32 %v740, 0.0
        %v793 = vmax.f32 %v745, 0.0
        %v794 = vmax.f32 %v748, 0.0
        %v795 = vmax.f32 %v753, 0.0
        %v796 = vmax.f32 %v756, 0.0
        %v797 = vmax.f32 %v761, 0.0
        %v798 = vmax.f32 %v764, 0.0
        %v799 = vpack.c.bf16 %v768, %v767
        %v800 = vpack.c.bf16 %v770, %v769
        %v801 = vpack.c.bf16 %v772, %v771
        %v802 = vpack.c.bf16 %v774, %v773
        %v803 = vpack.c.bf16 %v776, %v775
        %v804 = vpack.c.bf16 %v778, %v777
        %v805 = vpack.c.bf16 %v780, %v779
        %v806 = vpack.c.bf16 %v782, %v781
        %v807 = vpack.c.bf16 %v784, %v783
        %v808 = vpack.c.bf16 %v786, %v785
        %v809 = vpack.c.bf16 %v788, %v787
        %v810 = vpack.c.bf16 %v790, %v789
        %v811 = vpack.c.bf16 %v792, %v791
        %v812 = vpack.c.bf16 %v794, %v793
        %v813 = vpack.c.bf16 %v796, %v795
        %v814 = vpack.c.bf16 %v798, %v797
        %s815 = scalar_lea.vmem [#allocation2], 128
        %v816 = vld [vmem:[%s815] sm:$0xf]
        %v817 = vld [vmem:[%s815 + $0x4] sm:$0xf]
        %v818 = vld [vmem:[%s815 + $0x8] sm:$0xf]
        %v819 = vld [vmem:[%s815 + $0xc] sm:$0xf]
        %v820 = vld [vmem:[%s815 + $0x10] sm:$0xf]
        %v821 = vld [vmem:[%s815 + $0x14] sm:$0xf]
        %v822 = vld [vmem:[%s815 + $0x18] sm:$0xf]
        %v823 = vld [vmem:[%s815 + $0x1c] sm:$0xf]
        %v824 = vld [vmem:[%s815 + $0x20] sm:$0xf]
        %v825 = vld [vmem:[%s815 + $0x24] sm:$0xf]
        %v826 = vld [vmem:[%s815 + $0x28] sm:$0xf]
        %v827 = vld [vmem:[%s815 + $0x2c] sm:$0xf]
        %v828 = vld [vmem:[%s815 + $0x30] sm:$0xf]
        %v829 = vld [vmem:[%s815 + $0x34] sm:$0xf]
        %v830 = vld [vmem:[%s815 + $0x38] sm:$0xf]
        %v831 = vld [vmem:[%s815 + $0x3c] sm:$0xf]
        %s832 = scalar_lea.vmem %s2, 2
        %v833 = vld [vmem:[%s832] sm:$0x1]
        %v835 = vlaneseq
        %v836 = vshrl.u32 %v835, 7
        %v837 = vsub.s32 0, %v836
        %v838 = vrot.slane %v833, %v837
        %v856 = vunpack.c.l.b16 %v816
        %v857 = vunpack.c.l.b16 %v817
        %v858 = vunpack.c.l.b16 %v818
        %v859 = vunpack.c.l.b16 %v819
        %v860 = vunpack.c.l.b16 %v820
        %v861 = vunpack.c.l.b16 %v821
        %v862 = vunpack.c.l.b16 %v822
        %v863 = vunpack.c.l.b16 %v823
        %v864 = vunpack.c.l.b16 %v824
        %v865 = vunpack.c.l.b16 %v825
        %v866 = vunpack.c.l.b16 %v826
        %v867 = vunpack.c.l.b16 %v827
        %v868 = vunpack.c.l.b16 %v828
        %v869 = vunpack.c.l.b16 %v829
        %v870 = vunpack.c.l.b16 %v830
        %v871 = vunpack.c.l.b16 %v831
        %v872 = vpack.c.b16 %v857, %v856
        %v873 = vpack.c.b16 %v859, %v858
        %v874 = vpack.c.b16 %v861, %v860
        %v875 = vpack.c.b16 %v863, %v862
        %v876 = vpack.c.b16 %v865, %v864
        %v877 = vpack.c.b16 %v867, %v866
        %v878 = vpack.c.b16 %v869, %v868
        %v879 = vpack.c.b16 %v871, %v870
        %888 = vmatprep.subr.bf16.mxu0 0
        %889 = vmatpush1.bf16.msra.mxu0 %v872
        %890 = vmatprep.subr.bf16.mxu0 0
        %891 = vmatpush1.bf16.msra.mxu0 %v873
        %892 = vmatprep.subr.bf16.mxu0 0
        %893 = vmatpush1.bf16.msra.mxu0 %v874
        %894 = vmatprep.subr.bf16.mxu0 0
        %895 = vmatpush1.bf16.msra.mxu0 %v875
        %896 = vmatprep.subr.bf16.mxu0 0
        %897 = vmatpush1.bf16.msra.mxu0 %v876
        %898 = vmatprep.subr.bf16.mxu0 0
        %899 = vmatpush1.bf16.msra.mxu0 %v877
        %900 = vmatprep.subr.bf16.mxu0 0
        %901 = vmatpush1.bf16.msra.mxu0 %v878
        %902 = vmatprep.subr.bf16.mxu0 0
        %903 = vmatpush1.bf16.msra.mxu0 %v879
        %904 = vmatprep.subr.bf16.mxu0 0
        %905 = vmatpush1.bf16.msra.mxu0 0
        %906 = vmatprep.subr.bf16.mxu0 0
        %907 = vmatpush1.bf16.msra.mxu0 0
        %908 = vmatprep.subr.bf16.mxu0 0
        %909 = vmatpush1.bf16.msra.mxu0 0
        %910 = vmatprep.subr.bf16.mxu0 0
        %911 = vmatpush1.bf16.msra.mxu0 0
        %912 = vmatprep.subr.bf16.mxu0 0
        %913 = vmatpush1.bf16.msra.mxu0 0
        %914 = vmatprep.subr.bf16.mxu0 0
        %915 = vmatpush1.bf16.msra.mxu0 0
        %916 = vmatprep.subr.bf16.mxu0 0
        %917 = vmatpush1.bf16.msra.mxu0 0
        %918 = vmatprep.subr.bf16.mxu0 0
        %919 = vmatpush1.bf16.msra.mxu0 0
        %920 = vmatprep.mubr.bf16.mxu0 0
        %921 = vmatmul.mubr.bf16.gmra.mrb[0].mxu0 %v799
        %v922 = vpop.f32.mrb[0].mxu0
        %v923 = vadd.f32 %v838, %v922
        %v924 = vpop.f32.mrb[0].mxu0
        %v925 = vpop.f32.mrb[0].mxu0
        %v926 = vadd.f32 %v838, %v925
        %v927 = vpop.f32.mrb[0].mxu0
        %928 = vmatprep.mubr.bf16.mxu0 0
        %929 = vmatmul.mubr.bf16.gmra.mrb[0].mxu0 %v800
        %v930 = vpop.f32.mrb[0].mxu0
        %v931 = vadd.f32 %v838, %v930
        %v932 = vpop.f32.mrb[0].mxu0
        %v933 = vpop.f32.mrb[0].mxu0
        %v934 = vadd.f32 %v838, %v933
        %v935 = vpop.f32.mrb[0].mxu0
        %936 = vmatprep.mubr.bf16.mxu0 0
        %937 = vmatmul.mubr.bf16.gmra.mrb[0].mxu0 %v801
        %v938 = vpop.f32.mrb[0].mxu0
        %v939 = vadd.f32 %v838, %v938
        %v940 = vpop.f32.mrb[0].mxu0
        %v941 = vpop.f32.mrb[0].mxu0
        %v942 = vadd.f32 %v838, %v941
        %v943 = vpop.f32.mrb[0].mxu0
        %944 = vmatprep.mubr.bf16.mxu0 0
        %945 = vmatmul.mubr.bf16.gmra.mrb[0].mxu0 %v802
        %v946 = vpop.f32.mrb[0].mxu0
        %v947 = vadd.f32 %v838, %v946
        %v948 = vpop.f32.mrb[0].mxu0
        %v949 = vpop.f32.mrb[0].mxu0
        %v950 = vadd.f32 %v838, %v949
        %v951 = vpop.f32.mrb[0].mxu0
        %952 = vmatprep.mubr.bf16.mxu0 0
        %953 = vmatmul.mubr.bf16.gmra.mrb[0].mxu0 %v803
        %v954 = vpop.f32.mrb[0].mxu0
        %v955 = vadd.f32 %v838, %v954
        %v956 = vpop.f32.mrb[0].mxu0
        %v957 = vpop.f32.mrb[0].mxu0
        %v958 = vadd.f32 %v838, %v957
        %v959 = vpop.f32.mrb[0].mxu0
        %960 = vmatprep.mubr.bf16.mxu0 0
        %961 = vmatmul.mubr.bf16.gmra.mrb[0].mxu0 %v804
        %v962 = vpop.f32.mrb[0].mxu0
        %v963 = vadd.f32 %v838, %v962
        %v964 = vpop.f32.mrb[0].mxu0
        %v965 = vpop.f32.mrb[0].mxu0
        %v966 = vadd.f32 %v838, %v965
        %v967 = vpop.f32.mrb[0].mxu0
        %968 = vmatprep.mubr.bf16.mxu0 0
        %969 = vmatmul.mubr.bf16.gmra.mrb[0].mxu0 %v805
        %v970 = vpop.f32.mrb[0].mxu0
        %v971 = vadd.f32 %v838, %v970
        %v972 = vpop.f32.mrb[0].mxu0
        %v973 = vpop.f32.mrb[0].mxu0
        %v974 = vadd.f32 %v838, %v973
        %v975 = vpop.f32.mrb[0].mxu0
        %976 = vmatprep.mubr.bf16.mxu0 0
        %977 = vmatmul.mubr.bf16.gmra.mrb[0].mxu0 %v806
        %v978 = vpop.f32.mrb[0].mxu0
        %v979 = vadd.f32 %v838, %v978
        %v980 = vpop.f32.mrb[0].mxu0
        %v981 = vpop.f32.mrb[0].mxu0
        %v982 = vadd.f32 %v838, %v981
        %v983 = vpop.f32.mrb[0].mxu0
        %984 = vmatprep.mubr.bf16.mxu0 0
        %985 = vmatmul.mubr.bf16.gmra.mrb[0].mxu0 %v807
        %v986 = vpop.f32.mrb[0].mxu0
        %v987 = vadd.f32 %v838, %v986
        %v988 = vpop.f32.mrb[0].mxu0
        %v989 = vpop.f32.mrb[0].mxu0
        %v990 = vadd.f32 %v838, %v989
        %v991 = vpop.f32.mrb[0].mxu0
        %992 = vmatprep.mubr.bf16.mxu0 0
        %993 = vmatmul.mubr.bf16.gmra.mrb[0].mxu0 %v808
        %v994 = vpop.f32.mrb[0].mxu0
        %v995 = vadd.f32 %v838, %v994
        %v996 = vpop.f32.mrb[0].mxu0
        %v997 = vpop.f32.mrb[0].mxu0
        %v998 = vadd.f32 %v838, %v997
        %v999 = vpop.f32.mrb[0].mxu0
        %1000 = vmatprep.mubr.bf16.mxu0 0
        %1001 = vmatmul.mubr.bf16.gmra.mrb[0].mxu0 %v809
        %v1002 = vpop.f32.mrb[0].mxu0
        %v1003 = vadd.f32 %v838, %v1002
        %v1004 = vpop.f32.mrb[0].mxu0
        %v1005 = vpop.f32.mrb[0].mxu0
        %v1006 = vadd.f32 %v838, %v1005
        %v1007 = vpop.f32.mrb[0].mxu0
        %1008 = vmatprep.mubr.bf16.mxu0 0
        %1009 = vmatmul.mubr.bf16.gmra.mrb[0].mxu0 %v810
        %v1010 = vpop.f32.mrb[0].mxu0
        %v1011 = vadd.f32 %v838, %v1010
        %v1012 = vpop.f32.mrb[0].mxu0
        %v1013 = vpop.f32.mrb[0].mxu0
        %v1014 = vadd.f32 %v838, %v1013
        %v1015 = vpop.f32.mrb[0].mxu0
        %1016 = vmatprep.mubr.bf16.mxu0 0
        %1017 = vmatmul.mubr.bf16.gmra.mrb[0].mxu0 %v811
        %v1018 = vpop.f32.mrb[0].mxu0
        %v1019 = vadd.f32 %v838, %v1018
        %v1020 = vpop.f32.mrb[0].mxu0
        %v1021 = vpop.f32.mrb[0].mxu0
        %v1022 = vadd.f32 %v838, %v1021
        %v1023 = vpop.f32.mrb[0].mxu0
        %1024 = vmatprep.mubr.bf16.mxu0 0
        %1025 = vmatmul.mubr.bf16.gmra.mrb[0].mxu0 %v812
        %v1026 = vpop.f32.mrb[0].mxu0
        %v1027 = vadd.f32 %v838, %v1026
        %v1028 = vpop.f32.mrb[0].mxu0
        %v1029 = vpop.f32.mrb[0].mxu0
        %v1030 = vadd.f32 %v838, %v1029
        %v1031 = vpop.f32.mrb[0].mxu0
        %1032 = vmatprep.mubr.bf16.mxu0 0
        %1033 = vmatmul.mubr.bf16.gmra.mrb[0].mxu0 %v813
        %v1034 = vpop.f32.mrb[0].mxu0
        %v1035 = vadd.f32 %v838, %v1034
        %v1036 = vpop.f32.mrb[0].mxu0
        %v1037 = vpop.f32.mrb[0].mxu0
        %v1038 = vadd.f32 %v838, %v1037
        %v1039 = vpop.f32.mrb[0].mxu0
        %1040 = vmatprep.mubr.bf16.mxu0 0
        %1041 = vmatmul.mubr.bf16.gmra.mrb[0].mxu0 %v814
        %v1042 = vpop.f32.mrb[0].mxu0
        %v1043 = vadd.f32 %v838, %v1042
        %v1044 = vpop.f32.mrb[0].mxu0
        %v1045 = vpop.f32.mrb[0].mxu0
        %v1046 = vadd.f32 %v838, %v1045
        %v1047 = vpop.f32.mrb[0].mxu0
        %1048 = vdwg.mxu0
        %v1049 = vxor.u32 %v923, 2147483648
        %v1050 = vxor.u32 %v926, 2147483648
        %v1051 = vxor.u32 %v931, 2147483648
        %v1052 = vxor.u32 %v934, 2147483648
        %v1053 = vxor.u32 %v939, 2147483648
        %v1054 = vxor.u32 %v942, 2147483648
        %v1055 = vxor.u32 %v947, 2147483648
        %v1056 = vxor.u32 %v950, 2147483648
        %v1057 = vxor.u32 %v955, 2147483648
        %v1058 = vxor.u32 %v958, 2147483648
        %v1059 = vxor.u32 %v963, 2147483648
        %v1060 = vxor.u32 %v966, 2147483648
        %v1061 = vxor.u32 %v971, 2147483648
        %v1062 = vxor.u32 %v974, 2147483648
        %v1063 = vxor.u32 %v979, 2147483648
        %v1064 = vxor.u32 %v982, 2147483648
        %v1065 = vxor.u32 %v987, 2147483648
        %v1066 = vxor.u32 %v990, 2147483648
        %v1067 = vxor.u32 %v995, 2147483648
        %v1068 = vxor.u32 %v998, 2147483648
        %v1069 = vxor.u32 %v1003, 2147483648
        %v1070 = vxor.u32 %v1006, 2147483648
        %v1071 = vxor.u32 %v1011, 2147483648
        %v1072 = vxor.u32 %v1014, 2147483648
        %v1073 = vxor.u32 %v1019, 2147483648
        %v1074 = vxor.u32 %v1022, 2147483648
        %v1075 = vxor.u32 %v1027, 2147483648
        %v1076 = vxor.u32 %v1030, 2147483648
        %v1077 = vxor.u32 %v1035, 2147483648
        %v1078 = vxor.u32 %v1038, 2147483648
        %v1079 = vxor.u32 %v1043, 2147483648
        %v1080 = vxor.u32 %v1046, 2147483648
        %v1081 = vmul.f32 %v1049, 1.442695
        %v1082 = vpow.pop %v1081
        %v1083 = vmul.f32 %v1050, 1.442695
        %v1084 = vpow.pop %v1083
        %v1085 = vmul.f32 %v1051, 1.442695
        %v1086 = vpow.pop %v1085
        %v1087 = vmul.f32 %v1052, 1.442695
        %v1088 = vpow.pop %v1087
        %v1089 = vmul.f32 %v1053, 1.442695
        %v1090 = vpow.pop %v1089
        %v1091 = vmul.f32 %v1054, 1.442695
        %v1092 = vpow.pop %v1091
        %v1093 = vmul.f32 %v1055, 1.442695
        %v1094 = vpow.pop %v1093
        %v1095 = vmul.f32 %v1056, 1.442695
        %v1096 = vpow.pop %v1095
        %v1097 = vmul.f32 %v1057, 1.442695
        %v1098 = vpow.pop %v1097
        %v1099 = vmul.f32 %v1058, 1.442695
        %v1100 = vpow.pop %v1099
        %v1101 = vmul.f32 %v1059, 1.442695
        %v1102 = vpow.pop %v1101
        %v1103 = vmul.f32 %v1060, 1.442695
        %v1104 = vpow.pop %v1103
        %v1105 = vmul.f32 %v1061, 1.442695
        %v1106 = vpow.pop %v1105
        %v1107 = vmul.f32 %v1062, 1.442695
        %v1108 = vpow.pop %v1107
        %v1109 = vmul.f32 %v1063, 1.442695
        %v1110 = vpow.pop %v1109
        %v1111 = vmul.f32 %v1064, 1.442695
        %v1112 = vpow.pop %v1111
        %v1113 = vmul.f32 %v1065, 1.442695
        %v1114 = vpow.pop %v1113
        %v1115 = vmul.f32 %v1066, 1.442695
        %v1116 = vpow.pop %v1115
        %v1117 = vmul.f32 %v1067, 1.442695
        %v1118 = vpow.pop %v1117
        %v1119 = vmul.f32 %v1068, 1.442695
        %v1120 = vpow.pop %v1119
        %v1121 = vmul.f32 %v1069, 1.442695
        %v1122 = vpow.pop %v1121
        %v1123 = vmul.f32 %v1070, 1.442695
        %v1124 = vpow.pop %v1123
        %v1125 = vmul.f32 %v1071, 1.442695
        %v1126 = vpow.pop %v1125
        %v1127 = vmul.f32 %v1072, 1.442695
        %v1128 = vpow.pop %v1127
        %v1129 = vmul.f32 %v1073, 1.442695
        %v1130 = vpow.pop %v1129
        %v1131 = vmul.f32 %v1074, 1.442695
        %v1132 = vpow.pop %v1131
        %v1133 = vmul.f32 %v1075, 1.442695
        %v1134 = vpow.pop %v1133
        %v1135 = vmul.f32 %v1076, 1.442695
        %v1136 = vpow.pop %v1135
        %v1137 = vmul.f32 %v1077, 1.442695
        %v1138 = vpow.pop %v1137
        %v1139 = vmul.f32 %v1078, 1.442695
        %v1140 = vpow.pop %v1139
        %v1141 = vmul.f32 %v1079, 1.442695
        %v1142 = vpow.pop %v1141
        %v1143 = vmul.f32 %v1080, 1.442695
        %v1144 = vpow.pop %v1143
        %v1145 = vadd.f32 %v1082, 1.0
        %v1146 = vadd.f32 %v1084, 1.0
        %v1147 = vadd.f32 %v1086, 1.0
        %v1148 = vadd.f32 %v1088, 1.0
        %v1149 = vadd.f32 %v1090, 1.0
        %v1150 = vadd.f32 %v1092, 1.0
        %v1151 = vadd.f32 %v1094, 1.0
        %v1152 = vadd.f32 %v1096, 1.0
        %v1153 = vadd.f32 %v1098, 1.0
        %v1154 = vadd.f32 %v1100, 1.0
        %v1155 = vadd.f32 %v1102, 1.0
        %v1156 = vadd.f32 %v1104, 1.0
        %v1157 = vadd.f32 %v1106, 1.0
        %v1158 = vadd.f32 %v1108, 1.0
        %v1159 = vadd.f32 %v1110, 1.0
        %v1160 = vadd.f32 %v1112, 1.0
        %v1161 = vadd.f32 %v1114, 1.0
        %v1162 = vadd.f32 %v1116, 1.0
        %v1163 = vadd.f32 %v1118, 1.0
        %v1164 = vadd.f32 %v1120, 1.0
        %v1165 = vadd.f32 %v1122, 1.0
        %v1166 = vadd.f32 %v1124, 1.0
        %v1167 = vadd.f32 %v1126, 1.0
        %v1168 = vadd.f32 %v1128, 1.0
        %v1169 = vadd.f32 %v1130, 1.0
        %v1170 = vadd.f32 %v1132, 1.0
        %v1171 = vadd.f32 %v1134, 1.0
        %v1172 = vadd.f32 %v1136, 1.0
        %v1173 = vadd.f32 %v1138, 1.0
        %v1174 = vadd.f32 %v1140, 1.0
        %v1175 = vadd.f32 %v1142, 1.0
        %v1176 = vadd.f32 %v1144, 1.0
        %v1177 = vrcp.pop %v1145
        %v1178 = vmul.f32 1.0, %v1177
        %v1179 = vrcp.pop %v1146
        %v1180 = vmul.f32 1.0, %v1179
        %v1181 = vrcp.pop %v1147
        %v1182 = vmul.f32 1.0, %v1181
        %v1183 = vrcp.pop %v1148
        %v1184 = vmul.f32 1.0, %v1183
        %v1185 = vrcp.pop %v1149
        %v1186 = vmul.f32 1.0, %v1185
        %v1187 = vrcp.pop %v1150
        %v1188 = vmul.f32 1.0, %v1187
        %v1189 = vrcp.pop %v1151
        %v1190 = vmul.f32 1.0, %v1189
        %v1191 = vrcp.pop %v1152
        %v1192 = vmul.f32 1.0, %v1191
        %v1193 = vrcp.pop %v1153
        %v1194 = vmul.f32 1.0, %v1193
        %v1195 = vrcp.pop %v1154
        %v1196 = vmul.f32 1.0, %v1195
        %v1197 = vrcp.pop %v1155
        %v1198 = vmul.f32 1.0, %v1197
        %v1199 = vrcp.pop %v1156
        %v1200 = vmul.f32 1.0, %v1199
        %v1201 = vrcp.pop %v1157
        %v1202 = vmul.f32 1.0, %v1201
        %v1203 = vrcp.pop %v1158
        %v1204 = vmul.f32 1.0, %v1203
        %v1205 = vrcp.pop %v1159
        %v1206 = vmul.f32 1.0, %v1205
        %v1207 = vrcp.pop %v1160
        %v1208 = vmul.f32 1.0, %v1207
        %v1209 = vrcp.pop %v1161
        %v1210 = vmul.f32 1.0, %v1209
        %v1211 = vrcp.pop %v1162
        %v1212 = vmul.f32 1.0, %v1211
        %v1213 = vrcp.pop %v1163
        %v1214 = vmul.f32 1.0, %v1213
        %v1215 = vrcp.pop %v1164
        %v1216 = vmul.f32 1.0, %v1215
        %v1217 = vrcp.pop %v1165
        %v1218 = vmul.f32 1.0, %v1217
        %v1219 = vrcp.pop %v1166
        %v1220 = vmul.f32 1.0, %v1219
        %v1221 = vrcp.pop %v1167
        %v1222 = vmul.f32 1.0, %v1221
        %v1223 = vrcp.pop %v1168
        %v1224 = vmul.f32 1.0, %v1223
        %v1225 = vrcp.pop %v1169
        %v1226 = vmul.f32 1.0, %v1225
        %v1227 = vrcp.pop %v1170
        %v1228 = vmul.f32 1.0, %v1227
        %v1229 = vrcp.pop %v1171
        %v1230 = vmul.f32 1.0, %v1229
        %v1231 = vrcp.pop %v1172
        %v1232 = vmul.f32 1.0, %v1231
        %v1233 = vrcp.pop %v1173
        %v1234 = vmul.f32 1.0, %v1233
        %v1235 = vrcp.pop %v1174
        %v1236 = vmul.f32 1.0, %v1235
        %v1237 = vrcp.pop %v1175
        %v1238 = vmul.f32 1.0, %v1237
        %v1239 = vrcp.pop %v1176
        %v1240 = vmul.f32 1.0, %v1239
        %v1241 = vmul.f32 %v767, %v1178
        %v1242 = vmul.f32 %v768, %v1180
        %v1243 = vmul.f32 %v769, %v1182
        %v1244 = vmul.f32 %v770, %v1184
        %v1245 = vmul.f32 %v771, %v1186
        %v1246 = vmul.f32 %v772, %v1188
        %v1247 = vmul.f32 %v773, %v1190
        %v1248 = vmul.f32 %v774, %v1192
        %v1249 = vmul.f32 %v775, %v1194
        %v1250 = vmul.f32 %v776, %v1196
        %v1251 = vmul.f32 %v777, %v1198
        %v1252 = vmul.f32 %v778, %v1200
        %v1253 = vmul.f32 %v779, %v1202
        %v1254 = vmul.f32 %v780, %v1204
        %v1255 = vmul.f32 %v781, %v1206
        %v1256 = vmul.f32 %v782, %v1208
        %v1257 = vmul.f32 %v783, %v1210
        %v1258 = vmul.f32 %v784, %v1212
        %v1259 = vmul.f32 %v785, %v1214
        %v1260 = vmul.f32 %v786, %v1216
        %v1261 = vmul.f32 %v787, %v1218
        %v1262 = vmul.f32 %v788, %v1220
        %v1263 = vmul.f32 %v789, %v1222
        %v1264 = vmul.f32 %v790, %v1224
        %v1265 = vmul.f32 %v791, %v1226
        %v1266 = vmul.f32 %v792, %v1228
        %v1267 = vmul.f32 %v793, %v1230
        %v1268 = vmul.f32 %v794, %v1232
        %v1269 = vmul.f32 %v795, %v1234
        %v1270 = vmul.f32 %v796, %v1236
        %v1271 = vmul.f32 %v797, %v1238
        %v1272 = vmul.f32 %v798, %v1240
        %v1273 = vpack.c.bf16 %v1242, %v1241
        %v1274 = vpack.c.bf16 %v1244, %v1243
        %v1275 = vpack.c.bf16 %v1246, %v1245
        %v1276 = vpack.c.bf16 %v1248, %v1247
        %v1277 = vpack.c.bf16 %v1250, %v1249
        %v1278 = vpack.c.bf16 %v1252, %v1251
        %v1279 = vpack.c.bf16 %v1254, %v1253
        %v1280 = vpack.c.bf16 %v1256, %v1255
        %v1281 = vpack.c.bf16 %v1258, %v1257
        %v1282 = vpack.c.bf16 %v1260, %v1259
        %v1283 = vpack.c.bf16 %v1262, %v1261
        %v1284 = vpack.c.bf16 %v1264, %v1263
        %v1285 = vpack.c.bf16 %v1266, %v1265
        %v1286 = vpack.c.bf16 %v1268, %v1267
        %v1287 = vpack.c.bf16 %v1270, %v1269
        %v1288 = vpack.c.bf16 %v1272, %v1271
        %s1289 = scalar_lea.vmem [#allocation2], 192
        %v1290 = vld [vmem:[%s1289] sm:$0xf]
        %v1291 = vld [vmem:[%s1289 + $0x4] sm:$0xf]
        %v1292 = vld [vmem:[%s1289 + $0x8] sm:$0xf]
        %v1293 = vld [vmem:[%s1289 + $0xc] sm:$0xf]
        %v1294 = vld [vmem:[%s1289 + $0x10] sm:$0xf]
        %v1295 = vld [vmem:[%s1289 + $0x14] sm:$0xf]
        %v1296 = vld [vmem:[%s1289 + $0x18] sm:$0xf]
        %v1297 = vld [vmem:[%s1289 + $0x1c] sm:$0xf]
        %v1298 = vld [vmem:[%s1289 + $0x20] sm:$0xf]
        %v1299 = vld [vmem:[%s1289 + $0x24] sm:$0xf]
        %v1300 = vld [vmem:[%s1289 + $0x28] sm:$0xf]
        %v1301 = vld [vmem:[%s1289 + $0x2c] sm:$0xf]
        %v1302 = vld [vmem:[%s1289 + $0x30] sm:$0xf]
        %v1303 = vld [vmem:[%s1289 + $0x34] sm:$0xf]
        %v1304 = vld [vmem:[%s1289 + $0x38] sm:$0xf]
        %v1305 = vld [vmem:[%s1289 + $0x3c] sm:$0xf]
        %s1306 = scalar_lea.vmem %s2, 3
        %v1307 = vld [vmem:[%s1306] sm:$0x1]
        %v1309 = vlaneseq
        %v1310 = vshrl.u32 %v1309, 7
        %v1311 = vsub.s32 0, %v1310
        %v1312 = vrot.slane %v1307, %v1311
        %v1330 = vunpack.c.l.b16 %v1290
        %v1331 = vunpack.c.l.b16 %v1291
        %v1332 = vunpack.c.l.b16 %v1292
        %v1333 = vunpack.c.l.b16 %v1293
        %v1334 = vunpack.c.l.b16 %v1294
        %v1335 = vunpack.c.l.b16 %v1295
        %v1336 = vunpack.c.l.b16 %v1296
        %v1337 = vunpack.c.l.b16 %v1297
        %v1338 = vunpack.c.l.b16 %v1298
        %v1339 = vunpack.c.l.b16 %v1299
        %v1340 = vunpack.c.l.b16 %v1300
        %v1341 = vunpack.c.l.b16 %v1301
        %v1342 = vunpack.c.l.b16 %v1302
        %v1343 = vunpack.c.l.b16 %v1303
        %v1344 = vunpack.c.l.b16 %v1304
        %v1345 = vunpack.c.l.b16 %v1305
        %v1346 = vpack.c.b16 %v1331, %v1330
        %v1347 = vpack.c.b16 %v1333, %v1332
        %v1348 = vpack.c.b16 %v1335, %v1334
        %v1349 = vpack.c.b16 %v1337, %v1336
        %v1350 = vpack.c.b16 %v1339, %v1338
        %v1351 = vpack.c.b16 %v1341, %v1340
        %v1352 = vpack.c.b16 %v1343, %v1342
        %v1353 = vpack.c.b16 %v1345, %v1344
        %1362 = vmatprep.subr.bf16.mxu0 0
        %1363 = vmatpush1.bf16.msra.mxu0 %v1346
        %1364 = vmatprep.subr.bf16.mxu0 0
        %1365 = vmatpush1.bf16.msra.mxu0 %v1347
        %1366 = vmatprep.subr.bf16.mxu0 0
        %1367 = vmatpush1.bf16.msra.mxu0 %v1348
        %1368 = vmatprep.subr.bf16.mxu0 0
        %1369 = vmatpush1.bf16.msra.mxu0 %v1349
        %1370 = vmatprep.subr.bf16.mxu0 0
        %1371 = vmatpush1.bf16.msra.mxu0 %v1350
        %1372 = vmatprep.subr.bf16.mxu0 0
        %1373 = vmatpush1.bf16.msra.mxu0 %v1351
        %1374 = vmatprep.subr.bf16.mxu0 0
        %1375 = vmatpush1.bf16.msra.mxu0 %v1352
        %1376 = vmatprep.subr.bf16.mxu0 0
        %1377 = vmatpush1.bf16.msra.mxu0 %v1353
        %1378 = vmatprep.subr.bf16.mxu0 0
        %1379 = vmatpush1.bf16.msra.mxu0 0
        %1380 = vmatprep.subr.bf16.mxu0 0
        %1381 = vmatpush1.bf16.msra.mxu0 0
        %1382 = vmatprep.subr.bf16.mxu0 0
        %1383 = vmatpush1.bf16.msra.mxu0 0
        %1384 = vmatprep.subr.bf16.mxu0 0
        %1385 = vmatpush1.bf16.msra.mxu0 0
        %1386 = vmatprep.subr.bf16.mxu0 0
        %1387 = vmatpush1.bf16.msra.mxu0 0
        %1388 = vmatprep.subr.bf16.mxu0 0
        %1389 = vmatpush1.bf16.msra.mxu0 0
        %1390 = vmatprep.subr.bf16.mxu0 0
        %1391 = vmatpush1.bf16.msra.mxu0 0
        %1392 = vmatprep.subr.bf16.mxu0 0
        %1393 = vmatpush1.bf16.msra.mxu0 0
        %1394 = vmatprep.mubr.bf16.mxu0 0
        %1395 = vmatmul.mubr.bf16.gmra.mrb[0].mxu0 %v1273
        %v1396 = vpop.f32.mrb[0].mxu0
        %v1397 = vadd.f32 %v1312, %v1396
        %v1398 = vpop.f32.mrb[0].mxu0
        %v1399 = vpop.f32.mrb[0].mxu0
        %v1400 = vadd.f32 %v1312, %v1399
        %v1401 = vpop.f32.mrb[0].mxu0
        %1402 = vmatprep.mubr.bf16.mxu0 0
        %1403 = vmatmul.mubr.bf16.gmra.mrb[0].mxu0 %v1274
        %v1404 = vpop.f32.mrb[0].mxu0
        %v1405 = vadd.f32 %v1312, %v1404
        %v1406 = vpop.f32.mrb[0].mxu0
        %v1407 = vpop.f32.mrb[0].mxu0
        %v1408 = vadd.f32 %v1312, %v1407
        %v1409 = vpop.f32.mrb[0].mxu0
        %1410 = vmatprep.mubr.bf16.mxu0 0
        %1411 = vmatmul.mubr.bf16.gmra.mrb[0].mxu0 %v1275
        %v1412 = vpop.f32.mrb[0].mxu0
        %v1413 = vadd.f32 %v1312, %v1412
        %v1414 = vpop.f32.mrb[0].mxu0
        %v1415 = vpop.f32.mrb[0].mxu0
        %v1416 = vadd.f32 %v1312, %v1415
        %v1417 = vpop.f32.mrb[0].mxu0
        %1418 = vmatprep.mubr.bf16.mxu0 0
        %1419 = vmatmul.mubr.bf16.gmra.mrb[0].mxu0 %v1276
        %v1420 = vpop.f32.mrb[0].mxu0
        %v1421 = vadd.f32 %v1312, %v1420
        %v1422 = vpop.f32.mrb[0].mxu0
        %v1423 = vpop.f32.mrb[0].mxu0
        %v1424 = vadd.f32 %v1312, %v1423
        %v1425 = vpop.f32.mrb[0].mxu0
        %1426 = vmatprep.mubr.bf16.mxu0 0
        %1427 = vmatmul.mubr.bf16.gmra.mrb[0].mxu0 %v1277
        %v1428 = vpop.f32.mrb[0].mxu0
        %v1429 = vadd.f32 %v1312, %v1428
        %v1430 = vpop.f32.mrb[0].mxu0
        %v1431 = vpop.f32.mrb[0].mxu0
        %v1432 = vadd.f32 %v1312, %v1431
        %v1433 = vpop.f32.mrb[0].mxu0
        %1434 = vmatprep.mubr.bf16.mxu0 0
        %1435 = vmatmul.mubr.bf16.gmra.mrb[0].mxu0 %v1278
        %v1436 = vpop.f32.mrb[0].mxu0
        %v1437 = vadd.f32 %v1312, %v1436
        %v1438 = vpop.f32.mrb[0].mxu0
        %v1439 = vpop.f32.mrb[0].mxu0
        %v1440 = vadd.f32 %v1312, %v1439
        %v1441 = vpop.f32.mrb[0].mxu0
        %1442 = vmatprep.mubr.bf16.mxu0 0
        %1443 = vmatmul.mubr.bf16.gmra.mrb[0].mxu0 %v1279
        %v1444 = vpop.f32.mrb[0].mxu0
        %v1445 = vadd.f32 %v1312, %v1444
        %v1446 = vpop.f32.mrb[0].mxu0
        %v1447 = vpop.f32.mrb[0].mxu0
        %v1448 = vadd.f32 %v1312, %v1447
        %v1449 = vpop.f32.mrb[0].mxu0
        %1450 = vmatprep.mubr.bf16.mxu0 0
        %1451 = vmatmul.mubr.bf16.gmra.mrb[0].mxu0 %v1280
        %v1452 = vpop.f32.mrb[0].mxu0
        %v1453 = vadd.f32 %v1312, %v1452
        %v1454 = vpop.f32.mrb[0].mxu0
        %v1455 = vpop.f32.mrb[0].mxu0
        %v1456 = vadd.f32 %v1312, %v1455
        %v1457 = vpop.f32.mrb[0].mxu0
        %1458 = vmatprep.mubr.bf16.mxu0 0
        %1459 = vmatmul.mubr.bf16.gmra.mrb[0].mxu0 %v1281
        %v1460 = vpop.f32.mrb[0].mxu0
        %v1461 = vadd.f32 %v1312, %v1460
        %v1462 = vpop.f32.mrb[0].mxu0
        %v1463 = vpop.f32.mrb[0].mxu0
        %v1464 = vadd.f32 %v1312, %v1463
        %v1465 = vpop.f32.mrb[0].mxu0
        %1466 = vmatprep.mubr.bf16.mxu0 0
        %1467 = vmatmul.mubr.bf16.gmra.mrb[0].mxu0 %v1282
        %v1468 = vpop.f32.mrb[0].mxu0
        %v1469 = vadd.f32 %v1312, %v1468
        %v1470 = vpop.f32.mrb[0].mxu0
        %v1471 = vpop.f32.mrb[0].mxu0
        %v1472 = vadd.f32 %v1312, %v1471
        %v1473 = vpop.f32.mrb[0].mxu0
        %1474 = vmatprep.mubr.bf16.mxu0 0
        %1475 = vmatmul.mubr.bf16.gmra.mrb[0].mxu0 %v1283
        %v1476 = vpop.f32.mrb[0].mxu0
        %v1477 = vadd.f32 %v1312, %v1476
        %v1478 = vpop.f32.mrb[0].mxu0
        %v1479 = vpop.f32.mrb[0].mxu0
        %v1480 = vadd.f32 %v1312, %v1479
        %v1481 = vpop.f32.mrb[0].mxu0
        %1482 = vmatprep.mubr.bf16.mxu0 0
        %1483 = vmatmul.mubr.bf16.gmra.mrb[0].mxu0 %v1284
        %v1484 = vpop.f32.mrb[0].mxu0
        %v1485 = vadd.f32 %v1312, %v1484
        %v1486 = vpop.f32.mrb[0].mxu0
        %v1487 = vpop.f32.mrb[0].mxu0
        %v1488 = vadd.f32 %v1312, %v1487
        %v1489 = vpop.f32.mrb[0].mxu0
        %1490 = vmatprep.mubr.bf16.mxu0 0
        %1491 = vmatmul.mubr.bf16.gmra.mrb[0].mxu0 %v1285
        %v1492 = vpop.f32.mrb[0].mxu0
        %v1493 = vadd.f32 %v1312, %v1492
        %v1494 = vpop.f32.mrb[0].mxu0
        %v1495 = vpop.f32.mrb[0].mxu0
        %v1496 = vadd.f32 %v1312, %v1495
        %v1497 = vpop.f32.mrb[0].mxu0
        %1498 = vmatprep.mubr.bf16.mxu0 0
        %1499 = vmatmul.mubr.bf16.gmra.mrb[0].mxu0 %v1286
        %v1500 = vpop.f32.mrb[0].mxu0
        %v1501 = vadd.f32 %v1312, %v1500
        %v1502 = vpop.f32.mrb[0].mxu0
        %v1503 = vpop.f32.mrb[0].mxu0
        %v1504 = vadd.f32 %v1312, %v1503
        %v1505 = vpop.f32.mrb[0].mxu0
        %1506 = vmatprep.mubr.bf16.mxu0 0
        %1507 = vmatmul.mubr.bf16.gmra.mrb[0].mxu0 %v1287
        %v1508 = vpop.f32.mrb[0].mxu0
        %v1509 = vadd.f32 %v1312, %v1508
        %v1510 = vpop.f32.mrb[0].mxu0
        %v1511 = vpop.f32.mrb[0].mxu0
        %v1512 = vadd.f32 %v1312, %v1511
        %v1513 = vpop.f32.mrb[0].mxu0
        %1514 = vmatprep.mubr.bf16.mxu0 0
        %1515 = vmatmul.mubr.bf16.gmra.mrb[0].mxu0 %v1288
        %v1516 = vpop.f32.mrb[0].mxu0
        %v1517 = vadd.f32 %v1312, %v1516
        %v1518 = vpop.f32.mrb[0].mxu0
        %v1519 = vpop.f32.mrb[0].mxu0
        %v1520 = vadd.f32 %v1312, %v1519
        %v1521 = vpop.f32.mrb[0].mxu0
        %1522 = vdwg.mxu0
        %v1523 = vmax.f32 %v1397, 0.0
        %v1524 = vmax.f32 %v1400, 0.0
        %v1525 = vmax.f32 %v1405, 0.0
        %v1526 = vmax.f32 %v1408, 0.0
        %v1527 = vmax.f32 %v1413, 0.0
        %v1528 = vmax.f32 %v1416, 0.0
        %v1529 = vmax.f32 %v1421, 0.0
        %v1530 = vmax.f32 %v1424, 0.0
        %v1531 = vmax.f32 %v1429, 0.0
        %v1532 = vmax.f32 %v1432, 0.0
        %v1533 = vmax.f32 %v1437, 0.0
        %v1534 = vmax.f32 %v1440, 0.0
        %v1535 = vmax.f32 %v1445, 0.0
        %v1536 = vmax.f32 %v1448, 0.0
        %v1537 = vmax.f32 %v1453, 0.0
        %v1538 = vmax.f32 %v1456, 0.0
        %v1539 = vmax.f32 %v1461, 0.0
        %v1540 = vmax.f32 %v1464, 0.0
        %v1541 = vmax.f32 %v1469, 0.0
        %v1542 = vmax.f32 %v1472, 0.0
        %v1543 = vmax.f32 %v1477, 0.0
        %v1544 = vmax.f32 %v1480, 0.0
        %v1545 = vmax.f32 %v1485, 0.0
        %v1546 = vmax.f32 %v1488, 0.0
        %v1547 = vmax.f32 %v1493, 0.0
        %v1548 = vmax.f32 %v1496, 0.0
        %v1549 = vmax.f32 %v1501, 0.0
        %v1550 = vmax.f32 %v1504, 0.0
        %v1551 = vmax.f32 %v1509, 0.0
        %v1552 = vmax.f32 %v1512, 0.0
        %v1553 = vmax.f32 %v1517, 0.0
        %v1554 = vmax.f32 %v1520, 0.0
        %v1555 = vpack.c.bf16 %v1524, %v1523
        %v1556 = vpack.c.bf16 %v1526, %v1525
        %v1557 = vpack.c.bf16 %v1528, %v1527
        %v1558 = vpack.c.bf16 %v1530, %v1529
        %v1559 = vpack.c.bf16 %v1532, %v1531
        %v1560 = vpack.c.bf16 %v1534, %v1533
        %v1561 = vpack.c.bf16 %v1536, %v1535
        %v1562 = vpack.c.bf16 %v1538, %v1537
        %v1563 = vpack.c.bf16 %v1540, %v1539
        %v1564 = vpack.c.bf16 %v1542, %v1541
        %v1565 = vpack.c.bf16 %v1544, %v1543
        %v1566 = vpack.c.bf16 %v1546, %v1545
        %v1567 = vpack.c.bf16 %v1548, %v1547
        %v1568 = vpack.c.bf16 %v1550, %v1549
        %v1569 = vpack.c.bf16 %v1552, %v1551
        %v1570 = vpack.c.bf16 %v1554, %v1553
        %s1571 = scalar_lea.vmem [#allocation2], 256
        %v1572 = vld [vmem:[%s1571] sm:$0xf]
        %v1573 = vld [vmem:[%s1571 + $0x4] sm:$0xf]
        %v1574 = vld [vmem:[%s1571 + $0x8] sm:$0xf]
        %v1575 = vld [vmem:[%s1571 + $0xc] sm:$0xf]
        %v1576 = vld [vmem:[%s1571 + $0x10] sm:$0xf]
        %v1577 = vld [vmem:[%s1571 + $0x14] sm:$0xf]
        %v1578 = vld [vmem:[%s1571 + $0x18] sm:$0xf]
        %v1579 = vld [vmem:[%s1571 + $0x1c] sm:$0xf]
        %v1580 = vld [vmem:[%s1571 + $0x20] sm:$0xf]
        %v1581 = vld [vmem:[%s1571 + $0x24] sm:$0xf]
        %v1582 = vld [vmem:[%s1571 + $0x28] sm:$0xf]
        %v1583 = vld [vmem:[%s1571 + $0x2c] sm:$0xf]
        %v1584 = vld [vmem:[%s1571 + $0x30] sm:$0xf]
        %v1585 = vld [vmem:[%s1571 + $0x34] sm:$0xf]
        %v1586 = vld [vmem:[%s1571 + $0x38] sm:$0xf]
        %v1587 = vld [vmem:[%s1571 + $0x3c] sm:$0xf]
        %s1588 = scalar_lea.vmem %s2, 4
        %v1589 = vld [vmem:[%s1588] sm:$0x1]
        %v1591 = vlaneseq
        %v1592 = vshrl.u32 %v1591, 7
        %v1593 = vsub.s32 0, %v1592
        %v1594 = vrot.slane %v1589, %v1593
        %v1612 = vunpack.c.l.b16 %v1572
        %v1613 = vunpack.c.l.b16 %v1573
        %v1614 = vunpack.c.l.b16 %v1574
        %v1615 = vunpack.c.l.b16 %v1575
        %v1616 = vunpack.c.l.b16 %v1576
        %v1617 = vunpack.c.l.b16 %v1577
        %v1618 = vunpack.c.l.b16 %v1578
        %v1619 = vunpack.c.l.b16 %v1579
        %v1620 = vunpack.c.l.b16 %v1580
        %v1621 = vunpack.c.l.b16 %v1581
        %v1622 = vunpack.c.l.b16 %v1582
        %v1623 = vunpack.c.l.b16 %v1583
        %v1624 = vunpack.c.l.b16 %v1584
        %v1625 = vunpack.c.l.b16 %v1585
        %v1626 = vunpack.c.l.b16 %v1586
        %v1627 = vunpack.c.l.b16 %v1587
        %v1628 = vpack.c.b16 %v1613, %v1612
        %v1629 = vpack.c.b16 %v1615, %v1614
        %v1630 = vpack.c.b16 %v1617, %v1616
        %v1631 = vpack.c.b16 %v1619, %v1618
        %v1632 = vpack.c.b16 %v1621, %v1620
        %v1633 = vpack.c.b16 %v1623, %v1622
        %v1634 = vpack.c.b16 %v1625, %v1624
        %v1635 = vpack.c.b16 %v1627, %v1626
        %1644 = vmatprep.subr.bf16.mxu0 0
        %1645 = vmatpush1.bf16.msra.mxu0 %v1628
        %1646 = vmatprep.subr.bf16.mxu0 0
        %1647 = vmatpush1.bf16.msra.mxu0 %v1629
        %1648 = vmatprep.subr.bf16.mxu0 0
        %1649 = vmatpush1.bf16.msra.mxu0 %v1630
        %1650 = vmatprep.subr.bf16.mxu0 0
        %1651 = vmatpush1.bf16.msra.mxu0 %v1631
        %1652 = vmatprep.subr.bf16.mxu0 0
        %1653 = vmatpush1.bf16.msra.mxu0 %v1632
        %1654 = vmatprep.subr.bf16.mxu0 0
        %1655 = vmatpush1.bf16.msra.mxu0 %v1633
        %1656 = vmatprep.subr.bf16.mxu0 0
        %1657 = vmatpush1.bf16.msra.mxu0 %v1634
        %1658 = vmatprep.subr.bf16.mxu0 0
        %1659 = vmatpush1.bf16.msra.mxu0 %v1635
        %1660 = vmatprep.subr.bf16.mxu0 0
        %1661 = vmatpush1.bf16.msra.mxu0 0
        %1662 = vmatprep.subr.bf16.mxu0 0
        %1663 = vmatpush1.bf16.msra.mxu0 0
        %1664 = vmatprep.subr.bf16.mxu0 0
        %1665 = vmatpush1.bf16.msra.mxu0 0
        %1666 = vmatprep.subr.bf16.mxu0 0
        %1667 = vmatpush1.bf16.msra.mxu0 0
        %1668 = vmatprep.subr.bf16.mxu0 0
        %1669 = vmatpush1.bf16.msra.mxu0 0
        %1670 = vmatprep.subr.bf16.mxu0 0
        %1671 = vmatpush1.bf16.msra.mxu0 0
        %1672 = vmatprep.subr.bf16.mxu0 0
        %1673 = vmatpush1.bf16.msra.mxu0 0
        %1674 = vmatprep.subr.bf16.mxu0 0
        %1675 = vmatpush1.bf16.msra.mxu0 0
        %1676 = vmatprep.mubr.bf16.mxu0 0
        %1677 = vmatmul.mubr.bf16.gmra.mrb[0].mxu0 %v1555
        %v1678 = vpop.f32.mrb[0].mxu0
        %v1679 = vadd.f32 %v1594, %v1678
        %v1680 = vpop.f32.mrb[0].mxu0
        %v1681 = vpop.f32.mrb[0].mxu0
        %v1682 = vadd.f32 %v1594, %v1681
        %v1683 = vpop.f32.mrb[0].mxu0
        %1684 = vmatprep.mubr.bf16.mxu0 0
        %1685 = vmatmul.mubr.bf16.gmra.mrb[0].mxu0 %v1556
        %v1686 = vpop.f32.mrb[0].mxu0
        %v1687 = vadd.f32 %v1594, %v1686
        %v1688 = vpop.f32.mrb[0].mxu0
        %v1689 = vpop.f32.mrb[0].mxu0
        %v1690 = vadd.f32 %v1594, %v1689
        %v1691 = vpop.f32.mrb[0].mxu0
        %1692 = vmatprep.mubr.bf16.mxu0 0
        %1693 = vmatmul.mubr.bf16.gmra.mrb[0].mxu0 %v1557
        %v1694 = vpop.f32.mrb[0].mxu0
        %v1695 = vadd.f32 %v1594, %v1694
        %v1696 = vpop.f32.mrb[0].mxu0
        %v1697 = vpop.f32.mrb[0].mxu0
        %v1698 = vadd.f32 %v1594, %v1697
        %v1699 = vpop.f32.mrb[0].mxu0
        %1700 = vmatprep.mubr.bf16.mxu0 0
        %1701 = vmatmul.mubr.bf16.gmra.mrb[0].mxu0 %v1558
        %v1702 = vpop.f32.mrb[0].mxu0
        %v1703 = vadd.f32 %v1594, %v1702
        %v1704 = vpop.f32.mrb[0].mxu0
        %v1705 = vpop.f32.mrb[0].mxu0
        %v1706 = vadd.f32 %v1594, %v1705
        %v1707 = vpop.f32.mrb[0].mxu0
        %1708 = vmatprep.mubr.bf16.mxu0 0
        %1709 = vmatmul.mubr.bf16.gmra.mrb[0].mxu0 %v1559
        %v1710 = vpop.f32.mrb[0].mxu0
        %v1711 = vadd.f32 %v1594, %v1710
        %v1712 = vpop.f32.mrb[0].mxu0
        %v1713 = vpop.f32.mrb[0].mxu0
        %v1714 = vadd.f32 %v1594, %v1713
        %v1715 = vpop.f32.mrb[0].mxu0
        %1716 = vmatprep.mubr.bf16.mxu0 0
        %1717 = vmatmul.mubr.bf16.gmra.mrb[0].mxu0 %v1560
        %v1718 = vpop.f32.mrb[0].mxu0
        %v1719 = vadd.f32 %v1594, %v1718
        %v1720 = vpop.f32.mrb[0].mxu0
        %v1721 = vpop.f32.mrb[0].mxu0
        %v1722 = vadd.f32 %v1594, %v1721
        %v1723 = vpop.f32.mrb[0].mxu0
        %1724 = vmatprep.mubr.bf16.mxu0 0
        %1725 = vmatmul.mubr.bf16.gmra.mrb[0].mxu0 %v1561
        %v1726 = vpop.f32.mrb[0].mxu0
        %v1727 = vadd.f32 %v1594, %v1726
        %v1728 = vpop.f32.mrb[0].mxu0
        %v1729 = vpop.f32.mrb[0].mxu0
        %v1730 = vadd.f32 %v1594, %v1729
        %v1731 = vpop.f32.mrb[0].mxu0
        %1732 = vmatprep.mubr.bf16.mxu0 0
        %1733 = vmatmul.mubr.bf16.gmra.mrb[0].mxu0 %v1562
        %v1734 = vpop.f32.mrb[0].mxu0
        %v1735 = vadd.f32 %v1594, %v1734
        %v1736 = vpop.f32.mrb[0].mxu0
        %v1737 = vpop.f32.mrb[0].mxu0
        %v1738 = vadd.f32 %v1594, %v1737
        %v1739 = vpop.f32.mrb[0].mxu0
        %1740 = vmatprep.mubr.bf16.mxu0 0
        %1741 = vmatmul.mubr.bf16.gmra.mrb[0].mxu0 %v1563
        %v1742 = vpop.f32.mrb[0].mxu0
        %v1743 = vadd.f32 %v1594, %v1742
        %v1744 = vpop.f32.mrb[0].mxu0
        %v1745 = vpop.f32.mrb[0].mxu0
        %v1746 = vadd.f32 %v1594, %v1745
        %v1747 = vpop.f32.mrb[0].mxu0
        %1748 = vmatprep.mubr.bf16.mxu0 0
        %1749 = vmatmul.mubr.bf16.gmra.mrb[0].mxu0 %v1564
        %v1750 = vpop.f32.mrb[0].mxu0
        %v1751 = vadd.f32 %v1594, %v1750
        %v1752 = vpop.f32.mrb[0].mxu0
        %v1753 = vpop.f32.mrb[0].mxu0
        %v1754 = vadd.f32 %v1594, %v1753
        %v1755 = vpop.f32.mrb[0].mxu0
        %1756 = vmatprep.mubr.bf16.mxu0 0
        %1757 = vmatmul.mubr.bf16.gmra.mrb[0].mxu0 %v1565
        %v1758 = vpop.f32.mrb[0].mxu0
        %v1759 = vadd.f32 %v1594, %v1758
        %v1760 = vpop.f32.mrb[0].mxu0
        %v1761 = vpop.f32.mrb[0].mxu0
        %v1762 = vadd.f32 %v1594, %v1761
        %v1763 = vpop.f32.mrb[0].mxu0
        %1764 = vmatprep.mubr.bf16.mxu0 0
        %1765 = vmatmul.mubr.bf16.gmra.mrb[0].mxu0 %v1566
        %v1766 = vpop.f32.mrb[0].mxu0
        %v1767 = vadd.f32 %v1594, %v1766
        %v1768 = vpop.f32.mrb[0].mxu0
        %v1769 = vpop.f32.mrb[0].mxu0
        %v1770 = vadd.f32 %v1594, %v1769
        %v1771 = vpop.f32.mrb[0].mxu0
        %1772 = vmatprep.mubr.bf16.mxu0 0
        %1773 = vmatmul.mubr.bf16.gmra.mrb[0].mxu0 %v1567
        %v1774 = vpop.f32.mrb[0].mxu0
        %v1775 = vadd.f32 %v1594, %v1774
        %v1776 = vpop.f32.mrb[0].mxu0
        %v1777 = vpop.f32.mrb[0].mxu0
        %v1778 = vadd.f32 %v1594, %v1777
        %v1779 = vpop.f32.mrb[0].mxu0
        %1780 = vmatprep.mubr.bf16.mxu0 0
        %1781 = vmatmul.mubr.bf16.gmra.mrb[0].mxu0 %v1568
        %v1782 = vpop.f32.mrb[0].mxu0
        %v1783 = vadd.f32 %v1594, %v1782
        %v1784 = vpop.f32.mrb[0].mxu0
        %v1785 = vpop.f32.mrb[0].mxu0
        %v1786 = vadd.f32 %v1594, %v1785
        %v1787 = vpop.f32.mrb[0].mxu0
        %1788 = vmatprep.mubr.bf16.mxu0 0
        %1789 = vmatmul.mubr.bf16.gmra.mrb[0].mxu0 %v1569
        %v1790 = vpop.f32.mrb[0].mxu0
        %v1791 = vadd.f32 %v1594, %v1790
        %v1792 = vpop.f32.mrb[0].mxu0
        %v1793 = vpop.f32.mrb[0].mxu0
        %v1794 = vadd.f32 %v1594, %v1793
        %v1795 = vpop.f32.mrb[0].mxu0
        %1796 = vmatprep.mubr.bf16.mxu0 0
        %1797 = vmatmul.mubr.bf16.gmra.mrb[0].mxu0 %v1570
        %v1798 = vpop.f32.mrb[0].mxu0
        %v1799 = vadd.f32 %v1594, %v1798
        %v1800 = vpop.f32.mrb[0].mxu0
        %v1801 = vpop.f32.mrb[0].mxu0
        %v1802 = vadd.f32 %v1594, %v1801
        %v1803 = vpop.f32.mrb[0].mxu0
        %1804 = vdwg.mxu0
        %v1805 = vxor.u32 %v1679, 2147483648
        %v1806 = vxor.u32 %v1682, 2147483648
        %v1807 = vxor.u32 %v1687, 2147483648
        %v1808 = vxor.u32 %v1690, 2147483648
        %v1809 = vxor.u32 %v1695, 2147483648
        %v1810 = vxor.u32 %v1698, 2147483648
        %v1811 = vxor.u32 %v1703, 2147483648
        %v1812 = vxor.u32 %v1706, 2147483648
        %v1813 = vxor.u32 %v1711, 2147483648
        %v1814 = vxor.u32 %v1714, 2147483648
        %v1815 = vxor.u32 %v1719, 2147483648
        %v1816 = vxor.u32 %v1722, 2147483648
        %v1817 = vxor.u32 %v1727, 2147483648
        %v1818 = vxor.u32 %v1730, 2147483648
        %v1819 = vxor.u32 %v1735, 2147483648
        %v1820 = vxor.u32 %v1738, 2147483648
        %v1821 = vxor.u32 %v1743, 2147483648
        %v1822 = vxor.u32 %v1746, 2147483648
        %v1823 = vxor.u32 %v1751, 2147483648
        %v1824 = vxor.u32 %v1754, 2147483648
        %v1825 = vxor.u32 %v1759, 2147483648
        %v1826 = vxor.u32 %v1762, 2147483648
        %v1827 = vxor.u32 %v1767, 2147483648
        %v1828 = vxor.u32 %v1770, 2147483648
        %v1829 = vxor.u32 %v1775, 2147483648
        %v1830 = vxor.u32 %v1778, 2147483648
        %v1831 = vxor.u32 %v1783, 2147483648
        %v1832 = vxor.u32 %v1786, 2147483648
        %v1833 = vxor.u32 %v1791, 2147483648
        %v1834 = vxor.u32 %v1794, 2147483648
        %v1835 = vxor.u32 %v1799, 2147483648
        %v1836 = vxor.u32 %v1802, 2147483648
        %v1837 = vmul.f32 %v1805, 1.442695
        %v1838 = vpow.pop %v1837
        %v1839 = vmul.f32 %v1806, 1.442695
        %v1840 = vpow.pop %v1839
        %v1841 = vmul.f32 %v1807, 1.442695
        %v1842 = vpow.pop %v1841
        %v1843 = vmul.f32 %v1808, 1.442695
        %v1844 = vpow.pop %v1843
        %v1845 = vmul.f32 %v1809, 1.442695
        %v1846 = vpow.pop %v1845
        %v1847 = vmul.f32 %v1810, 1.442695
        %v1848 = vpow.pop %v1847
        %v1849 = vmul.f32 %v1811, 1.442695
        %v1850 = vpow.pop %v1849
        %v1851 = vmul.f32 %v1812, 1.442695
        %v1852 = vpow.pop %v1851
        %v1853 = vmul.f32 %v1813, 1.442695
        %v1854 = vpow.pop %v1853
        %v1855 = vmul.f32 %v1814, 1.442695
        %v1856 = vpow.pop %v1855
        %v1857 = vmul.f32 %v1815, 1.442695
        %v1858 = vpow.pop %v1857
        %v1859 = vmul.f32 %v1816, 1.442695
        %v1860 = vpow.pop %v1859
        %v1861 = vmul.f32 %v1817, 1.442695
        %v1862 = vpow.pop %v1861
        %v1863 = vmul.f32 %v1818, 1.442695
        %v1864 = vpow.pop %v1863
        %v1865 = vmul.f32 %v1819, 1.442695
        %v1866 = vpow.pop %v1865
        %v1867 = vmul.f32 %v1820, 1.442695
        %v1868 = vpow.pop %v1867
        %v1869 = vmul.f32 %v1821, 1.442695
        %v1870 = vpow.pop %v1869
        %v1871 = vmul.f32 %v1822, 1.442695
        %v1872 = vpow.pop %v1871
        %v1873 = vmul.f32 %v1823, 1.442695
        %v1874 = vpow.pop %v1873
        %v1875 = vmul.f32 %v1824, 1.442695
        %v1876 = vpow.pop %v1875
        %v1877 = vmul.f32 %v1825, 1.442695
        %v1878 = vpow.pop %v1877
        %v1879 = vmul.f32 %v1826, 1.442695
        %v1880 = vpow.pop %v1879
        %v1881 = vmul.f32 %v1827, 1.442695
        %v1882 = vpow.pop %v1881
        %v1883 = vmul.f32 %v1828, 1.442695
        %v1884 = vpow.pop %v1883
        %v1885 = vmul.f32 %v1829, 1.442695
        %v1886 = vpow.pop %v1885
        %v1887 = vmul.f32 %v1830, 1.442695
        %v1888 = vpow.pop %v1887
        %v1889 = vmul.f32 %v1831, 1.442695
        %v1890 = vpow.pop %v1889
        %v1891 = vmul.f32 %v1832, 1.442695
        %v1892 = vpow.pop %v1891
        %v1893 = vmul.f32 %v1833, 1.442695
        %v1894 = vpow.pop %v1893
        %v1895 = vmul.f32 %v1834, 1.442695
        %v1896 = vpow.pop %v1895
        %v1897 = vmul.f32 %v1835, 1.442695
        %v1898 = vpow.pop %v1897
        %v1899 = vmul.f32 %v1836, 1.442695
        %v1900 = vpow.pop %v1899
        %v1901 = vadd.f32 %v1838, 1.0
        %v1902 = vadd.f32 %v1840, 1.0
        %v1903 = vadd.f32 %v1842, 1.0
        %v1904 = vadd.f32 %v1844, 1.0
        %v1905 = vadd.f32 %v1846, 1.0
        %v1906 = vadd.f32 %v1848, 1.0
        %v1907 = vadd.f32 %v1850, 1.0
        %v1908 = vadd.f32 %v1852, 1.0
        %v1909 = vadd.f32 %v1854, 1.0
        %v1910 = vadd.f32 %v1856, 1.0
        %v1911 = vadd.f32 %v1858, 1.0
        %v1912 = vadd.f32 %v1860, 1.0
        %v1913 = vadd.f32 %v1862, 1.0
        %v1914 = vadd.f32 %v1864, 1.0
        %v1915 = vadd.f32 %v1866, 1.0
        %v1916 = vadd.f32 %v1868, 1.0
        %v1917 = vadd.f32 %v1870, 1.0
        %v1918 = vadd.f32 %v1872, 1.0
        %v1919 = vadd.f32 %v1874, 1.0
        %v1920 = vadd.f32 %v1876, 1.0
        %v1921 = vadd.f32 %v1878, 1.0
        %v1922 = vadd.f32 %v1880, 1.0
        %v1923 = vadd.f32 %v1882, 1.0
        %v1924 = vadd.f32 %v1884, 1.0
        %v1925 = vadd.f32 %v1886, 1.0
        %v1926 = vadd.f32 %v1888, 1.0
        %v1927 = vadd.f32 %v1890, 1.0
        %v1928 = vadd.f32 %v1892, 1.0
        %v1929 = vadd.f32 %v1894, 1.0
        %v1930 = vadd.f32 %v1896, 1.0
        %v1931 = vadd.f32 %v1898, 1.0
        %v1932 = vadd.f32 %v1900, 1.0
        %v1933 = vrcp.pop %v1901
        %v1934 = vmul.f32 1.0, %v1933
        %v1935 = vrcp.pop %v1902
        %v1936 = vmul.f32 1.0, %v1935
        %v1937 = vrcp.pop %v1903
        %v1938 = vmul.f32 1.0, %v1937
        %v1939 = vrcp.pop %v1904
        %v1940 = vmul.f32 1.0, %v1939
        %v1941 = vrcp.pop %v1905
        %v1942 = vmul.f32 1.0, %v1941
        %v1943 = vrcp.pop %v1906
        %v1944 = vmul.f32 1.0, %v1943
        %v1945 = vrcp.pop %v1907
        %v1946 = vmul.f32 1.0, %v1945
        %v1947 = vrcp.pop %v1908
        %v1948 = vmul.f32 1.0, %v1947
        %v1949 = vrcp.pop %v1909
        %v1950 = vmul.f32 1.0, %v1949
        %v1951 = vrcp.pop %v1910
        %v1952 = vmul.f32 1.0, %v1951
        %v1953 = vrcp.pop %v1911
        %v1954 = vmul.f32 1.0, %v1953
        %v1955 = vrcp.pop %v1912
        %v1956 = vmul.f32 1.0, %v1955
        %v1957 = vrcp.pop %v1913
        %v1958 = vmul.f32 1.0, %v1957
        %v1959 = vrcp.pop %v1914
        %v1960 = vmul.f32 1.0, %v1959
        %v1961 = vrcp.pop %v1915
        %v1962 = vmul.f32 1.0, %v1961
        %v1963 = vrcp.pop %v1916
        %v1964 = vmul.f32 1.0, %v1963
        %v1965 = vrcp.pop %v1917
        %v1966 = vmul.f32 1.0, %v1965
        %v1967 = vrcp.pop %v1918
        %v1968 = vmul.f32 1.0, %v1967
        %v1969 = vrcp.pop %v1919
        %v1970 = vmul.f32 1.0, %v1969
        %v1971 = vrcp.pop %v1920
        %v1972 = vmul.f32 1.0, %v1971
        %v1973 = vrcp.pop %v1921
        %v1974 = vmul.f32 1.0, %v1973
        %v1975 = vrcp.pop %v1922
        %v1976 = vmul.f32 1.0, %v1975
        %v1977 = vrcp.pop %v1923
        %v1978 = vmul.f32 1.0, %v1977
        %v1979 = vrcp.pop %v1924
        %v1980 = vmul.f32 1.0, %v1979
        %v1981 = vrcp.pop %v1925
        %v1982 = vmul.f32 1.0, %v1981
        %v1983 = vrcp.pop %v1926
        %v1984 = vmul.f32 1.0, %v1983
        %v1985 = vrcp.pop %v1927
        %v1986 = vmul.f32 1.0, %v1985
        %v1987 = vrcp.pop %v1928
        %v1988 = vmul.f32 1.0, %v1987
        %v1989 = vrcp.pop %v1929
        %v1990 = vmul.f32 1.0, %v1989
        %v1991 = vrcp.pop %v1930
        %v1992 = vmul.f32 1.0, %v1991
        %v1993 = vrcp.pop %v1931
        %v1994 = vmul.f32 1.0, %v1993
        %v1995 = vrcp.pop %v1932
        %v1996 = vmul.f32 1.0, %v1995
        %v1997 = vmul.f32 %v1523, %v1934
        %v1998 = vmul.f32 %v1524, %v1936
        %v1999 = vmul.f32 %v1525, %v1938
        %v2000 = vmul.f32 %v1526, %v1940
        %v2001 = vmul.f32 %v1527, %v1942
        %v2002 = vmul.f32 %v1528, %v1944
        %v2003 = vmul.f32 %v1529, %v1946
        %v2004 = vmul.f32 %v1530, %v1948
        %v2005 = vmul.f32 %v1531, %v1950
        %v2006 = vmul.f32 %v1532, %v1952
        %v2007 = vmul.f32 %v1533, %v1954
        %v2008 = vmul.f32 %v1534, %v1956
        %v2009 = vmul.f32 %v1535, %v1958
        %v2010 = vmul.f32 %v1536, %v1960
        %v2011 = vmul.f32 %v1537, %v1962
        %v2012 = vmul.f32 %v1538, %v1964
        %v2013 = vmul.f32 %v1539, %v1966
        %v2014 = vmul.f32 %v1540, %v1968
        %v2015 = vmul.f32 %v1541, %v1970
        %v2016 = vmul.f32 %v1542, %v1972
        %v2017 = vmul.f32 %v1543, %v1974
        %v2018 = vmul.f32 %v1544, %v1976
        %v2019 = vmul.f32 %v1545, %v1978
        %v2020 = vmul.f32 %v1546, %v1980
        %v2021 = vmul.f32 %v1547, %v1982
        %v2022 = vmul.f32 %v1548, %v1984
        %v2023 = vmul.f32 %v1549, %v1986
        %v2024 = vmul.f32 %v1550, %v1988
        %v2025 = vmul.f32 %v1551, %v1990
        %v2026 = vmul.f32 %v1552, %v1992
        %v2027 = vmul.f32 %v1553, %v1994
        %v2028 = vmul.f32 %v1554, %v1996
        %v2029 = vpack.c.bf16 %v1998, %v1997
        %v2030 = vpack.c.bf16 %v2000, %v1999
        %v2031 = vpack.c.bf16 %v2002, %v2001
        %v2032 = vpack.c.bf16 %v2004, %v2003
        %v2033 = vpack.c.bf16 %v2006, %v2005
        %v2034 = vpack.c.bf16 %v2008, %v2007
        %v2035 = vpack.c.bf16 %v2010, %v2009
        %v2036 = vpack.c.bf16 %v2012, %v2011
        %v2037 = vpack.c.bf16 %v2014, %v2013
        %v2038 = vpack.c.bf16 %v2016, %v2015
        %v2039 = vpack.c.bf16 %v2018, %v2017
        %v2040 = vpack.c.bf16 %v2020, %v2019
        %v2041 = vpack.c.bf16 %v2022, %v2021
        %v2042 = vpack.c.bf16 %v2024, %v2023
        %v2043 = vpack.c.bf16 %v2026, %v2025
        %v2044 = vpack.c.bf16 %v2028, %v2027
        %s2045 = scalar_lea.vmem [#allocation2], 320
        %v2046 = vld [vmem:[%s2045] sm:$0xf]
        %v2047 = vld [vmem:[%s2045 + $0x4] sm:$0xf]
        %v2048 = vld [vmem:[%s2045 + $0x8] sm:$0xf]
        %v2049 = vld [vmem:[%s2045 + $0xc] sm:$0xf]
        %v2050 = vld [vmem:[%s2045 + $0x10] sm:$0xf]
        %v2051 = vld [vmem:[%s2045 + $0x14] sm:$0xf]
        %v2052 = vld [vmem:[%s2045 + $0x18] sm:$0xf]
        %v2053 = vld [vmem:[%s2045 + $0x1c] sm:$0xf]
        %v2054 = vld [vmem:[%s2045 + $0x20] sm:$0xf]
        %v2055 = vld [vmem:[%s2045 + $0x24] sm:$0xf]
        %v2056 = vld [vmem:[%s2045 + $0x28] sm:$0xf]
        %v2057 = vld [vmem:[%s2045 + $0x2c] sm:$0xf]
        %v2058 = vld [vmem:[%s2045 + $0x30] sm:$0xf]
        %v2059 = vld [vmem:[%s2045 + $0x34] sm:$0xf]
        %v2060 = vld [vmem:[%s2045 + $0x38] sm:$0xf]
        %v2061 = vld [vmem:[%s2045 + $0x3c] sm:$0xf]
        %s2062 = scalar_lea.vmem %s2, 5
        %v2063 = vld [vmem:[%s2062] sm:$0x1]
        %v2065 = vlaneseq
        %v2066 = vshrl.u32 %v2065, 7
        %v2067 = vsub.s32 0, %v2066
        %v2068 = vrot.slane %v2063, %v2067
        %v2086 = vunpack.c.l.b16 %v2046
        %v2087 = vunpack.c.l.b16 %v2047
        %v2088 = vunpack.c.l.b16 %v2048
        %v2089 = vunpack.c.l.b16 %v2049
        %v2090 = vunpack.c.l.b16 %v2050
        %v2091 = vunpack.c.l.b16 %v2051
        %v2092 = vunpack.c.l.b16 %v2052
        %v2093 = vunpack.c.l.b16 %v2053
        %v2094 = vunpack.c.l.b16 %v2054
        %v2095 = vunpack.c.l.b16 %v2055
        %v2096 = vunpack.c.l.b16 %v2056
        %v2097 = vunpack.c.l.b16 %v2057
        %v2098 = vunpack.c.l.b16 %v2058
        %v2099 = vunpack.c.l.b16 %v2059
        %v2100 = vunpack.c.l.b16 %v2060
        %v2101 = vunpack.c.l.b16 %v2061
        %v2102 = vpack.c.b16 %v2087, %v2086
        %v2103 = vpack.c.b16 %v2089, %v2088
        %v2104 = vpack.c.b16 %v2091, %v2090
        %v2105 = vpack.c.b16 %v2093, %v2092
        %v2106 = vpack.c.b16 %v2095, %v2094
        %v2107 = vpack.c.b16 %v2097, %v2096
        %v2108 = vpack.c.b16 %v2099, %v2098
        %v2109 = vpack.c.b16 %v2101, %v2100
        %2118 = vmatprep.subr.bf16.mxu0 0
        %2119 = vmatpush1.bf16.msra.mxu0 %v2102
        %2120 = vmatprep.subr.bf16.mxu0 0
        %2121 = vmatpush1.bf16.msra.mxu0 %v2103
        %2122 = vmatprep.subr.bf16.mxu0 0
        %2123 = vmatpush1.bf16.msra.mxu0 %v2104
        %2124 = vmatprep.subr.bf16.mxu0 0
        %2125 = vmatpush1.bf16.msra.mxu0 %v2105
        %2126 = vmatprep.subr.bf16.mxu0 0
        %2127 = vmatpush1.bf16.msra.mxu0 %v2106
        %2128 = vmatprep.subr.bf16.mxu0 0
        %2129 = vmatpush1.bf16.msra.mxu0 %v2107
        %2130 = vmatprep.subr.bf16.mxu0 0
        %2131 = vmatpush1.bf16.msra.mxu0 %v2108
        %2132 = vmatprep.subr.bf16.mxu0 0
        %2133 = vmatpush1.bf16.msra.mxu0 %v2109
        %2134 = vmatprep.subr.bf16.mxu0 0
        %2135 = vmatpush1.bf16.msra.mxu0 0
        %2136 = vmatprep.subr.bf16.mxu0 0
        %2137 = vmatpush1.bf16.msra.mxu0 0
        %2138 = vmatprep.subr.bf16.mxu0 0
        %2139 = vmatpush1.bf16.msra.mxu0 0
        %2140 = vmatprep.subr.bf16.mxu0 0
        %2141 = vmatpush1.bf16.msra.mxu0 0
        %2142 = vmatprep.subr.bf16.mxu0 0
        %2143 = vmatpush1.bf16.msra.mxu0 0
        %2144 = vmatprep.subr.bf16.mxu0 0
        %2145 = vmatpush1.bf16.msra.mxu0 0
        %2146 = vmatprep.subr.bf16.mxu0 0
        %2147 = vmatpush1.bf16.msra.mxu0 0
        %2148 = vmatprep.subr.bf16.mxu0 0
        %2149 = vmatpush1.bf16.msra.mxu0 0
        %2150 = vmatprep.mubr.bf16.mxu0 0
        %2151 = vmatmul.mubr.bf16.gmra.mrb[0].mxu0 %v2029
        %v2152 = vpop.f32.mrb[0].mxu0
        %v2153 = vadd.f32 %v2068, %v2152
        %v2154 = vpop.f32.mrb[0].mxu0
        %v2155 = vpop.f32.mrb[0].mxu0
        %v2156 = vadd.f32 %v2068, %v2155
        %v2157 = vpop.f32.mrb[0].mxu0
        %2158 = vmatprep.mubr.bf16.mxu0 0
        %2159 = vmatmul.mubr.bf16.gmra.mrb[0].mxu0 %v2030
        %v2160 = vpop.f32.mrb[0].mxu0
        %v2161 = vadd.f32 %v2068, %v2160
        %v2162 = vpop.f32.mrb[0].mxu0
        %v2163 = vpop.f32.mrb[0].mxu0
        %v2164 = vadd.f32 %v2068, %v2163
        %v2165 = vpop.f32.mrb[0].mxu0
        %2166 = vmatprep.mubr.bf16.mxu0 0
        %2167 = vmatmul.mubr.bf16.gmra.mrb[0].mxu0 %v2031
        %v2168 = vpop.f32.mrb[0].mxu0
        %v2169 = vadd.f32 %v2068, %v2168
        %v2170 = vpop.f32.mrb[0].mxu0
        %v2171 = vpop.f32.mrb[0].mxu0
        %v2172 = vadd.f32 %v2068, %v2171
        %v2173 = vpop.f32.mrb[0].mxu0
        %2174 = vmatprep.mubr.bf16.mxu0 0
        %2175 = vmatmul.mubr.bf16.gmra.mrb[0].mxu0 %v2032
        %v2176 = vpop.f32.mrb[0].mxu0
        %v2177 = vadd.f32 %v2068, %v2176
        %v2178 = vpop.f32.mrb[0].mxu0
        %v2179 = vpop.f32.mrb[0].mxu0
        %v2180 = vadd.f32 %v2068, %v2179
        %v2181 = vpop.f32.mrb[0].mxu0
        %2182 = vmatprep.mubr.bf16.mxu0 0
        %2183 = vmatmul.mubr.bf16.gmra.mrb[0].mxu0 %v2033
        %v2184 = vpop.f32.mrb[0].mxu0
        %v2185 = vadd.f32 %v2068, %v2184
        %v2186 = vpop.f32.mrb[0].mxu0
        %v2187 = vpop.f32.mrb[0].mxu0
        %v2188 = vadd.f32 %v2068, %v2187
        %v2189 = vpop.f32.mrb[0].mxu0
        %2190 = vmatprep.mubr.bf16.mxu0 0
        %2191 = vmatmul.mubr.bf16.gmra.mrb[0].mxu0 %v2034
        %v2192 = vpop.f32.mrb[0].mxu0
        %v2193 = vadd.f32 %v2068, %v2192
        %v2194 = vpop.f32.mrb[0].mxu0
        %v2195 = vpop.f32.mrb[0].mxu0
        %v2196 = vadd.f32 %v2068, %v2195
        %v2197 = vpop.f32.mrb[0].mxu0
        %2198 = vmatprep.mubr.bf16.mxu0 0
        %2199 = vmatmul.mubr.bf16.gmra.mrb[0].mxu0 %v2035
        %v2200 = vpop.f32.mrb[0].mxu0
        %v2201 = vadd.f32 %v2068, %v2200
        %v2202 = vpop.f32.mrb[0].mxu0
        %v2203 = vpop.f32.mrb[0].mxu0
        %v2204 = vadd.f32 %v2068, %v2203
        %v2205 = vpop.f32.mrb[0].mxu0
        %2206 = vmatprep.mubr.bf16.mxu0 0
        %2207 = vmatmul.mubr.bf16.gmra.mrb[0].mxu0 %v2036
        %v2208 = vpop.f32.mrb[0].mxu0
        %v2209 = vadd.f32 %v2068, %v2208
        %v2210 = vpop.f32.mrb[0].mxu0
        %v2211 = vpop.f32.mrb[0].mxu0
        %v2212 = vadd.f32 %v2068, %v2211
        %v2213 = vpop.f32.mrb[0].mxu0
        %2214 = vmatprep.mubr.bf16.mxu0 0
        %2215 = vmatmul.mubr.bf16.gmra.mrb[0].mxu0 %v2037
        %v2216 = vpop.f32.mrb[0].mxu0
        %v2217 = vadd.f32 %v2068, %v2216
        %v2218 = vpop.f32.mrb[0].mxu0
        %v2219 = vpop.f32.mrb[0].mxu0
        %v2220 = vadd.f32 %v2068, %v2219
        %v2221 = vpop.f32.mrb[0].mxu0
        %2222 = vmatprep.mubr.bf16.mxu0 0
        %2223 = vmatmul.mubr.bf16.gmra.mrb[0].mxu0 %v2038
        %v2224 = vpop.f32.mrb[0].mxu0
        %v2225 = vadd.f32 %v2068, %v2224
        %v2226 = vpop.f32.mrb[0].mxu0
        %v2227 = vpop.f32.mrb[0].mxu0
        %v2228 = vadd.f32 %v2068, %v2227
        %v2229 = vpop.f32.mrb[0].mxu0
        %2230 = vmatprep.mubr.bf16.mxu0 0
        %2231 = vmatmul.mubr.bf16.gmra.mrb[0].mxu0 %v2039
        %v2232 = vpop.f32.mrb[0].mxu0
        %v2233 = vadd.f32 %v2068, %v2232
        %v2234 = vpop.f32.mrb[0].mxu0
        %v2235 = vpop.f32.mrb[0].mxu0
        %v2236 = vadd.f32 %v2068, %v2235
        %v2237 = vpop.f32.mrb[0].mxu0
        %2238 = vmatprep.mubr.bf16.mxu0 0
        %2239 = vmatmul.mubr.bf16.gmra.mrb[0].mxu0 %v2040
        %v2240 = vpop.f32.mrb[0].mxu0
        %v2241 = vadd.f32 %v2068, %v2240
        %v2242 = vpop.f32.mrb[0].mxu0
        %v2243 = vpop.f32.mrb[0].mxu0
        %v2244 = vadd.f32 %v2068, %v2243
        %v2245 = vpop.f32.mrb[0].mxu0
        %2246 = vmatprep.mubr.bf16.mxu0 0
        %2247 = vmatmul.mubr.bf16.gmra.mrb[0].mxu0 %v2041
        %v2248 = vpop.f32.mrb[0].mxu0
        %v2249 = vadd.f32 %v2068, %v2248
        %v2250 = vpop.f32.mrb[0].mxu0
        %v2251 = vpop.f32.mrb[0].mxu0
        %v2252 = vadd.f32 %v2068, %v2251
        %v2253 = vpop.f32.mrb[0].mxu0
        %2254 = vmatprep.mubr.bf16.mxu0 0
        %2255 = vmatmul.mubr.bf16.gmra.mrb[0].mxu0 %v2042
        %v2256 = vpop.f32.mrb[0].mxu0
        %v2257 = vadd.f32 %v2068, %v2256
        %v2258 = vpop.f32.mrb[0].mxu0
        %v2259 = vpop.f32.mrb[0].mxu0
        %v2260 = vadd.f32 %v2068, %v2259
        %v2261 = vpop.f32.mrb[0].mxu0
        %2262 = vmatprep.mubr.bf16.mxu0 0
        %2263 = vmatmul.mubr.bf16.gmra.mrb[0].mxu0 %v2043
        %v2264 = vpop.f32.mrb[0].mxu0
        %v2265 = vadd.f32 %v2068, %v2264
        %v2266 = vpop.f32.mrb[0].mxu0
        %v2267 = vpop.f32.mrb[0].mxu0
        %v2268 = vadd.f32 %v2068, %v2267
        %v2269 = vpop.f32.mrb[0].mxu0
        %2270 = vmatprep.mubr.bf16.mxu0 0
        %2271 = vmatmul.mubr.bf16.gmra.mrb[0].mxu0 %v2044
        %v2272 = vpop.f32.mrb[0].mxu0
        %v2273 = vadd.f32 %v2068, %v2272
        %v2274 = vpop.f32.mrb[0].mxu0
        %v2275 = vpop.f32.mrb[0].mxu0
        %v2276 = vadd.f32 %v2068, %v2275
        %v2277 = vpop.f32.mrb[0].mxu0
        %2278 = vdwg.mxu0
        %v2279 = vmax.f32 %v2153, 0.0
        %v2280 = vmax.f32 %v2156, 0.0
        %v2281 = vmax.f32 %v2161, 0.0
        %v2282 = vmax.f32 %v2164, 0.0
        %v2283 = vmax.f32 %v2169, 0.0
        %v2284 = vmax.f32 %v2172, 0.0
        %v2285 = vmax.f32 %v2177, 0.0
        %v2286 = vmax.f32 %v2180, 0.0
        %v2287 = vmax.f32 %v2185, 0.0
        %v2288 = vmax.f32 %v2188, 0.0
        %v2289 = vmax.f32 %v2193, 0.0
        %v2290 = vmax.f32 %v2196, 0.0
        %v2291 = vmax.f32 %v2201, 0.0
        %v2292 = vmax.f32 %v2204, 0.0
        %v2293 = vmax.f32 %v2209, 0.0
        %v2294 = vmax.f32 %v2212, 0.0
        %v2295 = vmax.f32 %v2217, 0.0
        %v2296 = vmax.f32 %v2220, 0.0
        %v2297 = vmax.f32 %v2225, 0.0
        %v2298 = vmax.f32 %v2228, 0.0
        %v2299 = vmax.f32 %v2233, 0.0
        %v2300 = vmax.f32 %v2236, 0.0
        %v2301 = vmax.f32 %v2241, 0.0
        %v2302 = vmax.f32 %v2244, 0.0
        %v2303 = vmax.f32 %v2249, 0.0
        %v2304 = vmax.f32 %v2252, 0.0
        %v2305 = vmax.f32 %v2257, 0.0
        %v2306 = vmax.f32 %v2260, 0.0
        %v2307 = vmax.f32 %v2265, 0.0
        %v2308 = vmax.f32 %v2268, 0.0
        %v2309 = vmax.f32 %v2273, 0.0
        %v2310 = vmax.f32 %v2276, 0.0
        %v2311 = vpack.c.bf16 %v2280, %v2279
        %v2312 = vpack.c.bf16 %v2282, %v2281
        %v2313 = vpack.c.bf16 %v2284, %v2283
        %v2314 = vpack.c.bf16 %v2286, %v2285
        %v2315 = vpack.c.bf16 %v2288, %v2287
        %v2316 = vpack.c.bf16 %v2290, %v2289
        %v2317 = vpack.c.bf16 %v2292, %v2291
        %v2318 = vpack.c.bf16 %v2294, %v2293
        %v2319 = vpack.c.bf16 %v2296, %v2295
        %v2320 = vpack.c.bf16 %v2298, %v2297
        %v2321 = vpack.c.bf16 %v2300, %v2299
        %v2322 = vpack.c.bf16 %v2302, %v2301
        %v2323 = vpack.c.bf16 %v2304, %v2303
        %v2324 = vpack.c.bf16 %v2306, %v2305
        %v2325 = vpack.c.bf16 %v2308, %v2307
        %v2326 = vpack.c.bf16 %v2310, %v2309
        %s2327 = scalar_lea.vmem [#allocation2], 384
        %v2328 = vld [vmem:[%s2327] sm:$0xf]
        %v2329 = vld [vmem:[%s2327 + $0x4] sm:$0xf]
        %v2330 = vld [vmem:[%s2327 + $0x8] sm:$0xf]
        %v2331 = vld [vmem:[%s2327 + $0xc] sm:$0xf]
        %v2332 = vld [vmem:[%s2327 + $0x10] sm:$0xf]
        %v2333 = vld [vmem:[%s2327 + $0x14] sm:$0xf]
        %v2334 = vld [vmem:[%s2327 + $0x18] sm:$0xf]
        %v2335 = vld [vmem:[%s2327 + $0x1c] sm:$0xf]
        %v2336 = vld [vmem:[%s2327 + $0x20] sm:$0xf]
        %v2337 = vld [vmem:[%s2327 + $0x24] sm:$0xf]
        %v2338 = vld [vmem:[%s2327 + $0x28] sm:$0xf]
        %v2339 = vld [vmem:[%s2327 + $0x2c] sm:$0xf]
        %v2340 = vld [vmem:[%s2327 + $0x30] sm:$0xf]
        %v2341 = vld [vmem:[%s2327 + $0x34] sm:$0xf]
        %v2342 = vld [vmem:[%s2327 + $0x38] sm:$0xf]
        %v2343 = vld [vmem:[%s2327 + $0x3c] sm:$0xf]
        %s2344 = scalar_lea.vmem %s2, 6
        %v2345 = vld [vmem:[%s2344] sm:$0x1]
        %v2347 = vlaneseq
        %v2348 = vshrl.u32 %v2347, 7
        %v2349 = vsub.s32 0, %v2348
        %v2350 = vrot.slane %v2345, %v2349
        %v2368 = vunpack.c.l.b16 %v2328
        %v2369 = vunpack.c.l.b16 %v2329
        %v2370 = vunpack.c.l.b16 %v2330
        %v2371 = vunpack.c.l.b16 %v2331
        %v2372 = vunpack.c.l.b16 %v2332
        %v2373 = vunpack.c.l.b16 %v2333
        %v2374 = vunpack.c.l.b16 %v2334
        %v2375 = vunpack.c.l.b16 %v2335
        %v2376 = vunpack.c.l.b16 %v2336
        %v2377 = vunpack.c.l.b16 %v2337
        %v2378 = vunpack.c.l.b16 %v2338
        %v2379 = vunpack.c.l.b16 %v2339
        %v2380 = vunpack.c.l.b16 %v2340
        %v2381 = vunpack.c.l.b16 %v2341
        %v2382 = vunpack.c.l.b16 %v2342
        %v2383 = vunpack.c.l.b16 %v2343
        %v2384 = vpack.c.b16 %v2369, %v2368
        %v2385 = vpack.c.b16 %v2371, %v2370
        %v2386 = vpack.c.b16 %v2373, %v2372
        %v2387 = vpack.c.b16 %v2375, %v2374
        %v2388 = vpack.c.b16 %v2377, %v2376
        %v2389 = vpack.c.b16 %v2379, %v2378
        %v2390 = vpack.c.b16 %v2381, %v2380
        %v2391 = vpack.c.b16 %v2383, %v2382
        %2400 = vmatprep.subr.bf16.mxu0 0
        %2401 = vmatpush1.bf16.msra.mxu0 %v2384
        %2402 = vmatprep.subr.bf16.mxu0 0
        %2403 = vmatpush1.bf16.msra.mxu0 %v2385
        %2404 = vmatprep.subr.bf16.mxu0 0
        %2405 = vmatpush1.bf16.msra.mxu0 %v2386
        %2406 = vmatprep.subr.bf16.mxu0 0
        %2407 = vmatpush1.bf16.msra.mxu0 %v2387
        %2408 = vmatprep.subr.bf16.mxu0 0
        %2409 = vmatpush1.bf16.msra.mxu0 %v2388
        %2410 = vmatprep.subr.bf16.mxu0 0
        %2411 = vmatpush1.bf16.msra.mxu0 %v2389
        %2412 = vmatprep.subr.bf16.mxu0 0
        %2413 = vmatpush1.bf16.msra.mxu0 %v2390
        %2414 = vmatprep.subr.bf16.mxu0 0
        %2415 = vmatpush1.bf16.msra.mxu0 %v2391
        %2416 = vmatprep.subr.bf16.mxu0 0
        %2417 = vmatpush1.bf16.msra.mxu0 0
        %2418 = vmatprep.subr.bf16.mxu0 0
        %2419 = vmatpush1.bf16.msra.mxu0 0
        %2420 = vmatprep.subr.bf16.mxu0 0
        %2421 = vmatpush1.bf16.msra.mxu0 0
        %2422 = vmatprep.subr.bf16.mxu0 0
        %2423 = vmatpush1.bf16.msra.mxu0 0
        %2424 = vmatprep.subr.bf16.mxu0 0
        %2425 = vmatpush1.bf16.msra.mxu0 0
        %2426 = vmatprep.subr.bf16.mxu0 0
        %2427 = vmatpush1.bf16.msra.mxu0 0
        %2428 = vmatprep.subr.bf16.mxu0 0
        %2429 = vmatpush1.bf16.msra.mxu0 0
        %2430 = vmatprep.subr.bf16.mxu0 0
        %2431 = vmatpush1.bf16.msra.mxu0 0
        %2432 = vmatprep.mubr.bf16.mxu0 0
        %2433 = vmatmul.mubr.bf16.gmra.mrb[0].mxu0 %v2311
        %v2434 = vpop.f32.mrb[0].mxu0
        %v2435 = vadd.f32 %v2350, %v2434
        %v2436 = vpop.f32.mrb[0].mxu0
        %v2437 = vpop.f32.mrb[0].mxu0
        %v2438 = vadd.f32 %v2350, %v2437
        %v2439 = vpop.f32.mrb[0].mxu0
        %2440 = vmatprep.mubr.bf16.mxu0 0
        %2441 = vmatmul.mubr.bf16.gmra.mrb[0].mxu0 %v2312
        %v2442 = vpop.f32.mrb[0].mxu0
        %v2443 = vadd.f32 %v2350, %v2442
        %v2444 = vpop.f32.mrb[0].mxu0
        %v2445 = vpop.f32.mrb[0].mxu0
        %v2446 = vadd.f32 %v2350, %v2445
        %v2447 = vpop.f32.mrb[0].mxu0
        %2448 = vmatprep.mubr.bf16.mxu0 0
        %2449 = vmatmul.mubr.bf16.gmra.mrb[0].mxu0 %v2313
        %v2450 = vpop.f32.mrb[0].mxu0
        %v2451 = vadd.f32 %v2350, %v2450
        %v2452 = vpop.f32.mrb[0].mxu0
        %v2453 = vpop.f32.mrb[0].mxu0
        %v2454 = vadd.f32 %v2350, %v2453
        %v2455 = vpop.f32.mrb[0].mxu0
        %2456 = vmatprep.mubr.bf16.mxu0 0
        %2457 = vmatmul.mubr.bf16.gmra.mrb[0].mxu0 %v2314
        %v2458 = vpop.f32.mrb[0].mxu0
        %v2459 = vadd.f32 %v2350, %v2458
        %v2460 = vpop.f32.mrb[0].mxu0
        %v2461 = vpop.f32.mrb[0].mxu0
        %v2462 = vadd.f32 %v2350, %v2461
        %v2463 = vpop.f32.mrb[0].mxu0
        %2464 = vmatprep.mubr.bf16.mxu0 0
        %2465 = vmatmul.mubr.bf16.gmra.mrb[0].mxu0 %v2315
        %v2466 = vpop.f32.mrb[0].mxu0
        %v2467 = vadd.f32 %v2350, %v2466
        %v2468 = vpop.f32.mrb[0].mxu0
        %v2469 = vpop.f32.mrb[0].mxu0
        %v2470 = vadd.f32 %v2350, %v2469
        %v2471 = vpop.f32.mrb[0].mxu0
        %2472 = vmatprep.mubr.bf16.mxu0 0
        %2473 = vmatmul.mubr.bf16.gmra.mrb[0].mxu0 %v2316
        %v2474 = vpop.f32.mrb[0].mxu0
        %v2475 = vadd.f32 %v2350, %v2474
        %v2476 = vpop.f32.mrb[0].mxu0
        %v2477 = vpop.f32.mrb[0].mxu0
        %v2478 = vadd.f32 %v2350, %v2477
        %v2479 = vpop.f32.mrb[0].mxu0
        %2480 = vmatprep.mubr.bf16.mxu0 0
        %2481 = vmatmul.mubr.bf16.gmra.mrb[0].mxu0 %v2317
        %v2482 = vpop.f32.mrb[0].mxu0
        %v2483 = vadd.f32 %v2350, %v2482
        %v2484 = vpop.f32.mrb[0].mxu0
        %v2485 = vpop.f32.mrb[0].mxu0
        %v2486 = vadd.f32 %v2350, %v2485
        %v2487 = vpop.f32.mrb[0].mxu0
        %2488 = vmatprep.mubr.bf16.mxu0 0
        %2489 = vmatmul.mubr.bf16.gmra.mrb[0].mxu0 %v2318
        %v2490 = vpop.f32.mrb[0].mxu0
        %v2491 = vadd.f32 %v2350, %v2490
        %v2492 = vpop.f32.mrb[0].mxu0
        %v2493 = vpop.f32.mrb[0].mxu0
        %v2494 = vadd.f32 %v2350, %v2493
        %v2495 = vpop.f32.mrb[0].mxu0
        %2496 = vmatprep.mubr.bf16.mxu0 0
        %2497 = vmatmul.mubr.bf16.gmra.mrb[0].mxu0 %v2319
        %v2498 = vpop.f32.mrb[0].mxu0
        %v2499 = vadd.f32 %v2350, %v2498
        %v2500 = vpop.f32.mrb[0].mxu0
        %v2501 = vpop.f32.mrb[0].mxu0
        %v2502 = vadd.f32 %v2350, %v2501
        %v2503 = vpop.f32.mrb[0].mxu0
        %2504 = vmatprep.mubr.bf16.mxu0 0
        %2505 = vmatmul.mubr.bf16.gmra.mrb[0].mxu0 %v2320
        %v2506 = vpop.f32.mrb[0].mxu0
        %v2507 = vadd.f32 %v2350, %v2506
        %v2508 = vpop.f32.mrb[0].mxu0
        %v2509 = vpop.f32.mrb[0].mxu0
        %v2510 = vadd.f32 %v2350, %v2509
        %v2511 = vpop.f32.mrb[0].mxu0
        %2512 = vmatprep.mubr.bf16.mxu0 0
        %2513 = vmatmul.mubr.bf16.gmra.mrb[0].mxu0 %v2321
        %v2514 = vpop.f32.mrb[0].mxu0
        %v2515 = vadd.f32 %v2350, %v2514
        %v2516 = vpop.f32.mrb[0].mxu0
        %v2517 = vpop.f32.mrb[0].mxu0
        %v2518 = vadd.f32 %v2350, %v2517
        %v2519 = vpop.f32.mrb[0].mxu0
        %2520 = vmatprep.mubr.bf16.mxu0 0
        %2521 = vmatmul.mubr.bf16.gmra.mrb[0].mxu0 %v2322
        %v2522 = vpop.f32.mrb[0].mxu0
        %v2523 = vadd.f32 %v2350, %v2522
        %v2524 = vpop.f32.mrb[0].mxu0
        %v2525 = vpop.f32.mrb[0].mxu0
        %v2526 = vadd.f32 %v2350, %v2525
        %v2527 = vpop.f32.mrb[0].mxu0
        %2528 = vmatprep.mubr.bf16.mxu0 0
        %2529 = vmatmul.mubr.bf16.gmra.mrb[0].mxu0 %v2323
        %v2530 = vpop.f32.mrb[0].mxu0
        %v2531 = vadd.f32 %v2350, %v2530
        %v2532 = vpop.f32.mrb[0].mxu0
        %v2533 = vpop.f32.mrb[0].mxu0
        %v2534 = vadd.f32 %v2350, %v2533
        %v2535 = vpop.f32.mrb[0].mxu0
        %2536 = vmatprep.mubr.bf16.mxu0 0
        %2537 = vmatmul.mubr.bf16.gmra.mrb[0].mxu0 %v2324
        %v2538 = vpop.f32.mrb[0].mxu0
        %v2539 = vadd.f32 %v2350, %v2538
        %v2540 = vpop.f32.mrb[0].mxu0
        %v2541 = vpop.f32.mrb[0].mxu0
        %v2542 = vadd.f32 %v2350, %v2541
        %v2543 = vpop.f32.mrb[0].mxu0
        %2544 = vmatprep.mubr.bf16.mxu0 0
        %2545 = vmatmul.mubr.bf16.gmra.mrb[0].mxu0 %v2325
        %v2546 = vpop.f32.mrb[0].mxu0
        %v2547 = vadd.f32 %v2350, %v2546
        %v2548 = vpop.f32.mrb[0].mxu0
        %v2549 = vpop.f32.mrb[0].mxu0
        %v2550 = vadd.f32 %v2350, %v2549
        %v2551 = vpop.f32.mrb[0].mxu0
        %2552 = vmatprep.mubr.bf16.mxu0 0
        %2553 = vmatmul.mubr.bf16.gmra.mrb[0].mxu0 %v2326
        %v2554 = vpop.f32.mrb[0].mxu0
        %v2555 = vadd.f32 %v2350, %v2554
        %v2556 = vpop.f32.mrb[0].mxu0
        %v2557 = vpop.f32.mrb[0].mxu0
        %v2558 = vadd.f32 %v2350, %v2557
        %v2559 = vpop.f32.mrb[0].mxu0
        %2560 = vdwg.mxu0
        %v2561 = vmax.f32 %v2435, 0.0
        %v2562 = vmax.f32 %v2438, 0.0
        %v2563 = vmax.f32 %v2443, 0.0
        %v2564 = vmax.f32 %v2446, 0.0
        %v2565 = vmax.f32 %v2451, 0.0
        %v2566 = vmax.f32 %v2454, 0.0
        %v2567 = vmax.f32 %v2459, 0.0
        %v2568 = vmax.f32 %v2462, 0.0
        %v2569 = vmax.f32 %v2467, 0.0
        %v2570 = vmax.f32 %v2470, 0.0
        %v2571 = vmax.f32 %v2475, 0.0
        %v2572 = vmax.f32 %v2478, 0.0
        %v2573 = vmax.f32 %v2483, 0.0
        %v2574 = vmax.f32 %v2486, 0.0
        %v2575 = vmax.f32 %v2491, 0.0
        %v2576 = vmax.f32 %v2494, 0.0
        %v2577 = vmax.f32 %v2499, 0.0
        %v2578 = vmax.f32 %v2502, 0.0
        %v2579 = vmax.f32 %v2507, 0.0
        %v2580 = vmax.f32 %v2510, 0.0
        %v2581 = vmax.f32 %v2515, 0.0
        %v2582 = vmax.f32 %v2518, 0.0
        %v2583 = vmax.f32 %v2523, 0.0
        %v2584 = vmax.f32 %v2526, 0.0
        %v2585 = vmax.f32 %v2531, 0.0
        %v2586 = vmax.f32 %v2534, 0.0
        %v2587 = vmax.f32 %v2539, 0.0
        %v2588 = vmax.f32 %v2542, 0.0
        %v2589 = vmax.f32 %v2547, 0.0
        %v2590 = vmax.f32 %v2550, 0.0
        %v2591 = vmax.f32 %v2555, 0.0
        %v2592 = vmax.f32 %v2558, 0.0
        %v2593 = vadd.f32 %v2561, %v2279
        %v2594 = vadd.f32 %v2562, %v2280
        %v2595 = vadd.f32 %v2563, %v2281
        %v2596 = vadd.f32 %v2564, %v2282
        %v2597 = vadd.f32 %v2565, %v2283
        %v2598 = vadd.f32 %v2566, %v2284
        %v2599 = vadd.f32 %v2567, %v2285
        %v2600 = vadd.f32 %v2568, %v2286
        %v2601 = vadd.f32 %v2569, %v2287
        %v2602 = vadd.f32 %v2570, %v2288
        %v2603 = vadd.f32 %v2571, %v2289
        %v2604 = vadd.f32 %v2572, %v2290
        %v2605 = vadd.f32 %v2573, %v2291
        %v2606 = vadd.f32 %v2574, %v2292
        %v2607 = vadd.f32 %v2575, %v2293
        %v2608 = vadd.f32 %v2576, %v2294
        %v2609 = vadd.f32 %v2577, %v2295
        %v2610 = vadd.f32 %v2578, %v2296
        %v2611 = vadd.f32 %v2579, %v2297
        %v2612 = vadd.f32 %v2580, %v2298
        %v2613 = vadd.f32 %v2581, %v2299
        %v2614 = vadd.f32 %v2582, %v2300
        %v2615 = vadd.f32 %v2583, %v2301
        %v2616 = vadd.f32 %v2584, %v2302
        %v2617 = vadd.f32 %v2585, %v2303
        %v2618 = vadd.f32 %v2586, %v2304
        %v2619 = vadd.f32 %v2587, %v2305
        %v2620 = vadd.f32 %v2588, %v2306
        %v2621 = vadd.f32 %v2589, %v2307
        %v2622 = vadd.f32 %v2590, %v2308
        %v2623 = vadd.f32 %v2591, %v2309
        %v2624 = vadd.f32 %v2592, %v2310
        %v2625 = vpack.c.bf16 %v2594, %v2593
        %v2626 = vpack.c.bf16 %v2596, %v2595
        %v2627 = vpack.c.bf16 %v2598, %v2597
        %v2628 = vpack.c.bf16 %v2600, %v2599
        %v2629 = vpack.c.bf16 %v2602, %v2601
        %v2630 = vpack.c.bf16 %v2604, %v2603
        %v2631 = vpack.c.bf16 %v2606, %v2605
        %v2632 = vpack.c.bf16 %v2608, %v2607
        %v2633 = vpack.c.bf16 %v2610, %v2609
        %v2634 = vpack.c.bf16 %v2612, %v2611
        %v2635 = vpack.c.bf16 %v2614, %v2613
        %v2636 = vpack.c.bf16 %v2616, %v2615
        %v2637 = vpack.c.bf16 %v2618, %v2617
        %v2638 = vpack.c.bf16 %v2620, %v2619
        %v2639 = vpack.c.bf16 %v2622, %v2621
        %v2640 = vpack.c.bf16 %v2624, %v2623
        %s2641 = scalar_lea.vmem [#allocation2], 448
        %v2642 = vld [vmem:[%s2641] sm:$0xf]
        %v2643 = vld [vmem:[%s2641 + $0x4] sm:$0xf]
        %v2644 = vld [vmem:[%s2641 + $0x8] sm:$0xf]
        %v2645 = vld [vmem:[%s2641 + $0xc] sm:$0xf]
        %v2646 = vld [vmem:[%s2641 + $0x10] sm:$0xf]
        %v2647 = vld [vmem:[%s2641 + $0x14] sm:$0xf]
        %v2648 = vld [vmem:[%s2641 + $0x18] sm:$0xf]
        %v2649 = vld [vmem:[%s2641 + $0x1c] sm:$0xf]
        %v2650 = vld [vmem:[%s2641 + $0x20] sm:$0xf]
        %v2651 = vld [vmem:[%s2641 + $0x24] sm:$0xf]
        %v2652 = vld [vmem:[%s2641 + $0x28] sm:$0xf]
        %v2653 = vld [vmem:[%s2641 + $0x2c] sm:$0xf]
        %v2654 = vld [vmem:[%s2641 + $0x30] sm:$0xf]
        %v2655 = vld [vmem:[%s2641 + $0x34] sm:$0xf]
        %v2656 = vld [vmem:[%s2641 + $0x38] sm:$0xf]
        %v2657 = vld [vmem:[%s2641 + $0x3c] sm:$0xf]
        %s2658 = scalar_lea.vmem %s2, 7
        %v2659 = vld [vmem:[%s2658] sm:$0x1]
        %v2661 = vlaneseq
        %v2662 = vshrl.u32 %v2661, 7
        %v2663 = vsub.s32 0, %v2662
        %v2664 = vrot.slane %v2659, %v2663
        %v2682 = vunpack.c.l.b16 %v2642
        %v2683 = vunpack.c.l.b16 %v2643
        %v2684 = vunpack.c.l.b16 %v2644
        %v2685 = vunpack.c.l.b16 %v2645
        %v2686 = vunpack.c.l.b16 %v2646
        %v2687 = vunpack.c.l.b16 %v2647
        %v2688 = vunpack.c.l.b16 %v2648
        %v2689 = vunpack.c.l.b16 %v2649
        %v2690 = vunpack.c.l.b16 %v2650
        %v2691 = vunpack.c.l.b16 %v2651
        %v2692 = vunpack.c.l.b16 %v2652
        %v2693 = vunpack.c.l.b16 %v2653
        %v2694 = vunpack.c.l.b16 %v2654
        %v2695 = vunpack.c.l.b16 %v2655
        %v2696 = vunpack.c.l.b16 %v2656
        %v2697 = vunpack.c.l.b16 %v2657
        %v2698 = vpack.c.b16 %v2683, %v2682
        %v2699 = vpack.c.b16 %v2685, %v2684
        %v2700 = vpack.c.b16 %v2687, %v2686
        %v2701 = vpack.c.b16 %v2689, %v2688
        %v2702 = vpack.c.b16 %v2691, %v2690
        %v2703 = vpack.c.b16 %v2693, %v2692
        %v2704 = vpack.c.b16 %v2695, %v2694
        %v2705 = vpack.c.b16 %v2697, %v2696
        %2714 = vmatprep.subr.bf16.mxu0 0
        %2715 = vmatpush1.bf16.msra.mxu0 %v2698
        %2716 = vmatprep.subr.bf16.mxu0 0
        %2717 = vmatpush1.bf16.msra.mxu0 %v2699
        %2718 = vmatprep.subr.bf16.mxu0 0
        %2719 = vmatpush1.bf16.msra.mxu0 %v2700
        %2720 = vmatprep.subr.bf16.mxu0 0
        %2721 = vmatpush1.bf16.msra.mxu0 %v2701
        %2722 = vmatprep.subr.bf16.mxu0 0
        %2723 = vmatpush1.bf16.msra.mxu0 %v2702
        %2724 = vmatprep.subr.bf16.mxu0 0
        %2725 = vmatpush1.bf16.msra.mxu0 %v2703
        %2726 = vmatprep.subr.bf16.mxu0 0
        %2727 = vmatpush1.bf16.msra.mxu0 %v2704
        %2728 = vmatprep.subr.bf16.mxu0 0
        %2729 = vmatpush1.bf16.msra.mxu0 %v2705
        %2730 = vmatprep.subr.bf16.mxu0 0
        %2731 = vmatpush1.bf16.msra.mxu0 0
        %2732 = vmatprep.subr.bf16.mxu0 0
        %2733 = vmatpush1.bf16.msra.mxu0 0
        %2734 = vmatprep.subr.bf16.mxu0 0
        %2735 = vmatpush1.bf16.msra.mxu0 0
        %2736 = vmatprep.subr.bf16.mxu0 0
        %2737 = vmatpush1.bf16.msra.mxu0 0
        %2738 = vmatprep.subr.bf16.mxu0 0
        %2739 = vmatpush1.bf16.msra.mxu0 0
        %2740 = vmatprep.subr.bf16.mxu0 0
        %2741 = vmatpush1.bf16.msra.mxu0 0
        %2742 = vmatprep.subr.bf16.mxu0 0
        %2743 = vmatpush1.bf16.msra.mxu0 0
        %2744 = vmatprep.subr.bf16.mxu0 0
        %2745 = vmatpush1.bf16.msra.mxu0 0
        %2746 = vmatprep.mubr.bf16.mxu0 0
        %2747 = vmatmul.mubr.bf16.gmra.mrb[0].mxu0 %v2625
        %v2748 = vpop.f32.mrb[0].mxu0
        %v2749 = vadd.f32 %v2664, %v2748
        %v2750 = vpop.f32.mrb[0].mxu0
        %v2751 = vpop.f32.mrb[0].mxu0
        %v2752 = vadd.f32 %v2664, %v2751
        %v2753 = vpop.f32.mrb[0].mxu0
        %2754 = vmatprep.mubr.bf16.mxu0 0
        %2755 = vmatmul.mubr.bf16.gmra.mrb[0].mxu0 %v2626
        %v2756 = vpop.f32.mrb[0].mxu0
        %v2757 = vadd.f32 %v2664, %v2756
        %v2758 = vpop.f32.mrb[0].mxu0
        %v2759 = vpop.f32.mrb[0].mxu0
        %v2760 = vadd.f32 %v2664, %v2759
        %v2761 = vpop.f32.mrb[0].mxu0
        %2762 = vmatprep.mubr.bf16.mxu0 0
        %2763 = vmatmul.mubr.bf16.gmra.mrb[0].mxu0 %v2627
        %v2764 = vpop.f32.mrb[0].mxu0
        %v2765 = vadd.f32 %v2664, %v2764
        %v2766 = vpop.f32.mrb[0].mxu0
        %v2767 = vpop.f32.mrb[0].mxu0
        %v2768 = vadd.f32 %v2664, %v2767
        %v2769 = vpop.f32.mrb[0].mxu0
        %2770 = vmatprep.mubr.bf16.mxu0 0
        %2771 = vmatmul.mubr.bf16.gmra.mrb[0].mxu0 %v2628
        %v2772 = vpop.f32.mrb[0].mxu0
        %v2773 = vadd.f32 %v2664, %v2772
        %v2774 = vpop.f32.mrb[0].mxu0
        %v2775 = vpop.f32.mrb[0].mxu0
        %v2776 = vadd.f32 %v2664, %v2775
        %v2777 = vpop.f32.mrb[0].mxu0
        %2778 = vmatprep.mubr.bf16.mxu0 0
        %2779 = vmatmul.mubr.bf16.gmra.mrb[0].mxu0 %v2629
        %v2780 = vpop.f32.mrb[0].mxu0
        %v2781 = vadd.f32 %v2664, %v2780
        %v2782 = vpop.f32.mrb[0].mxu0
        %v2783 = vpop.f32.mrb[0].mxu0
        %v2784 = vadd.f32 %v2664, %v2783
        %v2785 = vpop.f32.mrb[0].mxu0
        %2786 = vmatprep.mubr.bf16.mxu0 0
        %2787 = vmatmul.mubr.bf16.gmra.mrb[0].mxu0 %v2630
        %v2788 = vpop.f32.mrb[0].mxu0
        %v2789 = vadd.f32 %v2664, %v2788
        %v2790 = vpop.f32.mrb[0].mxu0
        %v2791 = vpop.f32.mrb[0].mxu0
        %v2792 = vadd.f32 %v2664, %v2791
        %v2793 = vpop.f32.mrb[0].mxu0
        %2794 = vmatprep.mubr.bf16.mxu0 0
        %2795 = vmatmul.mubr.bf16.gmra.mrb[0].mxu0 %v2631
        %v2796 = vpop.f32.mrb[0].mxu0
        %v2797 = vadd.f32 %v2664, %v2796
        %v2798 = vpop.f32.mrb[0].mxu0
        %v2799 = vpop.f32.mrb[0].mxu0
        %v2800 = vadd.f32 %v2664, %v2799
        %v2801 = vpop.f32.mrb[0].mxu0
        %2802 = vmatprep.mubr.bf16.mxu0 0
        %2803 = vmatmul.mubr.bf16.gmra.mrb[0].mxu0 %v2632
        %v2804 = vpop.f32.mrb[0].mxu0
        %v2805 = vadd.f32 %v2664, %v2804
        %v2806 = vpop.f32.mrb[0].mxu0
        %v2807 = vpop.f32.mrb[0].mxu0
        %v2808 = vadd.f32 %v2664, %v2807
        %v2809 = vpop.f32.mrb[0].mxu0
        %2810 = vmatprep.mubr.bf16.mxu0 0
        %2811 = vmatmul.mubr.bf16.gmra.mrb[0].mxu0 %v2633
        %v2812 = vpop.f32.mrb[0].mxu0
        %v2813 = vadd.f32 %v2664, %v2812
        %v2814 = vpop.f32.mrb[0].mxu0
        %v2815 = vpop.f32.mrb[0].mxu0
        %v2816 = vadd.f32 %v2664, %v2815
        %v2817 = vpop.f32.mrb[0].mxu0
        %2818 = vmatprep.mubr.bf16.mxu0 0
        %2819 = vmatmul.mubr.bf16.gmra.mrb[0].mxu0 %v2634
        %v2820 = vpop.f32.mrb[0].mxu0
        %v2821 = vadd.f32 %v2664, %v2820
        %v2822 = vpop.f32.mrb[0].mxu0
        %v2823 = vpop.f32.mrb[0].mxu0
        %v2824 = vadd.f32 %v2664, %v2823
        %v2825 = vpop.f32.mrb[0].mxu0
        %2826 = vmatprep.mubr.bf16.mxu0 0
        %2827 = vmatmul.mubr.bf16.gmra.mrb[0].mxu0 %v2635
        %v2828 = vpop.f32.mrb[0].mxu0
        %v2829 = vadd.f32 %v2664, %v2828
        %v2830 = vpop.f32.mrb[0].mxu0
        %v2831 = vpop.f32.mrb[0].mxu0
        %v2832 = vadd.f32 %v2664, %v2831
        %v2833 = vpop.f32.mrb[0].mxu0
        %2834 = vmatprep.mubr.bf16.mxu0 0
        %2835 = vmatmul.mubr.bf16.gmra.mrb[0].mxu0 %v2636
        %v2836 = vpop.f32.mrb[0].mxu0
        %v2837 = vadd.f32 %v2664, %v2836
        %v2838 = vpop.f32.mrb[0].mxu0
        %v2839 = vpop.f32.mrb[0].mxu0
        %v2840 = vadd.f32 %v2664, %v2839
        %v2841 = vpop.f32.mrb[0].mxu0
        %2842 = vmatprep.mubr.bf16.mxu0 0
        %2843 = vmatmul.mubr.bf16.gmra.mrb[0].mxu0 %v2637
        %v2844 = vpop.f32.mrb[0].mxu0
        %v2845 = vadd.f32 %v2664, %v2844
        %v2846 = vpop.f32.mrb[0].mxu0
        %v2847 = vpop.f32.mrb[0].mxu0
        %v2848 = vadd.f32 %v2664, %v2847
        %v2849 = vpop.f32.mrb[0].mxu0
        %2850 = vmatprep.mubr.bf16.mxu0 0
        %2851 = vmatmul.mubr.bf16.gmra.mrb[0].mxu0 %v2638
        %v2852 = vpop.f32.mrb[0].mxu0
        %v2853 = vadd.f32 %v2664, %v2852
        %v2854 = vpop.f32.mrb[0].mxu0
        %v2855 = vpop.f32.mrb[0].mxu0
        %v2856 = vadd.f32 %v2664, %v2855
        %v2857 = vpop.f32.mrb[0].mxu0
        %2858 = vmatprep.mubr.bf16.mxu0 0
        %2859 = vmatmul.mubr.bf16.gmra.mrb[0].mxu0 %v2639
        %v2860 = vpop.f32.mrb[0].mxu0
        %v2861 = vadd.f32 %v2664, %v2860
        %v2862 = vpop.f32.mrb[0].mxu0
        %v2863 = vpop.f32.mrb[0].mxu0
        %v2864 = vadd.f32 %v2664, %v2863
        %v2865 = vpop.f32.mrb[0].mxu0
        %2866 = vmatprep.mubr.bf16.mxu0 0
        %2867 = vmatmul.mubr.bf16.gmra.mrb[0].mxu0 %v2640
        %v2868 = vpop.f32.mrb[0].mxu0
        %v2869 = vadd.f32 %v2664, %v2868
        %v2870 = vpop.f32.mrb[0].mxu0
        %v2871 = vpop.f32.mrb[0].mxu0
        %v2872 = vadd.f32 %v2664, %v2871
        %v2873 = vpop.f32.mrb[0].mxu0
        %2874 = vdwg.mxu0
        %v2875 = vmax.f32 %v2749, 0.0
        %v2876 = vmax.f32 %v2752, 0.0
        %v2877 = vmax.f32 %v2757, 0.0
        %v2878 = vmax.f32 %v2760, 0.0
        %v2879 = vmax.f32 %v2765, 0.0
        %v2880 = vmax.f32 %v2768, 0.0
        %v2881 = vmax.f32 %v2773, 0.0
        %v2882 = vmax.f32 %v2776, 0.0
        %v2883 = vmax.f32 %v2781, 0.0
        %v2884 = vmax.f32 %v2784, 0.0
        %v2885 = vmax.f32 %v2789, 0.0
        %v2886 = vmax.f32 %v2792, 0.0
        %v2887 = vmax.f32 %v2797, 0.0
        %v2888 = vmax.f32 %v2800, 0.0
        %v2889 = vmax.f32 %v2805, 0.0
        %v2890 = vmax.f32 %v2808, 0.0
        %v2891 = vmax.f32 %v2813, 0.0
        %v2892 = vmax.f32 %v2816, 0.0
        %v2893 = vmax.f32 %v2821, 0.0
        %v2894 = vmax.f32 %v2824, 0.0
        %v2895 = vmax.f32 %v2829, 0.0
        %v2896 = vmax.f32 %v2832, 0.0
        %v2897 = vmax.f32 %v2837, 0.0
        %v2898 = vmax.f32 %v2840, 0.0
        %v2899 = vmax.f32 %v2845, 0.0
        %v2900 = vmax.f32 %v2848, 0.0
        %v2901 = vmax.f32 %v2853, 0.0
        %v2902 = vmax.f32 %v2856, 0.0
        %v2903 = vmax.f32 %v2861, 0.0
        %v2904 = vmax.f32 %v2864, 0.0
        %v2905 = vmax.f32 %v2869, 0.0
        %v2906 = vmax.f32 %v2872, 0.0
        %v2907 = vpack.c.bf16 %v2876, %v2875
        %v2908 = vpack.c.bf16 %v2878, %v2877
        %v2909 = vpack.c.bf16 %v2880, %v2879
        %v2910 = vpack.c.bf16 %v2882, %v2881
        %v2911 = vpack.c.bf16 %v2884, %v2883
        %v2912 = vpack.c.bf16 %v2886, %v2885
        %v2913 = vpack.c.bf16 %v2888, %v2887
        %v2914 = vpack.c.bf16 %v2890, %v2889
        %v2915 = vpack.c.bf16 %v2892, %v2891
        %v2916 = vpack.c.bf16 %v2894, %v2893
        %v2917 = vpack.c.bf16 %v2896, %v2895
        %v2918 = vpack.c.bf16 %v2898, %v2897
        %v2919 = vpack.c.bf16 %v2900, %v2899
        %v2920 = vpack.c.bf16 %v2902, %v2901
        %v2921 = vpack.c.bf16 %v2904, %v2903
        %v2922 = vpack.c.bf16 %v2906, %v2905
        %s2923 = scalar_lea.vmem [#allocation2], 512
        %v2924 = vld [vmem:[%s2923] sm:$0xf]
        %v2925 = vld [vmem:[%s2923 + $0x4] sm:$0xf]
        %v2926 = vld [vmem:[%s2923 + $0x8] sm:$0xf]
        %v2927 = vld [vmem:[%s2923 + $0xc] sm:$0xf]
        %v2928 = vld [vmem:[%s2923 + $0x10] sm:$0xf]
        %v2929 = vld [vmem:[%s2923 + $0x14] sm:$0xf]
        %v2930 = vld [vmem:[%s2923 + $0x18] sm:$0xf]
        %v2931 = vld [vmem:[%s2923 + $0x1c] sm:$0xf]
        %v2932 = vld [vmem:[%s2923 + $0x20] sm:$0xf]
        %v2933 = vld [vmem:[%s2923 + $0x24] sm:$0xf]
        %v2934 = vld [vmem:[%s2923 + $0x28] sm:$0xf]
        %v2935 = vld [vmem:[%s2923 + $0x2c] sm:$0xf]
        %v2936 = vld [vmem:[%s2923 + $0x30] sm:$0xf]
        %v2937 = vld [vmem:[%s2923 + $0x34] sm:$0xf]
        %v2938 = vld [vmem:[%s2923 + $0x38] sm:$0xf]
        %v2939 = vld [vmem:[%s2923 + $0x3c] sm:$0xf]
        %s2940 = scalar_lea.vmem %s2, 8
        %v2941 = vld [vmem:[%s2940] sm:$0x1]
        %v2943 = vlaneseq
        %v2944 = vshrl.u32 %v2943, 7
        %v2945 = vsub.s32 0, %v2944
        %v2946 = vrot.slane %v2941, %v2945
        %v2964 = vunpack.c.l.b16 %v2924
        %v2965 = vunpack.c.l.b16 %v2925
        %v2966 = vunpack.c.l.b16 %v2926
        %v2967 = vunpack.c.l.b16 %v2927
        %v2968 = vunpack.c.l.b16 %v2928
        %v2969 = vunpack.c.l.b16 %v2929
        %v2970 = vunpack.c.l.b16 %v2930
        %v2971 = vunpack.c.l.b16 %v2931
        %v2972 = vunpack.c.l.b16 %v2932
        %v2973 = vunpack.c.l.b16 %v2933
        %v2974 = vunpack.c.l.b16 %v2934
        %v2975 = vunpack.c.l.b16 %v2935
        %v2976 = vunpack.c.l.b16 %v2936
        %v2977 = vunpack.c.l.b16 %v2937
        %v2978 = vunpack.c.l.b16 %v2938
        %v2979 = vunpack.c.l.b16 %v2939
        %v2980 = vpack.c.b16 %v2965, %v2964
        %v2981 = vpack.c.b16 %v2967, %v2966
        %v2982 = vpack.c.b16 %v2969, %v2968
        %v2983 = vpack.c.b16 %v2971, %v2970
        %v2984 = vpack.c.b16 %v2973, %v2972
        %v2985 = vpack.c.b16 %v2975, %v2974
        %v2986 = vpack.c.b16 %v2977, %v2976
        %v2987 = vpack.c.b16 %v2979, %v2978
        %2996 = vmatprep.subr.bf16.mxu0 0
        %2997 = vmatpush1.bf16.msra.mxu0 %v2980
        %2998 = vmatprep.subr.bf16.mxu0 0
        %2999 = vmatpush1.bf16.msra.mxu0 %v2981
        %3000 = vmatprep.subr.bf16.mxu0 0
        %3001 = vmatpush1.bf16.msra.mxu0 %v2982
        %3002 = vmatprep.subr.bf16.mxu0 0
        %3003 = vmatpush1.bf16.msra.mxu0 %v2983
        %3004 = vmatprep.subr.bf16.mxu0 0
        %3005 = vmatpush1.bf16.msra.mxu0 %v2984
        %3006 = vmatprep.subr.bf16.mxu0 0
        %3007 = vmatpush1.bf16.msra.mxu0 %v2985
        %3008 = vmatprep.subr.bf16.mxu0 0
        %3009 = vmatpush1.bf16.msra.mxu0 %v2986
        %3010 = vmatprep.subr.bf16.mxu0 0
        %3011 = vmatpush1.bf16.msra.mxu0 %v2987
        %3012 = vmatprep.subr.bf16.mxu0 0
        %3013 = vmatpush1.bf16.msra.mxu0 0
        %3014 = vmatprep.subr.bf16.mxu0 0
        %3015 = vmatpush1.bf16.msra.mxu0 0
        %3016 = vmatprep.subr.bf16.mxu0 0
        %3017 = vmatpush1.bf16.msra.mxu0 0
        %3018 = vmatprep.subr.bf16.mxu0 0
        %3019 = vmatpush1.bf16.msra.mxu0 0
        %3020 = vmatprep.subr.bf16.mxu0 0
        %3021 = vmatpush1.bf16.msra.mxu0 0
        %3022 = vmatprep.subr.bf16.mxu0 0
        %3023 = vmatpush1.bf16.msra.mxu0 0
        %3024 = vmatprep.subr.bf16.mxu0 0
        %3025 = vmatpush1.bf16.msra.mxu0 0
        %3026 = vmatprep.subr.bf16.mxu0 0
        %3027 = vmatpush1.bf16.msra.mxu0 0
        %3028 = vmatprep.mubr.bf16.mxu0 0
        %3029 = vmatmul.mubr.bf16.gmra.mrb[0].mxu0 %v2907
        %v3030 = vpop.f32.mrb[0].mxu0
        %v3031 = vadd.f32 %v2946, %v3030
        %v3032 = vpop.f32.mrb[0].mxu0
        %v3033 = vpop.f32.mrb[0].mxu0
        %v3034 = vadd.f32 %v2946, %v3033
        %v3035 = vpop.f32.mrb[0].mxu0
        %3036 = vmatprep.mubr.bf16.mxu0 0
        %3037 = vmatmul.mubr.bf16.gmra.mrb[0].mxu0 %v2908
        %v3038 = vpop.f32.mrb[0].mxu0
        %v3039 = vadd.f32 %v2946, %v3038
        %v3040 = vpop.f32.mrb[0].mxu0
        %v3041 = vpop.f32.mrb[0].mxu0
        %v3042 = vadd.f32 %v2946, %v3041
        %v3043 = vpop.f32.mrb[0].mxu0
        %3044 = vmatprep.mubr.bf16.mxu0 0
        %3045 = vmatmul.mubr.bf16.gmra.mrb[0].mxu0 %v2909
        %v3046 = vpop.f32.mrb[0].mxu0
        %v3047 = vadd.f32 %v2946, %v3046
        %v3048 = vpop.f32.mrb[0].mxu0
        %v3049 = vpop.f32.mrb[0].mxu0
        %v3050 = vadd.f32 %v2946, %v3049
        %v3051 = vpop.f32.mrb[0].mxu0
        %3052 = vmatprep.mubr.bf16.mxu0 0
        %3053 = vmatmul.mubr.bf16.gmra.mrb[0].mxu0 %v2910
        %v3054 = vpop.f32.mrb[0].mxu0
        %v3055 = vadd.f32 %v2946, %v3054
        %v3056 = vpop.f32.mrb[0].mxu0
        %v3057 = vpop.f32.mrb[0].mxu0
        %v3058 = vadd.f32 %v2946, %v3057
        %v3059 = vpop.f32.mrb[0].mxu0
        %3060 = vmatprep.mubr.bf16.mxu0 0
        %3061 = vmatmul.mubr.bf16.gmra.mrb[0].mxu0 %v2911
        %v3062 = vpop.f32.mrb[0].mxu0
        %v3063 = vadd.f32 %v2946, %v3062
        %v3064 = vpop.f32.mrb[0].mxu0
        %v3065 = vpop.f32.mrb[0].mxu0
        %v3066 = vadd.f32 %v2946, %v3065
        %v3067 = vpop.f32.mrb[0].mxu0
        %3068 = vmatprep.mubr.bf16.mxu0 0
        %3069 = vmatmul.mubr.bf16.gmra.mrb[0].mxu0 %v2912
        %v3070 = vpop.f32.mrb[0].mxu0
        %v3071 = vadd.f32 %v2946, %v3070
        %v3072 = vpop.f32.mrb[0].mxu0
        %v3073 = vpop.f32.mrb[0].mxu0
        %v3074 = vadd.f32 %v2946, %v3073
        %v3075 = vpop.f32.mrb[0].mxu0
        %3076 = vmatprep.mubr.bf16.mxu0 0
        %3077 = vmatmul.mubr.bf16.gmra.mrb[0].mxu0 %v2913
        %v3078 = vpop.f32.mrb[0].mxu0
        %v3079 = vadd.f32 %v2946, %v3078
        %v3080 = vpop.f32.mrb[0].mxu0
        %v3081 = vpop.f32.mrb[0].mxu0
        %v3082 = vadd.f32 %v2946, %v3081
        %v3083 = vpop.f32.mrb[0].mxu0
        %3084 = vmatprep.mubr.bf16.mxu0 0
        %3085 = vmatmul.mubr.bf16.gmra.mrb[0].mxu0 %v2914
        %v3086 = vpop.f32.mrb[0].mxu0
        %v3087 = vadd.f32 %v2946, %v3086
        %v3088 = vpop.f32.mrb[0].mxu0
        %v3089 = vpop.f32.mrb[0].mxu0
        %v3090 = vadd.f32 %v2946, %v3089
        %v3091 = vpop.f32.mrb[0].mxu0
        %3092 = vmatprep.mubr.bf16.mxu0 0
        %3093 = vmatmul.mubr.bf16.gmra.mrb[0].mxu0 %v2915
        %v3094 = vpop.f32.mrb[0].mxu0
        %v3095 = vadd.f32 %v2946, %v3094
        %v3096 = vpop.f32.mrb[0].mxu0
        %v3097 = vpop.f32.mrb[0].mxu0
        %v3098 = vadd.f32 %v2946, %v3097
        %v3099 = vpop.f32.mrb[0].mxu0
        %3100 = vmatprep.mubr.bf16.mxu0 0
        %3101 = vmatmul.mubr.bf16.gmra.mrb[0].mxu0 %v2916
        %v3102 = vpop.f32.mrb[0].mxu0
        %v3103 = vadd.f32 %v2946, %v3102
        %v3104 = vpop.f32.mrb[0].mxu0
        %v3105 = vpop.f32.mrb[0].mxu0
        %v3106 = vadd.f32 %v2946, %v3105
        %v3107 = vpop.f32.mrb[0].mxu0
        %3108 = vmatprep.mubr.bf16.mxu0 0
        %3109 = vmatmul.mubr.bf16.gmra.mrb[0].mxu0 %v2917
        %v3110 = vpop.f32.mrb[0].mxu0
        %v3111 = vadd.f32 %v2946, %v3110
        %v3112 = vpop.f32.mrb[0].mxu0
        %v3113 = vpop.f32.mrb[0].mxu0
        %v3114 = vadd.f32 %v2946, %v3113
        %v3115 = vpop.f32.mrb[0].mxu0
        %3116 = vmatprep.mubr.bf16.mxu0 0
        %3117 = vmatmul.mubr.bf16.gmra.mrb[0].mxu0 %v2918
        %v3118 = vpop.f32.mrb[0].mxu0
        %v3119 = vadd.f32 %v2946, %v3118
        %v3120 = vpop.f32.mrb[0].mxu0
        %v3121 = vpop.f32.mrb[0].mxu0
        %v3122 = vadd.f32 %v2946, %v3121
        %v3123 = vpop.f32.mrb[0].mxu0
        %3124 = vmatprep.mubr.bf16.mxu0 0
        %3125 = vmatmul.mubr.bf16.gmra.mrb[0].mxu0 %v2919
        %v3126 = vpop.f32.mrb[0].mxu0
        %v3127 = vadd.f32 %v2946, %v3126
        %v3128 = vpop.f32.mrb[0].mxu0
        %v3129 = vpop.f32.mrb[0].mxu0
        %v3130 = vadd.f32 %v2946, %v3129
        %v3131 = vpop.f32.mrb[0].mxu0
        %3132 = vmatprep.mubr.bf16.mxu0 0
        %3133 = vmatmul.mubr.bf16.gmra.mrb[0].mxu0 %v2920
        %v3134 = vpop.f32.mrb[0].mxu0
        %v3135 = vadd.f32 %v2946, %v3134
        %v3136 = vpop.f32.mrb[0].mxu0
        %v3137 = vpop.f32.mrb[0].mxu0
        %v3138 = vadd.f32 %v2946, %v3137
        %v3139 = vpop.f32.mrb[0].mxu0
        %3140 = vmatprep.mubr.bf16.mxu0 0
        %3141 = vmatmul.mubr.bf16.gmra.mrb[0].mxu0 %v2921
        %v3142 = vpop.f32.mrb[0].mxu0
        %v3143 = vadd.f32 %v2946, %v3142
        %v3144 = vpop.f32.mrb[0].mxu0
        %v3145 = vpop.f32.mrb[0].mxu0
        %v3146 = vadd.f32 %v2946, %v3145
        %v3147 = vpop.f32.mrb[0].mxu0
        %3148 = vmatprep.mubr.bf16.mxu0 0
        %3149 = vmatmul.mubr.bf16.gmra.mrb[0].mxu0 %v2922
        %v3150 = vpop.f32.mrb[0].mxu0
        %v3151 = vadd.f32 %v2946, %v3150
        %v3152 = vpop.f32.mrb[0].mxu0
        %v3153 = vpop.f32.mrb[0].mxu0
        %v3154 = vadd.f32 %v2946, %v3153
        %v3155 = vpop.f32.mrb[0].mxu0
        %3156 = vdwg.mxu0
        %v3157 = vmax.f32 %v3031, 0.0
        %v3158 = vmax.f32 %v3034, 0.0
        %v3159 = vmax.f32 %v3039, 0.0
        %v3160 = vmax.f32 %v3042, 0.0
        %v3161 = vmax.f32 %v3047, 0.0
        %v3162 = vmax.f32 %v3050, 0.0
        %v3163 = vmax.f32 %v3055, 0.0
        %v3164 = vmax.f32 %v3058, 0.0
        %v3165 = vmax.f32 %v3063, 0.0
        %v3166 = vmax.f32 %v3066, 0.0
        %v3167 = vmax.f32 %v3071, 0.0
        %v3168 = vmax.f32 %v3074, 0.0
        %v3169 = vmax.f32 %v3079, 0.0
        %v3170 = vmax.f32 %v3082, 0.0
        %v3171 = vmax.f32 %v3087, 0.0
        %v3172 = vmax.f32 %v3090, 0.0
        %v3173 = vmax.f32 %v3095, 0.0
        %v3174 = vmax.f32 %v3098, 0.0
        %v3175 = vmax.f32 %v3103, 0.0
        %v3176 = vmax.f32 %v3106, 0.0
        %v3177 = vmax.f32 %v3111, 0.0
        %v3178 = vmax.f32 %v3114, 0.0
        %v3179 = vmax.f32 %v3119, 0.0
        %v3180 = vmax.f32 %v3122, 0.0
        %v3181 = vmax.f32 %v3127, 0.0
        %v3182 = vmax.f32 %v3130, 0.0
        %v3183 = vmax.f32 %v3135, 0.0
        %v3184 = vmax.f32 %v3138, 0.0
        %v3185 = vmax.f32 %v3143, 0.0
        %v3186 = vmax.f32 %v3146, 0.0
        %v3187 = vmax.f32 %v3151, 0.0
        %v3188 = vmax.f32 %v3154, 0.0
        %v3189 = vadd.f32 %v3157, %v1523
        %v3190 = vadd.f32 %v3158, %v1524
        %v3191 = vadd.f32 %v3159, %v1525
        %v3192 = vadd.f32 %v3160, %v1526
        %v3193 = vadd.f32 %v3161, %v1527
        %v3194 = vadd.f32 %v3162, %v1528
        %v3195 = vadd.f32 %v3163, %v1529
        %v3196 = vadd.f32 %v3164, %v1530
        %v3197 = vadd.f32 %v3165, %v1531
        %v3198 = vadd.f32 %v3166, %v1532
        %v3199 = vadd.f32 %v3167, %v1533
        %v3200 = vadd.f32 %v3168, %v1534
        %v3201 = vadd.f32 %v3169, %v1535
        %v3202 = vadd.f32 %v3170, %v1536
        %v3203 = vadd.f32 %v3171, %v1537
        %v3204 = vadd.f32 %v3172, %v1538
        %v3205 = vadd.f32 %v3173, %v1539
        %v3206 = vadd.f32 %v3174, %v1540
        %v3207 = vadd.f32 %v3175, %v1541
        %v3208 = vadd.f32 %v3176, %v1542
        %v3209 = vadd.f32 %v3177, %v1543
        %v3210 = vadd.f32 %v3178, %v1544
        %v3211 = vadd.f32 %v3179, %v1545
        %v3212 = vadd.f32 %v3180, %v1546
        %v3213 = vadd.f32 %v3181, %v1547
        %v3214 = vadd.f32 %v3182, %v1548
        %v3215 = vadd.f32 %v3183, %v1549
        %v3216 = vadd.f32 %v3184, %v1550
        %v3217 = vadd.f32 %v3185, %v1551
        %v3218 = vadd.f32 %v3186, %v1552
        %v3219 = vadd.f32 %v3187, %v1553
        %v3220 = vadd.f32 %v3188, %v1554
        %v3221 = vpack.c.bf16 %v3190, %v3189
        %v3222 = vpack.c.bf16 %v3192, %v3191
        %v3223 = vpack.c.bf16 %v3194, %v3193
        %v3224 = vpack.c.bf16 %v3196, %v3195
        %v3225 = vpack.c.bf16 %v3198, %v3197
        %v3226 = vpack.c.bf16 %v3200, %v3199
        %v3227 = vpack.c.bf16 %v3202, %v3201
        %v3228 = vpack.c.bf16 %v3204, %v3203
        %v3229 = vpack.c.bf16 %v3206, %v3205
        %v3230 = vpack.c.bf16 %v3208, %v3207
        %v3231 = vpack.c.bf16 %v3210, %v3209
        %v3232 = vpack.c.bf16 %v3212, %v3211
        %v3233 = vpack.c.bf16 %v3214, %v3213
        %v3234 = vpack.c.bf16 %v3216, %v3215
        %v3235 = vpack.c.bf16 %v3218, %v3217
        %v3236 = vpack.c.bf16 %v3220, %v3219
        %s3237 = scalar_lea.vmem [#allocation2], 576
        %v3238 = vld [vmem:[%s3237] sm:$0xf]
        %v3239 = vld [vmem:[%s3237 + $0x4] sm:$0xf]
        %v3240 = vld [vmem:[%s3237 + $0x8] sm:$0xf]
        %v3241 = vld [vmem:[%s3237 + $0xc] sm:$0xf]
        %v3242 = vld [vmem:[%s3237 + $0x10] sm:$0xf]
        %v3243 = vld [vmem:[%s3237 + $0x14] sm:$0xf]
        %v3244 = vld [vmem:[%s3237 + $0x18] sm:$0xf]
        %v3245 = vld [vmem:[%s3237 + $0x1c] sm:$0xf]
        %v3246 = vld [vmem:[%s3237 + $0x20] sm:$0xf]
        %v3247 = vld [vmem:[%s3237 + $0x24] sm:$0xf]
        %v3248 = vld [vmem:[%s3237 + $0x28] sm:$0xf]
        %v3249 = vld [vmem:[%s3237 + $0x2c] sm:$0xf]
        %v3250 = vld [vmem:[%s3237 + $0x30] sm:$0xf]
        %v3251 = vld [vmem:[%s3237 + $0x34] sm:$0xf]
        %v3252 = vld [vmem:[%s3237 + $0x38] sm:$0xf]
        %v3253 = vld [vmem:[%s3237 + $0x3c] sm:$0xf]
        %s3254 = scalar_lea.vmem %s2, 9
        %v3255 = vld [vmem:[%s3254] sm:$0x1]
        %v3257 = vlaneseq
        %v3258 = vshrl.u32 %v3257, 7
        %v3259 = vsub.s32 0, %v3258
        %v3260 = vrot.slane %v3255, %v3259
        %v3278 = vunpack.c.l.b16 %v3238
        %v3279 = vunpack.c.l.b16 %v3239
        %v3280 = vunpack.c.l.b16 %v3240
        %v3281 = vunpack.c.l.b16 %v3241
        %v3282 = vunpack.c.l.b16 %v3242
        %v3283 = vunpack.c.l.b16 %v3243
        %v3284 = vunpack.c.l.b16 %v3244
        %v3285 = vunpack.c.l.b16 %v3245
        %v3286 = vunpack.c.l.b16 %v3246
        %v3287 = vunpack.c.l.b16 %v3247
        %v3288 = vunpack.c.l.b16 %v3248
        %v3289 = vunpack.c.l.b16 %v3249
        %v3290 = vunpack.c.l.b16 %v3250
        %v3291 = vunpack.c.l.b16 %v3251
        %v3292 = vunpack.c.l.b16 %v3252
        %v3293 = vunpack.c.l.b16 %v3253
        %v3294 = vpack.c.b16 %v3279, %v3278
        %v3295 = vpack.c.b16 %v3281, %v3280
        %v3296 = vpack.c.b16 %v3283, %v3282
        %v3297 = vpack.c.b16 %v3285, %v3284
        %v3298 = vpack.c.b16 %v3287, %v3286
        %v3299 = vpack.c.b16 %v3289, %v3288
        %v3300 = vpack.c.b16 %v3291, %v3290
        %v3301 = vpack.c.b16 %v3293, %v3292
        %3310 = vmatprep.subr.bf16.mxu0 0
        %3311 = vmatpush1.bf16.msra.mxu0 %v3294
        %3312 = vmatprep.subr.bf16.mxu0 0
        %3313 = vmatpush1.bf16.msra.mxu0 %v3295
        %3314 = vmatprep.subr.bf16.mxu0 0
        %3315 = vmatpush1.bf16.msra.mxu0 %v3296
        %3316 = vmatprep.subr.bf16.mxu0 0
        %3317 = vmatpush1.bf16.msra.mxu0 %v3297
        %3318 = vmatprep.subr.bf16.mxu0 0
        %3319 = vmatpush1.bf16.msra.mxu0 %v3298
        %3320 = vmatprep.subr.bf16.mxu0 0
        %3321 = vmatpush1.bf16.msra.mxu0 %v3299
        %3322 = vmatprep.subr.bf16.mxu0 0
        %3323 = vmatpush1.bf16.msra.mxu0 %v3300
        %3324 = vmatprep.subr.bf16.mxu0 0
        %3325 = vmatpush1.bf16.msra.mxu0 %v3301
        %3326 = vmatprep.subr.bf16.mxu0 0
        %3327 = vmatpush1.bf16.msra.mxu0 0
        %3328 = vmatprep.subr.bf16.mxu0 0
        %3329 = vmatpush1.bf16.msra.mxu0 0
        %3330 = vmatprep.subr.bf16.mxu0 0
        %3331 = vmatpush1.bf16.msra.mxu0 0
        %3332 = vmatprep.subr.bf16.mxu0 0
        %3333 = vmatpush1.bf16.msra.mxu0 0
        %3334 = vmatprep.subr.bf16.mxu0 0
        %3335 = vmatpush1.bf16.msra.mxu0 0
        %3336 = vmatprep.subr.bf16.mxu0 0
        %3337 = vmatpush1.bf16.msra.mxu0 0
        %3338 = vmatprep.subr.bf16.mxu0 0
        %3339 = vmatpush1.bf16.msra.mxu0 0
        %3340 = vmatprep.subr.bf16.mxu0 0
        %3341 = vmatpush1.bf16.msra.mxu0 0
        %3342 = vmatprep.mubr.bf16.mxu0 0
        %3343 = vmatmul.mubr.bf16.gmra.mrb[0].mxu0 %v3221
        %v3344 = vpop.f32.mrb[0].mxu0
        %v3345 = vadd.f32 %v3260, %v3344
        %v3346 = vpop.f32.mrb[0].mxu0
        %v3347 = vpop.f32.mrb[0].mxu0
        %v3348 = vadd.f32 %v3260, %v3347
        %v3349 = vpop.f32.mrb[0].mxu0
        %3350 = vmatprep.mubr.bf16.mxu0 0
        %3351 = vmatmul.mubr.bf16.gmra.mrb[0].mxu0 %v3222
        %v3352 = vpop.f32.mrb[0].mxu0
        %v3353 = vadd.f32 %v3260, %v3352
        %v3354 = vpop.f32.mrb[0].mxu0
        %v3355 = vpop.f32.mrb[0].mxu0
        %v3356 = vadd.f32 %v3260, %v3355
        %v3357 = vpop.f32.mrb[0].mxu0
        %3358 = vmatprep.mubr.bf16.mxu0 0
        %3359 = vmatmul.mubr.bf16.gmra.mrb[0].mxu0 %v3223
        %v3360 = vpop.f32.mrb[0].mxu0
        %v3361 = vadd.f32 %v3260, %v3360
        %v3362 = vpop.f32.mrb[0].mxu0
        %v3363 = vpop.f32.mrb[0].mxu0
        %v3364 = vadd.f32 %v3260, %v3363
        %v3365 = vpop.f32.mrb[0].mxu0
        %3366 = vmatprep.mubr.bf16.mxu0 0
        %3367 = vmatmul.mubr.bf16.gmra.mrb[0].mxu0 %v3224
        %v3368 = vpop.f32.mrb[0].mxu0
        %v3369 = vadd.f32 %v3260, %v3368
        %v3370 = vpop.f32.mrb[0].mxu0
        %v3371 = vpop.f32.mrb[0].mxu0
        %v3372 = vadd.f32 %v3260, %v3371
        %v3373 = vpop.f32.mrb[0].mxu0
        %3374 = vmatprep.mubr.bf16.mxu0 0
        %3375 = vmatmul.mubr.bf16.gmra.mrb[0].mxu0 %v3225
        %v3376 = vpop.f32.mrb[0].mxu0
        %v3377 = vadd.f32 %v3260, %v3376
        %v3378 = vpop.f32.mrb[0].mxu0
        %v3379 = vpop.f32.mrb[0].mxu0
        %v3380 = vadd.f32 %v3260, %v3379
        %v3381 = vpop.f32.mrb[0].mxu0
        %3382 = vmatprep.mubr.bf16.mxu0 0
        %3383 = vmatmul.mubr.bf16.gmra.mrb[0].mxu0 %v3226
        %v3384 = vpop.f32.mrb[0].mxu0
        %v3385 = vadd.f32 %v3260, %v3384
        %v3386 = vpop.f32.mrb[0].mxu0
        %v3387 = vpop.f32.mrb[0].mxu0
        %v3388 = vadd.f32 %v3260, %v3387
        %v3389 = vpop.f32.mrb[0].mxu0
        %3390 = vmatprep.mubr.bf16.mxu0 0
        %3391 = vmatmul.mubr.bf16.gmra.mrb[0].mxu0 %v3227
        %v3392 = vpop.f32.mrb[0].mxu0
        %v3393 = vadd.f32 %v3260, %v3392
        %v3394 = vpop.f32.mrb[0].mxu0
        %v3395 = vpop.f32.mrb[0].mxu0
        %v3396 = vadd.f32 %v3260, %v3395
        %v3397 = vpop.f32.mrb[0].mxu0
        %3398 = vmatprep.mubr.bf16.mxu0 0
        %3399 = vmatmul.mubr.bf16.gmra.mrb[0].mxu0 %v3228
        %v3400 = vpop.f32.mrb[0].mxu0
        %v3401 = vadd.f32 %v3260, %v3400
        %v3402 = vpop.f32.mrb[0].mxu0
        %v3403 = vpop.f32.mrb[0].mxu0
        %v3404 = vadd.f32 %v3260, %v3403
        %v3405 = vpop.f32.mrb[0].mxu0
        %3406 = vmatprep.mubr.bf16.mxu0 0
        %3407 = vmatmul.mubr.bf16.gmra.mrb[0].mxu0 %v3229
        %v3408 = vpop.f32.mrb[0].mxu0
        %v3409 = vadd.f32 %v3260, %v3408
        %v3410 = vpop.f32.mrb[0].mxu0
        %v3411 = vpop.f32.mrb[0].mxu0
        %v3412 = vadd.f32 %v3260, %v3411
        %v3413 = vpop.f32.mrb[0].mxu0
        %3414 = vmatprep.mubr.bf16.mxu0 0
        %3415 = vmatmul.mubr.bf16.gmra.mrb[0].mxu0 %v3230
        %v3416 = vpop.f32.mrb[0].mxu0
        %v3417 = vadd.f32 %v3260, %v3416
        %v3418 = vpop.f32.mrb[0].mxu0
        %v3419 = vpop.f32.mrb[0].mxu0
        %v3420 = vadd.f32 %v3260, %v3419
        %v3421 = vpop.f32.mrb[0].mxu0
        %3422 = vmatprep.mubr.bf16.mxu0 0
        %3423 = vmatmul.mubr.bf16.gmra.mrb[0].mxu0 %v3231
        %v3424 = vpop.f32.mrb[0].mxu0
        %v3425 = vadd.f32 %v3260, %v3424
        %v3426 = vpop.f32.mrb[0].mxu0
        %v3427 = vpop.f32.mrb[0].mxu0
        %v3428 = vadd.f32 %v3260, %v3427
        %v3429 = vpop.f32.mrb[0].mxu0
        %3430 = vmatprep.mubr.bf16.mxu0 0
        %3431 = vmatmul.mubr.bf16.gmra.mrb[0].mxu0 %v3232
        %v3432 = vpop.f32.mrb[0].mxu0
        %v3433 = vadd.f32 %v3260, %v3432
        %v3434 = vpop.f32.mrb[0].mxu0
        %v3435 = vpop.f32.mrb[0].mxu0
        %v3436 = vadd.f32 %v3260, %v3435
        %v3437 = vpop.f32.mrb[0].mxu0
        %3438 = vmatprep.mubr.bf16.mxu0 0
        %3439 = vmatmul.mubr.bf16.gmra.mrb[0].mxu0 %v3233
        %v3440 = vpop.f32.mrb[0].mxu0
        %v3441 = vadd.f32 %v3260, %v3440
        %v3442 = vpop.f32.mrb[0].mxu0
        %v3443 = vpop.f32.mrb[0].mxu0
        %v3444 = vadd.f32 %v3260, %v3443
        %v3445 = vpop.f32.mrb[0].mxu0
        %3446 = vmatprep.mubr.bf16.mxu0 0
        %3447 = vmatmul.mubr.bf16.gmra.mrb[0].mxu0 %v3234
        %v3448 = vpop.f32.mrb[0].mxu0
        %v3449 = vadd.f32 %v3260, %v3448
        %v3450 = vpop.f32.mrb[0].mxu0
        %v3451 = vpop.f32.mrb[0].mxu0
        %v3452 = vadd.f32 %v3260, %v3451
        %v3453 = vpop.f32.mrb[0].mxu0
        %3454 = vmatprep.mubr.bf16.mxu0 0
        %3455 = vmatmul.mubr.bf16.gmra.mrb[0].mxu0 %v3235
        %v3456 = vpop.f32.mrb[0].mxu0
        %v3457 = vadd.f32 %v3260, %v3456
        %v3458 = vpop.f32.mrb[0].mxu0
        %v3459 = vpop.f32.mrb[0].mxu0
        %v3460 = vadd.f32 %v3260, %v3459
        %v3461 = vpop.f32.mrb[0].mxu0
        %3462 = vmatprep.mubr.bf16.mxu0 0
        %3463 = vmatmul.mubr.bf16.gmra.mrb[0].mxu0 %v3236
        %v3464 = vpop.f32.mrb[0].mxu0
        %v3465 = vadd.f32 %v3260, %v3464
        %v3466 = vpop.f32.mrb[0].mxu0
        %v3467 = vpop.f32.mrb[0].mxu0
        %v3468 = vadd.f32 %v3260, %v3467
        %v3469 = vpop.f32.mrb[0].mxu0
        %3470 = vdwg.mxu0
        %v3471 = vmax.f32 %v3345, 0.0
        %v3472 = vmax.f32 %v3348, 0.0
        %v3473 = vmax.f32 %v3353, 0.0
        %v3474 = vmax.f32 %v3356, 0.0
        %v3475 = vmax.f32 %v3361, 0.0
        %v3476 = vmax.f32 %v3364, 0.0
        %v3477 = vmax.f32 %v3369, 0.0
        %v3478 = vmax.f32 %v3372, 0.0
        %v3479 = vmax.f32 %v3377, 0.0
        %v3480 = vmax.f32 %v3380, 0.0
        %v3481 = vmax.f32 %v3385, 0.0
        %v3482 = vmax.f32 %v3388, 0.0
        %v3483 = vmax.f32 %v3393, 0.0
        %v3484 = vmax.f32 %v3396, 0.0
        %v3485 = vmax.f32 %v3401, 0.0
        %v3486 = vmax.f32 %v3404, 0.0
        %v3487 = vmax.f32 %v3409, 0.0
        %v3488 = vmax.f32 %v3412, 0.0
        %v3489 = vmax.f32 %v3417, 0.0
        %v3490 = vmax.f32 %v3420, 0.0
        %v3491 = vmax.f32 %v3425, 0.0
        %v3492 = vmax.f32 %v3428, 0.0
        %v3493 = vmax.f32 %v3433, 0.0
        %v3494 = vmax.f32 %v3436, 0.0
        %v3495 = vmax.f32 %v3441, 0.0
        %v3496 = vmax.f32 %v3444, 0.0
        %v3497 = vmax.f32 %v3449, 0.0
        %v3498 = vmax.f32 %v3452, 0.0
        %v3499 = vmax.f32 %v3457, 0.0
        %v3500 = vmax.f32 %v3460, 0.0
        %v3501 = vmax.f32 %v3465, 0.0
        %v3502 = vmax.f32 %v3468, 0.0
        %v3503 = vpack.c.bf16 %v3472, %v3471
        %v3504 = vpack.c.bf16 %v3474, %v3473
        %v3505 = vpack.c.bf16 %v3476, %v3475
        %v3506 = vpack.c.bf16 %v3478, %v3477
        %v3507 = vpack.c.bf16 %v3480, %v3479
        %v3508 = vpack.c.bf16 %v3482, %v3481
        %v3509 = vpack.c.bf16 %v3484, %v3483
        %v3510 = vpack.c.bf16 %v3486, %v3485
        %v3511 = vpack.c.bf16 %v3488, %v3487
        %v3512 = vpack.c.bf16 %v3490, %v3489
        %v3513 = vpack.c.bf16 %v3492, %v3491
        %v3514 = vpack.c.bf16 %v3494, %v3493
        %v3515 = vpack.c.bf16 %v3496, %v3495
        %v3516 = vpack.c.bf16 %v3498, %v3497
        %v3517 = vpack.c.bf16 %v3500, %v3499
        %v3518 = vpack.c.bf16 %v3502, %v3501
        %s3519 = scalar_lea.vmem [#allocation2], 640
        %v3520 = vld [vmem:[%s3519] sm:$0xf]
        %v3521 = vld [vmem:[%s3519 + $0x4] sm:$0xf]
        %v3522 = vld [vmem:[%s3519 + $0x8] sm:$0xf]
        %v3523 = vld [vmem:[%s3519 + $0xc] sm:$0xf]
        %v3524 = vld [vmem:[%s3519 + $0x10] sm:$0xf]
        %v3525 = vld [vmem:[%s3519 + $0x14] sm:$0xf]
        %v3526 = vld [vmem:[%s3519 + $0x18] sm:$0xf]
        %v3527 = vld [vmem:[%s3519 + $0x1c] sm:$0xf]
        %v3528 = vld [vmem:[%s3519 + $0x20] sm:$0xf]
        %v3529 = vld [vmem:[%s3519 + $0x24] sm:$0xf]
        %v3530 = vld [vmem:[%s3519 + $0x28] sm:$0xf]
        %v3531 = vld [vmem:[%s3519 + $0x2c] sm:$0xf]
        %v3532 = vld [vmem:[%s3519 + $0x30] sm:$0xf]
        %v3533 = vld [vmem:[%s3519 + $0x34] sm:$0xf]
        %v3534 = vld [vmem:[%s3519 + $0x38] sm:$0xf]
        %v3535 = vld [vmem:[%s3519 + $0x3c] sm:$0xf]
        %s3536 = scalar_lea.vmem %s2, 10
        %v3537 = vld [vmem:[%s3536] sm:$0x1]
        %v3539 = vlaneseq
        %v3540 = vshrl.u32 %v3539, 7
        %v3541 = vsub.s32 0, %v3540
        %v3542 = vrot.slane %v3537, %v3541
        %v3560 = vunpack.c.l.b16 %v3520
        %v3561 = vunpack.c.l.b16 %v3521
        %v3562 = vunpack.c.l.b16 %v3522
        %v3563 = vunpack.c.l.b16 %v3523
        %v3564 = vunpack.c.l.b16 %v3524
        %v3565 = vunpack.c.l.b16 %v3525
        %v3566 = vunpack.c.l.b16 %v3526
        %v3567 = vunpack.c.l.b16 %v3527
        %v3568 = vunpack.c.l.b16 %v3528
        %v3569 = vunpack.c.l.b16 %v3529
        %v3570 = vunpack.c.l.b16 %v3530
        %v3571 = vunpack.c.l.b16 %v3531
        %v3572 = vunpack.c.l.b16 %v3532
        %v3573 = vunpack.c.l.b16 %v3533
        %v3574 = vunpack.c.l.b16 %v3534
        %v3575 = vunpack.c.l.b16 %v3535
        %v3576 = vpack.c.b16 %v3561, %v3560
        %v3577 = vpack.c.b16 %v3563, %v3562
        %v3578 = vpack.c.b16 %v3565, %v3564
        %v3579 = vpack.c.b16 %v3567, %v3566
        %v3580 = vpack.c.b16 %v3569, %v3568
        %v3581 = vpack.c.b16 %v3571, %v3570
        %v3582 = vpack.c.b16 %v3573, %v3572
        %v3583 = vpack.c.b16 %v3575, %v3574
        %3592 = vmatprep.subr.bf16.mxu0 0
        %3593 = vmatpush1.bf16.msra.mxu0 %v3576
        %3594 = vmatprep.subr.bf16.mxu0 0
        %3595 = vmatpush1.bf16.msra.mxu0 %v3577
        %3596 = vmatprep.subr.bf16.mxu0 0
        %3597 = vmatpush1.bf16.msra.mxu0 %v3578
        %3598 = vmatprep.subr.bf16.mxu0 0
        %3599 = vmatpush1.bf16.msra.mxu0 %v3579
        %3600 = vmatprep.subr.bf16.mxu0 0
        %3601 = vmatpush1.bf16.msra.mxu0 %v3580
        %3602 = vmatprep.subr.bf16.mxu0 0
        %3603 = vmatpush1.bf16.msra.mxu0 %v3581
        %3604 = vmatprep.subr.bf16.mxu0 0
        %3605 = vmatpush1.bf16.msra.mxu0 %v3582
        %3606 = vmatprep.subr.bf16.mxu0 0
        %3607 = vmatpush1.bf16.msra.mxu0 %v3583
        %3608 = vmatprep.subr.bf16.mxu0 0
        %3609 = vmatpush1.bf16.msra.mxu0 0
        %3610 = vmatprep.subr.bf16.mxu0 0
        %3611 = vmatpush1.bf16.msra.mxu0 0
        %3612 = vmatprep.subr.bf16.mxu0 0
        %3613 = vmatpush1.bf16.msra.mxu0 0
        %3614 = vmatprep.subr.bf16.mxu0 0
        %3615 = vmatpush1.bf16.msra.mxu0 0
        %3616 = vmatprep.subr.bf16.mxu0 0
        %3617 = vmatpush1.bf16.msra.mxu0 0
        %3618 = vmatprep.subr.bf16.mxu0 0
        %3619 = vmatpush1.bf16.msra.mxu0 0
        %3620 = vmatprep.subr.bf16.mxu0 0
        %3621 = vmatpush1.bf16.msra.mxu0 0
        %3622 = vmatprep.subr.bf16.mxu0 0
        %3623 = vmatpush1.bf16.msra.mxu0 0
        %3624 = vmatprep.mubr.bf16.mxu0 0
        %3625 = vmatmul.mubr.bf16.gmra.mrb[0].mxu0 %v3503
        %v3626 = vpop.f32.mrb[0].mxu0
        %v3627 = vadd.f32 %v3542, %v3626
        %v3628 = vpop.f32.mrb[0].mxu0
        %v3629 = vpop.f32.mrb[0].mxu0
        %v3630 = vadd.f32 %v3542, %v3629
        %v3631 = vpop.f32.mrb[0].mxu0
        %3632 = vmatprep.mubr.bf16.mxu0 0
        %3633 = vmatmul.mubr.bf16.gmra.mrb[0].mxu0 %v3504
        %v3634 = vpop.f32.mrb[0].mxu0
        %v3635 = vadd.f32 %v3542, %v3634
        %v3636 = vpop.f32.mrb[0].mxu0
        %v3637 = vpop.f32.mrb[0].mxu0
        %v3638 = vadd.f32 %v3542, %v3637
        %v3639 = vpop.f32.mrb[0].mxu0
        %3640 = vmatprep.mubr.bf16.mxu0 0
        %3641 = vmatmul.mubr.bf16.gmra.mrb[0].mxu0 %v3505
        %v3642 = vpop.f32.mrb[0].mxu0
        %v3643 = vadd.f32 %v3542, %v3642
        %v3644 = vpop.f32.mrb[0].mxu0
        %v3645 = vpop.f32.mrb[0].mxu0
        %v3646 = vadd.f32 %v3542, %v3645
        %v3647 = vpop.f32.mrb[0].mxu0
        %3648 = vmatprep.mubr.bf16.mxu0 0
        %3649 = vmatmul.mubr.bf16.gmra.mrb[0].mxu0 %v3506
        %v3650 = vpop.f32.mrb[0].mxu0
        %v3651 = vadd.f32 %v3542, %v3650
        %v3652 = vpop.f32.mrb[0].mxu0
        %v3653 = vpop.f32.mrb[0].mxu0
        %v3654 = vadd.f32 %v3542, %v3653
        %v3655 = vpop.f32.mrb[0].mxu0
        %3656 = vmatprep.mubr.bf16.mxu0 0
        %3657 = vmatmul.mubr.bf16.gmra.mrb[0].mxu0 %v3507
        %v3658 = vpop.f32.mrb[0].mxu0
        %v3659 = vadd.f32 %v3542, %v3658
        %v3660 = vpop.f32.mrb[0].mxu0
        %v3661 = vpop.f32.mrb[0].mxu0
        %v3662 = vadd.f32 %v3542, %v3661
        %v3663 = vpop.f32.mrb[0].mxu0
        %3664 = vmatprep.mubr.bf16.mxu0 0
        %3665 = vmatmul.mubr.bf16.gmra.mrb[0].mxu0 %v3508
        %v3666 = vpop.f32.mrb[0].mxu0
        %v3667 = vadd.f32 %v3542, %v3666
        %v3668 = vpop.f32.mrb[0].mxu0
        %v3669 = vpop.f32.mrb[0].mxu0
        %v3670 = vadd.f32 %v3542, %v3669
        %v3671 = vpop.f32.mrb[0].mxu0
        %3672 = vmatprep.mubr.bf16.mxu0 0
        %3673 = vmatmul.mubr.bf16.gmra.mrb[0].mxu0 %v3509
        %v3674 = vpop.f32.mrb[0].mxu0
        %v3675 = vadd.f32 %v3542, %v3674
        %v3676 = vpop.f32.mrb[0].mxu0
        %v3677 = vpop.f32.mrb[0].mxu0
        %v3678 = vadd.f32 %v3542, %v3677
        %v3679 = vpop.f32.mrb[0].mxu0
        %3680 = vmatprep.mubr.bf16.mxu0 0
        %3681 = vmatmul.mubr.bf16.gmra.mrb[0].mxu0 %v3510
        %v3682 = vpop.f32.mrb[0].mxu0
        %v3683 = vadd.f32 %v3542, %v3682
        %v3684 = vpop.f32.mrb[0].mxu0
        %v3685 = vpop.f32.mrb[0].mxu0
        %v3686 = vadd.f32 %v3542, %v3685
        %v3687 = vpop.f32.mrb[0].mxu0
        %3688 = vmatprep.mubr.bf16.mxu0 0
        %3689 = vmatmul.mubr.bf16.gmra.mrb[0].mxu0 %v3511
        %v3690 = vpop.f32.mrb[0].mxu0
        %v3691 = vadd.f32 %v3542, %v3690
        %v3692 = vpop.f32.mrb[0].mxu0
        %v3693 = vpop.f32.mrb[0].mxu0
        %v3694 = vadd.f32 %v3542, %v3693
        %v3695 = vpop.f32.mrb[0].mxu0
        %3696 = vmatprep.mubr.bf16.mxu0 0
        %3697 = vmatmul.mubr.bf16.gmra.mrb[0].mxu0 %v3512
        %v3698 = vpop.f32.mrb[0].mxu0
        %v3699 = vadd.f32 %v3542, %v3698
        %v3700 = vpop.f32.mrb[0].mxu0
        %v3701 = vpop.f32.mrb[0].mxu0
        %v3702 = vadd.f32 %v3542, %v3701
        %v3703 = vpop.f32.mrb[0].mxu0
        %3704 = vmatprep.mubr.bf16.mxu0 0
        %3705 = vmatmul.mubr.bf16.gmra.mrb[0].mxu0 %v3513
        %v3706 = vpop.f32.mrb[0].mxu0
        %v3707 = vadd.f32 %v3542, %v3706
        %v3708 = vpop.f32.mrb[0].mxu0
        %v3709 = vpop.f32.mrb[0].mxu0
        %v3710 = vadd.f32 %v3542, %v3709
        %v3711 = vpop.f32.mrb[0].mxu0
        %3712 = vmatprep.mubr.bf16.mxu0 0
        %3713 = vmatmul.mubr.bf16.gmra.mrb[0].mxu0 %v3514
        %v3714 = vpop.f32.mrb[0].mxu0
        %v3715 = vadd.f32 %v3542, %v3714
        %v3716 = vpop.f32.mrb[0].mxu0
        %v3717 = vpop.f32.mrb[0].mxu0
        %v3718 = vadd.f32 %v3542, %v3717
        %v3719 = vpop.f32.mrb[0].mxu0
        %3720 = vmatprep.mubr.bf16.mxu0 0
        %3721 = vmatmul.mubr.bf16.gmra.mrb[0].mxu0 %v3515
        %v3722 = vpop.f32.mrb[0].mxu0
        %v3723 = vadd.f32 %v3542, %v3722
        %v3724 = vpop.f32.mrb[0].mxu0
        %v3725 = vpop.f32.mrb[0].mxu0
        %v3726 = vadd.f32 %v3542, %v3725
        %v3727 = vpop.f32.mrb[0].mxu0
        %3728 = vmatprep.mubr.bf16.mxu0 0
        %3729 = vmatmul.mubr.bf16.gmra.mrb[0].mxu0 %v3516
        %v3730 = vpop.f32.mrb[0].mxu0
        %v3731 = vadd.f32 %v3542, %v3730
        %v3732 = vpop.f32.mrb[0].mxu0
        %v3733 = vpop.f32.mrb[0].mxu0
        %v3734 = vadd.f32 %v3542, %v3733
        %v3735 = vpop.f32.mrb[0].mxu0
        %3736 = vmatprep.mubr.bf16.mxu0 0
        %3737 = vmatmul.mubr.bf16.gmra.mrb[0].mxu0 %v3517
        %v3738 = vpop.f32.mrb[0].mxu0
        %v3739 = vadd.f32 %v3542, %v3738
        %v3740 = vpop.f32.mrb[0].mxu0
        %v3741 = vpop.f32.mrb[0].mxu0
        %v3742 = vadd.f32 %v3542, %v3741
        %v3743 = vpop.f32.mrb[0].mxu0
        %3744 = vmatprep.mubr.bf16.mxu0 0
        %3745 = vmatmul.mubr.bf16.gmra.mrb[0].mxu0 %v3518
        %v3746 = vpop.f32.mrb[0].mxu0
        %v3747 = vadd.f32 %v3542, %v3746
        %v3748 = vpop.f32.mrb[0].mxu0
        %v3749 = vpop.f32.mrb[0].mxu0
        %v3750 = vadd.f32 %v3542, %v3749
        %v3751 = vpop.f32.mrb[0].mxu0
        %3752 = vdwg.mxu0
        %v3753 = vmax.f32 %v3627, 0.0
        %v3754 = vmax.f32 %v3630, 0.0
        %v3755 = vmax.f32 %v3635, 0.0
        %v3756 = vmax.f32 %v3638, 0.0
        %v3757 = vmax.f32 %v3643, 0.0
        %v3758 = vmax.f32 %v3646, 0.0
        %v3759 = vmax.f32 %v3651, 0.0
        %v3760 = vmax.f32 %v3654, 0.0
        %v3761 = vmax.f32 %v3659, 0.0
        %v3762 = vmax.f32 %v3662, 0.0
        %v3763 = vmax.f32 %v3667, 0.0
        %v3764 = vmax.f32 %v3670, 0.0
        %v3765 = vmax.f32 %v3675, 0.0
        %v3766 = vmax.f32 %v3678, 0.0
        %v3767 = vmax.f32 %v3683, 0.0
        %v3768 = vmax.f32 %v3686, 0.0
        %v3769 = vmax.f32 %v3691, 0.0
        %v3770 = vmax.f32 %v3694, 0.0
        %v3771 = vmax.f32 %v3699, 0.0
        %v3772 = vmax.f32 %v3702, 0.0
        %v3773 = vmax.f32 %v3707, 0.0
        %v3774 = vmax.f32 %v3710, 0.0
        %v3775 = vmax.f32 %v3715, 0.0
        %v3776 = vmax.f32 %v3718, 0.0
        %v3777 = vmax.f32 %v3723, 0.0
        %v3778 = vmax.f32 %v3726, 0.0
        %v3779 = vmax.f32 %v3731, 0.0
        %v3780 = vmax.f32 %v3734, 0.0
        %v3781 = vmax.f32 %v3739, 0.0
        %v3782 = vmax.f32 %v3742, 0.0
        %v3783 = vmax.f32 %v3747, 0.0
        %v3784 = vmax.f32 %v3750, 0.0
        %v3785 = vadd.f32 %v3753, %v767
        %v3786 = vadd.f32 %v3754, %v768
        %v3787 = vadd.f32 %v3755, %v769
        %v3788 = vadd.f32 %v3756, %v770
        %v3789 = vadd.f32 %v3757, %v771
        %v3790 = vadd.f32 %v3758, %v772
        %v3791 = vadd.f32 %v3759, %v773
        %v3792 = vadd.f32 %v3760, %v774
        %v3793 = vadd.f32 %v3761, %v775
        %v3794 = vadd.f32 %v3762, %v776
        %v3795 = vadd.f32 %v3763, %v777
        %v3796 = vadd.f32 %v3764, %v778
        %v3797 = vadd.f32 %v3765, %v779
        %v3798 = vadd.f32 %v3766, %v780
        %v3799 = vadd.f32 %v3767, %v781
        %v3800 = vadd.f32 %v3768, %v782
        %v3801 = vadd.f32 %v3769, %v783
        %v3802 = vadd.f32 %v3770, %v784
        %v3803 = vadd.f32 %v3771, %v785
        %v3804 = vadd.f32 %v3772, %v786
        %v3805 = vadd.f32 %v3773, %v787
        %v3806 = vadd.f32 %v3774, %v788
        %v3807 = vadd.f32 %v3775, %v789
        %v3808 = vadd.f32 %v3776, %v790
        %v3809 = vadd.f32 %v3777, %v791
        %v3810 = vadd.f32 %v3778, %v792
        %v3811 = vadd.f32 %v3779, %v793
        %v3812 = vadd.f32 %v3780, %v794
        %v3813 = vadd.f32 %v3781, %v795
        %v3814 = vadd.f32 %v3782, %v796
        %v3815 = vadd.f32 %v3783, %v797
        %v3816 = vadd.f32 %v3784, %v798
        %v3817 = vpack.c.bf16 %v3786, %v3785
        %v3818 = vpack.c.bf16 %v3788, %v3787
        %v3819 = vpack.c.bf16 %v3790, %v3789
        %v3820 = vpack.c.bf16 %v3792, %v3791
        %v3821 = vpack.c.bf16 %v3794, %v3793
        %v3822 = vpack.c.bf16 %v3796, %v3795
        %v3823 = vpack.c.bf16 %v3798, %v3797
        %v3824 = vpack.c.bf16 %v3800, %v3799
        %v3825 = vpack.c.bf16 %v3802, %v3801
        %v3826 = vpack.c.bf16 %v3804, %v3803
        %v3827 = vpack.c.bf16 %v3806, %v3805
        %v3828 = vpack.c.bf16 %v3808, %v3807
        %v3829 = vpack.c.bf16 %v3810, %v3809
        %v3830 = vpack.c.bf16 %v3812, %v3811
        %v3831 = vpack.c.bf16 %v3814, %v3813
        %v3832 = vpack.c.bf16 %v3816, %v3815
        %s3833 = scalar_lea.vmem [#allocation2], 704
        %v3834 = vld [vmem:[%s3833] sm:$0xf]
        %v3835 = vld [vmem:[%s3833 + $0x4] sm:$0xf]
        %v3836 = vld [vmem:[%s3833 + $0x8] sm:$0xf]
        %v3837 = vld [vmem:[%s3833 + $0xc] sm:$0xf]
        %v3838 = vld [vmem:[%s3833 + $0x10] sm:$0xf]
        %v3839 = vld [vmem:[%s3833 + $0x14] sm:$0xf]
        %v3840 = vld [vmem:[%s3833 + $0x18] sm:$0xf]
        %v3841 = vld [vmem:[%s3833 + $0x1c] sm:$0xf]
        %v3842 = vld [vmem:[%s3833 + $0x20] sm:$0xf]
        %v3843 = vld [vmem:[%s3833 + $0x24] sm:$0xf]
        %v3844 = vld [vmem:[%s3833 + $0x28] sm:$0xf]
        %v3845 = vld [vmem:[%s3833 + $0x2c] sm:$0xf]
        %v3846 = vld [vmem:[%s3833 + $0x30] sm:$0xf]
        %v3847 = vld [vmem:[%s3833 + $0x34] sm:$0xf]
        %v3848 = vld [vmem:[%s3833 + $0x38] sm:$0xf]
        %v3849 = vld [vmem:[%s3833 + $0x3c] sm:$0xf]
        %s3850 = scalar_lea.vmem %s2, 11
        %v3851 = vld [vmem:[%s3850] sm:$0x1]
        %v3853 = vlaneseq
        %v3854 = vshrl.u32 %v3853, 7
        %v3855 = vsub.s32 0, %v3854
        %v3856 = vrot.slane %v3851, %v3855
        %v3874 = vunpack.c.l.b16 %v3834
        %v3875 = vunpack.c.l.b16 %v3835
        %v3876 = vunpack.c.l.b16 %v3836
        %v3877 = vunpack.c.l.b16 %v3837
        %v3878 = vunpack.c.l.b16 %v3838
        %v3879 = vunpack.c.l.b16 %v3839
        %v3880 = vunpack.c.l.b16 %v3840
        %v3881 = vunpack.c.l.b16 %v3841
        %v3882 = vunpack.c.l.b16 %v3842
        %v3883 = vunpack.c.l.b16 %v3843
        %v3884 = vunpack.c.l.b16 %v3844
        %v3885 = vunpack.c.l.b16 %v3845
        %v3886 = vunpack.c.l.b16 %v3846
        %v3887 = vunpack.c.l.b16 %v3847
        %v3888 = vunpack.c.l.b16 %v3848
        %v3889 = vunpack.c.l.b16 %v3849
        %v3890 = vpack.c.b16 %v3875, %v3874
        %v3891 = vpack.c.b16 %v3877, %v3876
        %v3892 = vpack.c.b16 %v3879, %v3878
        %v3893 = vpack.c.b16 %v3881, %v3880
        %v3894 = vpack.c.b16 %v3883, %v3882
        %v3895 = vpack.c.b16 %v3885, %v3884
        %v3896 = vpack.c.b16 %v3887, %v3886
        %v3897 = vpack.c.b16 %v3889, %v3888
        %3906 = vmatprep.subr.bf16.mxu0 0
        %3907 = vmatpush1.bf16.msra.mxu0 %v3890
        %3908 = vmatprep.subr.bf16.mxu0 0
        %3909 = vmatpush1.bf16.msra.mxu0 %v3891
        %3910 = vmatprep.subr.bf16.mxu0 0
        %3911 = vmatpush1.bf16.msra.mxu0 %v3892
        %3912 = vmatprep.subr.bf16.mxu0 0
        %3913 = vmatpush1.bf16.msra.mxu0 %v3893
        %3914 = vmatprep.subr.bf16.mxu0 0
        %3915 = vmatpush1.bf16.msra.mxu0 %v3894
        %3916 = vmatprep.subr.bf16.mxu0 0
        %3917 = vmatpush1.bf16.msra.mxu0 %v3895
        %3918 = vmatprep.subr.bf16.mxu0 0
        %3919 = vmatpush1.bf16.msra.mxu0 %v3896
        %3920 = vmatprep.subr.bf16.mxu0 0
        %3921 = vmatpush1.bf16.msra.mxu0 %v3897
        %3922 = vmatprep.subr.bf16.mxu0 0
        %3923 = vmatpush1.bf16.msra.mxu0 0
        %3924 = vmatprep.subr.bf16.mxu0 0
        %3925 = vmatpush1.bf16.msra.mxu0 0
        %3926 = vmatprep.subr.bf16.mxu0 0
        %3927 = vmatpush1.bf16.msra.mxu0 0
        %3928 = vmatprep.subr.bf16.mxu0 0
        %3929 = vmatpush1.bf16.msra.mxu0 0
        %3930 = vmatprep.subr.bf16.mxu0 0
        %3931 = vmatpush1.bf16.msra.mxu0 0
        %3932 = vmatprep.subr.bf16.mxu0 0
        %3933 = vmatpush1.bf16.msra.mxu0 0
        %3934 = vmatprep.subr.bf16.mxu0 0
        %3935 = vmatpush1.bf16.msra.mxu0 0
        %3936 = vmatprep.subr.bf16.mxu0 0
        %3937 = vmatpush1.bf16.msra.mxu0 0
        %3938 = vmatprep.mubr.bf16.mxu0 0
        %3939 = vmatmul.mubr.bf16.gmra.mrb[0].mxu0 %v3817
        %v3940 = vpop.f32.mrb[0].mxu0
        %v3941 = vadd.f32 %v3856, %v3940
        %v3942 = vpop.f32.mrb[0].mxu0
        %v3943 = vpop.f32.mrb[0].mxu0
        %v3944 = vadd.f32 %v3856, %v3943
        %v3945 = vpop.f32.mrb[0].mxu0
        %3946 = vmatprep.mubr.bf16.mxu0 0
        %3947 = vmatmul.mubr.bf16.gmra.mrb[0].mxu0 %v3818
        %v3948 = vpop.f32.mrb[0].mxu0
        %v3949 = vadd.f32 %v3856, %v3948
        %v3950 = vpop.f32.mrb[0].mxu0
        %v3951 = vpop.f32.mrb[0].mxu0
        %v3952 = vadd.f32 %v3856, %v3951
        %v3953 = vpop.f32.mrb[0].mxu0
        %3954 = vmatprep.mubr.bf16.mxu0 0
        %3955 = vmatmul.mubr.bf16.gmra.mrb[0].mxu0 %v3819
        %v3956 = vpop.f32.mrb[0].mxu0
        %v3957 = vadd.f32 %v3856, %v3956
        %v3958 = vpop.f32.mrb[0].mxu0
        %v3959 = vpop.f32.mrb[0].mxu0
        %v3960 = vadd.f32 %v3856, %v3959
        %v3961 = vpop.f32.mrb[0].mxu0
        %3962 = vmatprep.mubr.bf16.mxu0 0
        %3963 = vmatmul.mubr.bf16.gmra.mrb[0].mxu0 %v3820
        %v3964 = vpop.f32.mrb[0].mxu0
        %v3965 = vadd.f32 %v3856, %v3964
        %v3966 = vpop.f32.mrb[0].mxu0
        %v3967 = vpop.f32.mrb[0].mxu0
        %v3968 = vadd.f32 %v3856, %v3967
        %v3969 = vpop.f32.mrb[0].mxu0
        %3970 = vmatprep.mubr.bf16.mxu0 0
        %3971 = vmatmul.mubr.bf16.gmra.mrb[0].mxu0 %v3821
        %v3972 = vpop.f32.mrb[0].mxu0
        %v3973 = vadd.f32 %v3856, %v3972
        %v3974 = vpop.f32.mrb[0].mxu0
        %v3975 = vpop.f32.mrb[0].mxu0
        %v3976 = vadd.f32 %v3856, %v3975
        %v3977 = vpop.f32.mrb[0].mxu0
        %3978 = vmatprep.mubr.bf16.mxu0 0
        %3979 = vmatmul.mubr.bf16.gmra.mrb[0].mxu0 %v3822
        %v3980 = vpop.f32.mrb[0].mxu0
        %v3981 = vadd.f32 %v3856, %v3980
        %v3982 = vpop.f32.mrb[0].mxu0
        %v3983 = vpop.f32.mrb[0].mxu0
        %v3984 = vadd.f32 %v3856, %v3983
        %v3985 = vpop.f32.mrb[0].mxu0
        %3986 = vmatprep.mubr.bf16.mxu0 0
        %3987 = vmatmul.mubr.bf16.gmra.mrb[0].mxu0 %v3823
        %v3988 = vpop.f32.mrb[0].mxu0
        %v3989 = vadd.f32 %v3856, %v3988
        %v3990 = vpop.f32.mrb[0].mxu0
        %v3991 = vpop.f32.mrb[0].mxu0
        %v3992 = vadd.f32 %v3856, %v3991
        %v3993 = vpop.f32.mrb[0].mxu0
        %3994 = vmatprep.mubr.bf16.mxu0 0
        %3995 = vmatmul.mubr.bf16.gmra.mrb[0].mxu0 %v3824
        %v3996 = vpop.f32.mrb[0].mxu0
        %v3997 = vadd.f32 %v3856, %v3996
        %v3998 = vpop.f32.mrb[0].mxu0
        %v3999 = vpop.f32.mrb[0].mxu0
        %v4000 = vadd.f32 %v3856, %v3999
        %v4001 = vpop.f32.mrb[0].mxu0
        %4002 = vmatprep.mubr.bf16.mxu0 0
        %4003 = vmatmul.mubr.bf16.gmra.mrb[0].mxu0 %v3825
        %v4004 = vpop.f32.mrb[0].mxu0
        %v4005 = vadd.f32 %v3856, %v4004
        %v4006 = vpop.f32.mrb[0].mxu0
        %v4007 = vpop.f32.mrb[0].mxu0
        %v4008 = vadd.f32 %v3856, %v4007
        %v4009 = vpop.f32.mrb[0].mxu0
        %4010 = vmatprep.mubr.bf16.mxu0 0
        %4011 = vmatmul.mubr.bf16.gmra.mrb[0].mxu0 %v3826
        %v4012 = vpop.f32.mrb[0].mxu0
        %v4013 = vadd.f32 %v3856, %v4012
        %v4014 = vpop.f32.mrb[0].mxu0
        %v4015 = vpop.f32.mrb[0].mxu0
        %v4016 = vadd.f32 %v3856, %v4015
        %v4017 = vpop.f32.mrb[0].mxu0
        %4018 = vmatprep.mubr.bf16.mxu0 0
        %4019 = vmatmul.mubr.bf16.gmra.mrb[0].mxu0 %v3827
        %v4020 = vpop.f32.mrb[0].mxu0
        %v4021 = vadd.f32 %v3856, %v4020
        %v4022 = vpop.f32.mrb[0].mxu0
        %v4023 = vpop.f32.mrb[0].mxu0
        %v4024 = vadd.f32 %v3856, %v4023
        %v4025 = vpop.f32.mrb[0].mxu0
        %4026 = vmatprep.mubr.bf16.mxu0 0
        %4027 = vmatmul.mubr.bf16.gmra.mrb[0].mxu0 %v3828
        %v4028 = vpop.f32.mrb[0].mxu0
        %v4029 = vadd.f32 %v3856, %v4028
        %v4030 = vpop.f32.mrb[0].mxu0
        %v4031 = vpop.f32.mrb[0].mxu0
        %v4032 = vadd.f32 %v3856, %v4031
        %v4033 = vpop.f32.mrb[0].mxu0
        %4034 = vmatprep.mubr.bf16.mxu0 0
        %4035 = vmatmul.mubr.bf16.gmra.mrb[0].mxu0 %v3829
        %v4036 = vpop.f32.mrb[0].mxu0
        %v4037 = vadd.f32 %v3856, %v4036
        %v4038 = vpop.f32.mrb[0].mxu0
        %v4039 = vpop.f32.mrb[0].mxu0
        %v4040 = vadd.f32 %v3856, %v4039
        %v4041 = vpop.f32.mrb[0].mxu0
        %4042 = vmatprep.mubr.bf16.mxu0 0
        %4043 = vmatmul.mubr.bf16.gmra.mrb[0].mxu0 %v3830
        %v4044 = vpop.f32.mrb[0].mxu0
        %v4045 = vadd.f32 %v3856, %v4044
        %v4046 = vpop.f32.mrb[0].mxu0
        %v4047 = vpop.f32.mrb[0].mxu0
        %v4048 = vadd.f32 %v3856, %v4047
        %v4049 = vpop.f32.mrb[0].mxu0
        %4050 = vmatprep.mubr.bf16.mxu0 0
        %4051 = vmatmul.mubr.bf16.gmra.mrb[0].mxu0 %v3831
        %v4052 = vpop.f32.mrb[0].mxu0
        %v4053 = vadd.f32 %v3856, %v4052
        %v4054 = vpop.f32.mrb[0].mxu0
        %v4055 = vpop.f32.mrb[0].mxu0
        %v4056 = vadd.f32 %v3856, %v4055
        %v4057 = vpop.f32.mrb[0].mxu0
        %4058 = vmatprep.mubr.bf16.mxu0 0
        %4059 = vmatmul.mubr.bf16.gmra.mrb[0].mxu0 %v3832
        %v4060 = vpop.f32.mrb[0].mxu0
        %v4061 = vadd.f32 %v3856, %v4060
        %v4062 = vpop.f32.mrb[0].mxu0
        %v4063 = vpop.f32.mrb[0].mxu0
        %v4064 = vadd.f32 %v3856, %v4063
        %v4065 = vpop.f32.mrb[0].mxu0
        %4066 = vdwg.mxu0
        %v4067 = vmax.f32 %v3941, 0.0
        %v4068 = vmax.f32 %v3944, 0.0
        %v4069 = vmax.f32 %v3949, 0.0
        %v4070 = vmax.f32 %v3952, 0.0
        %v4071 = vmax.f32 %v3957, 0.0
        %v4072 = vmax.f32 %v3960, 0.0
        %v4073 = vmax.f32 %v3965, 0.0
        %v4074 = vmax.f32 %v3968, 0.0
        %v4075 = vmax.f32 %v3973, 0.0
        %v4076 = vmax.f32 %v3976, 0.0
        %v4077 = vmax.f32 %v3981, 0.0
        %v4078 = vmax.f32 %v3984, 0.0
        %v4079 = vmax.f32 %v3989, 0.0
        %v4080 = vmax.f32 %v3992, 0.0
        %v4081 = vmax.f32 %v3997, 0.0
        %v4082 = vmax.f32 %v4000, 0.0
        %v4083 = vmax.f32 %v4005, 0.0
        %v4084 = vmax.f32 %v4008, 0.0
        %v4085 = vmax.f32 %v4013, 0.0
        %v4086 = vmax.f32 %v4016, 0.0
        %v4087 = vmax.f32 %v4021, 0.0
        %v4088 = vmax.f32 %v4024, 0.0
        %v4089 = vmax.f32 %v4029, 0.0
        %v4090 = vmax.f32 %v4032, 0.0
        %v4091 = vmax.f32 %v4037, 0.0
        %v4092 = vmax.f32 %v4040, 0.0
        %v4093 = vmax.f32 %v4045, 0.0
        %v4094 = vmax.f32 %v4048, 0.0
        %v4095 = vmax.f32 %v4053, 0.0
        %v4096 = vmax.f32 %v4056, 0.0
        %v4097 = vmax.f32 %v4061, 0.0
        %v4098 = vmax.f32 %v4064, 0.0
        %v4099 = vpack.c.bf16 %v4068, %v4067
        %v4100 = vpack.c.bf16 %v4070, %v4069
        %v4101 = vpack.c.bf16 %v4072, %v4071
        %v4102 = vpack.c.bf16 %v4074, %v4073
        %v4103 = vpack.c.bf16 %v4076, %v4075
        %v4104 = vpack.c.bf16 %v4078, %v4077
        %v4105 = vpack.c.bf16 %v4080, %v4079
        %v4106 = vpack.c.bf16 %v4082, %v4081
        %v4107 = vpack.c.bf16 %v4084, %v4083
        %v4108 = vpack.c.bf16 %v4086, %v4085
        %v4109 = vpack.c.bf16 %v4088, %v4087
        %v4110 = vpack.c.bf16 %v4090, %v4089
        %v4111 = vpack.c.bf16 %v4092, %v4091
        %v4112 = vpack.c.bf16 %v4094, %v4093
        %v4113 = vpack.c.bf16 %v4096, %v4095
        %v4114 = vpack.c.bf16 %v4098, %v4097
        %s4115 = scalar_lea.vmem [#allocation2], 768
        %v4116 = vld [vmem:[%s4115] sm:$0xf]
        %v4117 = vld [vmem:[%s4115 + $0x4] sm:$0xf]
        %v4118 = vld [vmem:[%s4115 + $0x8] sm:$0xf]
        %v4119 = vld [vmem:[%s4115 + $0xc] sm:$0xf]
        %v4120 = vld [vmem:[%s4115 + $0x10] sm:$0xf]
        %v4121 = vld [vmem:[%s4115 + $0x14] sm:$0xf]
        %v4122 = vld [vmem:[%s4115 + $0x18] sm:$0xf]
        %v4123 = vld [vmem:[%s4115 + $0x1c] sm:$0xf]
        %v4124 = vld [vmem:[%s4115 + $0x20] sm:$0xf]
        %v4125 = vld [vmem:[%s4115 + $0x24] sm:$0xf]
        %v4126 = vld [vmem:[%s4115 + $0x28] sm:$0xf]
        %v4127 = vld [vmem:[%s4115 + $0x2c] sm:$0xf]
        %v4128 = vld [vmem:[%s4115 + $0x30] sm:$0xf]
        %v4129 = vld [vmem:[%s4115 + $0x34] sm:$0xf]
        %v4130 = vld [vmem:[%s4115 + $0x38] sm:$0xf]
        %v4131 = vld [vmem:[%s4115 + $0x3c] sm:$0xf]
        %s4132 = scalar_lea.vmem %s2, 12
        %v4133 = vld [vmem:[%s4132] sm:$0x1]
        %v4135 = vlaneseq
        %v4136 = vshrl.u32 %v4135, 7
        %v4137 = vsub.s32 0, %v4136
        %v4138 = vrot.slane %v4133, %v4137
        %v4156 = vunpack.c.l.b16 %v4116
        %v4157 = vunpack.c.l.b16 %v4117
        %v4158 = vunpack.c.l.b16 %v4118
        %v4159 = vunpack.c.l.b16 %v4119
        %v4160 = vunpack.c.l.b16 %v4120
        %v4161 = vunpack.c.l.b16 %v4121
        %v4162 = vunpack.c.l.b16 %v4122
        %v4163 = vunpack.c.l.b16 %v4123
        %v4164 = vunpack.c.l.b16 %v4124
        %v4165 = vunpack.c.l.b16 %v4125
        %v4166 = vunpack.c.l.b16 %v4126
        %v4167 = vunpack.c.l.b16 %v4127
        %v4168 = vunpack.c.l.b16 %v4128
        %v4169 = vunpack.c.l.b16 %v4129
        %v4170 = vunpack.c.l.b16 %v4130
        %v4171 = vunpack.c.l.b16 %v4131
        %v4172 = vpack.c.b16 %v4157, %v4156
        %v4173 = vpack.c.b16 %v4159, %v4158
        %v4174 = vpack.c.b16 %v4161, %v4160
        %v4175 = vpack.c.b16 %v4163, %v4162
        %v4176 = vpack.c.b16 %v4165, %v4164
        %v4177 = vpack.c.b16 %v4167, %v4166
        %v4178 = vpack.c.b16 %v4169, %v4168
        %v4179 = vpack.c.b16 %v4171, %v4170
        %4188 = vmatprep.subr.bf16.mxu0 0
        %4189 = vmatpush1.bf16.msra.mxu0 %v4172
        %4190 = vmatprep.subr.bf16.mxu0 0
        %4191 = vmatpush1.bf16.msra.mxu0 %v4173
        %4192 = vmatprep.subr.bf16.mxu0 0
        %4193 = vmatpush1.bf16.msra.mxu0 %v4174
        %4194 = vmatprep.subr.bf16.mxu0 0
        %4195 = vmatpush1.bf16.msra.mxu0 %v4175
        %4196 = vmatprep.subr.bf16.mxu0 0
        %4197 = vmatpush1.bf16.msra.mxu0 %v4176
        %4198 = vmatprep.subr.bf16.mxu0 0
        %4199 = vmatpush1.bf16.msra.mxu0 %v4177
        %4200 = vmatprep.subr.bf16.mxu0 0
        %4201 = vmatpush1.bf16.msra.mxu0 %v4178
        %4202 = vmatprep.subr.bf16.mxu0 0
        %4203 = vmatpush1.bf16.msra.mxu0 %v4179
        %4204 = vmatprep.subr.bf16.mxu0 0
        %4205 = vmatpush1.bf16.msra.mxu0 0
        %4206 = vmatprep.subr.bf16.mxu0 0
        %4207 = vmatpush1.bf16.msra.mxu0 0
        %4208 = vmatprep.subr.bf16.mxu0 0
        %4209 = vmatpush1.bf16.msra.mxu0 0
        %4210 = vmatprep.subr.bf16.mxu0 0
        %4211 = vmatpush1.bf16.msra.mxu0 0
        %4212 = vmatprep.subr.bf16.mxu0 0
        %4213 = vmatpush1.bf16.msra.mxu0 0
        %4214 = vmatprep.subr.bf16.mxu0 0
        %4215 = vmatpush1.bf16.msra.mxu0 0
        %4216 = vmatprep.subr.bf16.mxu0 0
        %4217 = vmatpush1.bf16.msra.mxu0 0
        %4218 = vmatprep.subr.bf16.mxu0 0
        %4219 = vmatpush1.bf16.msra.mxu0 0
        %4220 = vmatprep.mubr.bf16.mxu0 0
        %4221 = vmatmul.mubr.bf16.gmra.mrb[0].mxu0 %v4099
        %v4222 = vpop.f32.mrb[0].mxu0
        %v4223 = vadd.f32 %v4138, %v4222
        %v4224 = vpop.f32.mrb[0].mxu0
        %v4225 = vpop.f32.mrb[0].mxu0
        %v4226 = vadd.f32 %v4138, %v4225
        %v4227 = vpop.f32.mrb[0].mxu0
        %4228 = vmatprep.mubr.bf16.mxu0 0
        %4229 = vmatmul.mubr.bf16.gmra.mrb[0].mxu0 %v4100
        %v4230 = vpop.f32.mrb[0].mxu0
        %v4231 = vadd.f32 %v4138, %v4230
        %v4232 = vpop.f32.mrb[0].mxu0
        %v4233 = vpop.f32.mrb[0].mxu0
        %v4234 = vadd.f32 %v4138, %v4233
        %v4235 = vpop.f32.mrb[0].mxu0
        %4236 = vmatprep.mubr.bf16.mxu0 0
        %4237 = vmatmul.mubr.bf16.gmra.mrb[0].mxu0 %v4101
        %v4238 = vpop.f32.mrb[0].mxu0
        %v4239 = vadd.f32 %v4138, %v4238
        %v4240 = vpop.f32.mrb[0].mxu0
        %v4241 = vpop.f32.mrb[0].mxu0
        %v4242 = vadd.f32 %v4138, %v4241
        %v4243 = vpop.f32.mrb[0].mxu0
        %4244 = vmatprep.mubr.bf16.mxu0 0
        %4245 = vmatmul.mubr.bf16.gmra.mrb[0].mxu0 %v4102
        %v4246 = vpop.f32.mrb[0].mxu0
        %v4247 = vadd.f32 %v4138, %v4246
        %v4248 = vpop.f32.mrb[0].mxu0
        %v4249 = vpop.f32.mrb[0].mxu0
        %v4250 = vadd.f32 %v4138, %v4249
        %v4251 = vpop.f32.mrb[0].mxu0
        %4252 = vmatprep.mubr.bf16.mxu0 0
        %4253 = vmatmul.mubr.bf16.gmra.mrb[0].mxu0 %v4103
        %v4254 = vpop.f32.mrb[0].mxu0
        %v4255 = vadd.f32 %v4138, %v4254
        %v4256 = vpop.f32.mrb[0].mxu0
        %v4257 = vpop.f32.mrb[0].mxu0
        %v4258 = vadd.f32 %v4138, %v4257
        %v4259 = vpop.f32.mrb[0].mxu0
        %4260 = vmatprep.mubr.bf16.mxu0 0
        %4261 = vmatmul.mubr.bf16.gmra.mrb[0].mxu0 %v4104
        %v4262 = vpop.f32.mrb[0].mxu0
        %v4263 = vadd.f32 %v4138, %v4262
        %v4264 = vpop.f32.mrb[0].mxu0
        %v4265 = vpop.f32.mrb[0].mxu0
        %v4266 = vadd.f32 %v4138, %v4265
        %v4267 = vpop.f32.mrb[0].mxu0
        %4268 = vmatprep.mubr.bf16.mxu0 0
        %4269 = vmatmul.mubr.bf16.gmra.mrb[0].mxu0 %v4105
        %v4270 = vpop.f32.mrb[0].mxu0
        %v4271 = vadd.f32 %v4138, %v4270
        %v4272 = vpop.f32.mrb[0].mxu0
        %v4273 = vpop.f32.mrb[0].mxu0
        %v4274 = vadd.f32 %v4138, %v4273
        %v4275 = vpop.f32.mrb[0].mxu0
        %4276 = vmatprep.mubr.bf16.mxu0 0
        %4277 = vmatmul.mubr.bf16.gmra.mrb[0].mxu0 %v4106
        %v4278 = vpop.f32.mrb[0].mxu0
        %v4279 = vadd.f32 %v4138, %v4278
        %v4280 = vpop.f32.mrb[0].mxu0
        %v4281 = vpop.f32.mrb[0].mxu0
        %v4282 = vadd.f32 %v4138, %v4281
        %v4283 = vpop.f32.mrb[0].mxu0
        %4284 = vmatprep.mubr.bf16.mxu0 0
        %4285 = vmatmul.mubr.bf16.gmra.mrb[0].mxu0 %v4107
        %v4286 = vpop.f32.mrb[0].mxu0
        %v4287 = vadd.f32 %v4138, %v4286
        %v4288 = vpop.f32.mrb[0].mxu0
        %v4289 = vpop.f32.mrb[0].mxu0
        %v4290 = vadd.f32 %v4138, %v4289
        %v4291 = vpop.f32.mrb[0].mxu0
        %4292 = vmatprep.mubr.bf16.mxu0 0
        %4293 = vmatmul.mubr.bf16.gmra.mrb[0].mxu0 %v4108
        %v4294 = vpop.f32.mrb[0].mxu0
        %v4295 = vadd.f32 %v4138, %v4294
        %v4296 = vpop.f32.mrb[0].mxu0
        %v4297 = vpop.f32.mrb[0].mxu0
        %v4298 = vadd.f32 %v4138, %v4297
        %v4299 = vpop.f32.mrb[0].mxu0
        %4300 = vmatprep.mubr.bf16.mxu0 0
        %4301 = vmatmul.mubr.bf16.gmra.mrb[0].mxu0 %v4109
        %v4302 = vpop.f32.mrb[0].mxu0
        %v4303 = vadd.f32 %v4138, %v4302
        %v4304 = vpop.f32.mrb[0].mxu0
        %v4305 = vpop.f32.mrb[0].mxu0
        %v4306 = vadd.f32 %v4138, %v4305
        %v4307 = vpop.f32.mrb[0].mxu0
        %4308 = vmatprep.mubr.bf16.mxu0 0
        %4309 = vmatmul.mubr.bf16.gmra.mrb[0].mxu0 %v4110
        %v4310 = vpop.f32.mrb[0].mxu0
        %v4311 = vadd.f32 %v4138, %v4310
        %v4312 = vpop.f32.mrb[0].mxu0
        %v4313 = vpop.f32.mrb[0].mxu0
        %v4314 = vadd.f32 %v4138, %v4313
        %v4315 = vpop.f32.mrb[0].mxu0
        %4316 = vmatprep.mubr.bf16.mxu0 0
        %4317 = vmatmul.mubr.bf16.gmra.mrb[0].mxu0 %v4111
        %v4318 = vpop.f32.mrb[0].mxu0
        %v4319 = vadd.f32 %v4138, %v4318
        %v4320 = vpop.f32.mrb[0].mxu0
        %v4321 = vpop.f32.mrb[0].mxu0
        %v4322 = vadd.f32 %v4138, %v4321
        %v4323 = vpop.f32.mrb[0].mxu0
        %4324 = vmatprep.mubr.bf16.mxu0 0
        %4325 = vmatmul.mubr.bf16.gmra.mrb[0].mxu0 %v4112
        %v4326 = vpop.f32.mrb[0].mxu0
        %v4327 = vadd.f32 %v4138, %v4326
        %v4328 = vpop.f32.mrb[0].mxu0
        %v4329 = vpop.f32.mrb[0].mxu0
        %v4330 = vadd.f32 %v4138, %v4329
        %v4331 = vpop.f32.mrb[0].mxu0
        %4332 = vmatprep.mubr.bf16.mxu0 0
        %4333 = vmatmul.mubr.bf16.gmra.mrb[0].mxu0 %v4113
        %v4334 = vpop.f32.mrb[0].mxu0
        %v4335 = vadd.f32 %v4138, %v4334
        %v4336 = vpop.f32.mrb[0].mxu0
        %v4337 = vpop.f32.mrb[0].mxu0
        %v4338 = vadd.f32 %v4138, %v4337
        %v4339 = vpop.f32.mrb[0].mxu0
        %4340 = vmatprep.mubr.bf16.mxu0 0
        %4341 = vmatmul.mubr.bf16.gmra.mrb[0].mxu0 %v4114
        %v4342 = vpop.f32.mrb[0].mxu0
        %v4343 = vadd.f32 %v4138, %v4342
        %v4344 = vpop.f32.mrb[0].mxu0
        %v4345 = vpop.f32.mrb[0].mxu0
        %v4346 = vadd.f32 %v4138, %v4345
        %v4347 = vpop.f32.mrb[0].mxu0
        %4348 = vdwg.mxu0
        %v4349 = vmax.f32 %v4223, 0.0
        %v4350 = vmax.f32 %v4226, 0.0
        %v4351 = vmax.f32 %v4231, 0.0
        %v4352 = vmax.f32 %v4234, 0.0
        %v4353 = vmax.f32 %v4239, 0.0
        %v4354 = vmax.f32 %v4242, 0.0
        %v4355 = vmax.f32 %v4247, 0.0
        %v4356 = vmax.f32 %v4250, 0.0
        %v4357 = vmax.f32 %v4255, 0.0
        %v4358 = vmax.f32 %v4258, 0.0
        %v4359 = vmax.f32 %v4263, 0.0
        %v4360 = vmax.f32 %v4266, 0.0
        %v4361 = vmax.f32 %v4271, 0.0
        %v4362 = vmax.f32 %v4274, 0.0
        %v4363 = vmax.f32 %v4279, 0.0
        %v4364 = vmax.f32 %v4282, 0.0
        %v4365 = vmax.f32 %v4287, 0.0
        %v4366 = vmax.f32 %v4290, 0.0
        %v4367 = vmax.f32 %v4295, 0.0
        %v4368 = vmax.f32 %v4298, 0.0
        %v4369 = vmax.f32 %v4303, 0.0
        %v4370 = vmax.f32 %v4306, 0.0
        %v4371 = vmax.f32 %v4311, 0.0
        %v4372 = vmax.f32 %v4314, 0.0
        %v4373 = vmax.f32 %v4319, 0.0
        %v4374 = vmax.f32 %v4322, 0.0
        %v4375 = vmax.f32 %v4327, 0.0
        %v4376 = vmax.f32 %v4330, 0.0
        %v4377 = vmax.f32 %v4335, 0.0
        %v4378 = vmax.f32 %v4338, 0.0
        %v4379 = vmax.f32 %v4343, 0.0
        %v4380 = vmax.f32 %v4346, 0.0
        %4381 = vst [vmem:[%s179] sm:$0xff] %v4349
        %4382 = vst [vmem:[%s179 + $0x8] sm:$0xff] %v4350
        %4383 = vst [vmem:[%s179 + $0x10] sm:$0xff] %v4351
        %4384 = vst [vmem:[%s179 + $0x18] sm:$0xff] %v4352
        %4385 = vst [vmem:[%s179 + $0x20] sm:$0xff] %v4353
        %4386 = vst [vmem:[%s179 + $0x28] sm:$0xff] %v4354
        %4387 = vst [vmem:[%s179 + $0x30] sm:$0xff] %v4355
        %4388 = vst [vmem:[%s179 + $0x38] sm:$0xff] %v4356
        %4389 = vst [vmem:[%s179 + $0x40] sm:$0xff] %v4357
        %4390 = vst [vmem:[%s179 + $0x48] sm:$0xff] %v4358
        %4391 = vst [vmem:[%s179 + $0x50] sm:$0xff] %v4359
        %4392 = vst [vmem:[%s179 + $0x58] sm:$0xff] %v4360
        %4393 = vst [vmem:[%s179 + $0x60] sm:$0xff] %v4361
        %4394 = vst [vmem:[%s179 + $0x68] sm:$0xff] %v4362
        %4395 = vst [vmem:[%s179 + $0x70] sm:$0xff] %v4363
        %4396 = vst [vmem:[%s179 + $0x78] sm:$0xff] %v4364
        %4397 = vst [vmem:[%s179 + $0x80] sm:$0xff] %v4365
        %4398 = vst [vmem:[%s179 + $0x88] sm:$0xff] %v4366
        %4399 = vst [vmem:[%s179 + $0x90] sm:$0xff] %v4367
        %4400 = vst [vmem:[%s179 + $0x98] sm:$0xff] %v4368
        %4401 = vst [vmem:[%s179 + $0xa0] sm:$0xff] %v4369
        %4402 = vst [vmem:[%s179 + $0xa8] sm:$0xff] %v4370
        %4403 = vst [vmem:[%s179 + $0xb0] sm:$0xff] %v4371
        %4404 = vst [vmem:[%s179 + $0xb8] sm:$0xff] %v4372
        %4405 = vst [vmem:[%s179 + $0xc0] sm:$0xff] %v4373
        %4406 = vst [vmem:[%s179 + $0xc8] sm:$0xff] %v4374
        %4407 = vst [vmem:[%s179 + $0xd0] sm:$0xff] %v4375
        %4408 = vst [vmem:[%s179 + $0xd8] sm:$0xff] %v4376
        %4409 = vst [vmem:[%s179 + $0xe0] sm:$0xff] %v4377
        %4410 = vst [vmem:[%s179 + $0xe8] sm:$0xff] %v4378
        %4411 = vst [vmem:[%s179 + $0xf0] sm:$0xff] %v4379
        %4412 = vst [vmem:[%s179 + $0xf8] sm:$0xff] %v4380
        %s4413 = sand.u32 %s94, 1
        %s4414 = scalar_lea.sflag [#allocation4], %s4413
        %s4415 = sand.u32 %s94, 1
        %s4416 = smul.addr %s4415, 256
        %s4417 = scalar_lea.vmem [#allocation5], %s4416
        // Predicated region
        $region37: #{tpu_custom_call.1} parent=31 // pred_check
          %p4418 = pneg %p104
        $region38: #{tpu_custom_call.1} parent=31 // pred_check_branch
          %4420 = sbr.rel (%p4418) target = $region40
        $region39: #{tpu_custom_call.1} parent=31 // pred_region
          %s4421 = smul.u32 32, %s18
          %s4423 = ssub.s32 4096, 4096
          %4424 = vsyncadd %s4414, %s4423
          %s4425 = smul.addr %s4421, 128
          %s4426 = scalar_lea.hbm %s3, %s4425
          %s4427 = sshll.u32 %s4417, 4
          %s4428 = int_to_ptr.vmem [resolvable:$true] %s4427
          %4433 = dma.vmem_to_hbm [thread:$0]  %s4428, 4096, %s4426, %s4414, 128, 128, 8
        $region40: #{tpu_custom_call.1} parent=31 // pred_fallthru
          _
      $region32: #{tpu_custom_call.1} parent=5 // pred_fallthru
        _
      %p4434 = scmp.le.s32.totalorder 2, %s13
      // Predicated region
      $region41: #{tpu_custom_call.1} parent=5 // pred_check
        %p4435 = pneg %p4434
      $region42: #{tpu_custom_call.1} parent=5 // pred_check_branch
        %4437 = sbr.rel (%p4435) target = $region44
      $region43: #{tpu_custom_call.1} parent=5 // pred_region
        %s4438 = ssub.s32 %s13, 2
        // Predicated region
        $region45: #{tpu_custom_call.1} parent=43 // pred_check
          %p4439 = pneg %p110
        $region46: #{tpu_custom_call.1} parent=43 // pred_check_branch
          %4441 = sbr.rel (%p4439) target = $region48
        $region47: #{tpu_custom_call.1} parent=43 // pred_region
          %s4442 = sand.u32 %s95, 1
          %s4443 = scalar_lea.sflag [#allocation4], %s4442
          %s4444 = sand.u32 %s95, 1
          %s4445 = smul.addr %s4444, 256
          %s4446 = scalar_lea.vmem [#allocation5], %s4445
          %4447 = dma.done %s4443, 4096
        $region48: #{tpu_custom_call.1} parent=43 // pred_fallthru
          _
      $region44: #{tpu_custom_call.1} parent=5 // pred_fallthru
        _
    $region6: #{tpu_custom_call.1} parent=1 // loop_footer
      %s17 = sadd.s32 1, %s13
    $region7: #{tpu_custom_call.1} parent=1 // loop_footer_branch
      %12 = sbr.rel target = $region3
    $region8: #{tpu_custom_call.1} parent=1 // loop_exit
      _
    %4448 = vsyncpa [#allocation3], 1
    %s4449 = scalar_lea.sflag [#allocation3], 1
    %4450 = vsyncpa %s4449, 1
    %4451 = vsyncpa [#allocation4], 1
    %s4452 = scalar_lea.sflag [#allocation4], 1
    %4453 = vsyncpa %s4452, 1

</llo_original>
